<compile_context>
chip_gen: v7x
topology: tpu7x:2x2x1
jax: 0.10.0
libtpu: 0.0.40
codegen_flags: <defaults>
</compile_context>

<pallas_src>
import functools

import numpy as np
import jax
import jax.numpy as jnp
from jax.experimental import pallas as pl
from jax.experimental.pallas import tpu as pltpu


def _round_up(x, m):
    return (x + m - 1) // m * m


def _decoder_block_kernel(x_ref, w1_ref, b1_ref, w2_ref, b2_ref, o_ref, *, starts, sp_pad):
    """One batch element per grid step (batch grid axis is "parallel").

    x_ref : (1, Cin, Sp_ext)   zero-padded, flattened input with flat zero margins
    w1_ref: (Cin, 27*Cin)      3x3x3 conv weight, BN1 scale folded in, tap-major cols
    b1_ref: (Cin, 1)           folded conv1 + BN1 bias
    w2_ref: (Cout, Cin)        1x1x1 conv weight, BN2 scale folded in
    b2_ref: (Cout, 1)          folded conv2 + BN2 bias
    o_ref : (1, Cout, Sp_pad)  output on the padded flattened grid (interior valid)
    """
    x = x_ref[0]                                                     # (Cin, Sp_ext)
    # im2col inside VMEM: 27 lane-shifted views stacked along the sublane axis so
    # the whole 3^3 conv is one fused MXU matmul (single weight push, big K).
    xcol = jnp.concatenate([x[:, s:s + sp_pad] for s in starts], axis=0)   # (27*Cin, Sp_pad)

    h = jnp.dot(w1_ref[...], xcol, preferred_element_type=jnp.float32)     # (Cin, Sp_pad)
    h = jnp.maximum(h + b1_ref[...], 0.0)                                  # conv1 + BN1 + ReLU

    y = jnp.dot(w2_ref[...], h, preferred_element_type=jnp.float32)        # (Cout, Sp_pad)
    o_ref[0] = jnp.maximum(y + b2_ref[...], 0.0)                           # conv2 + BN2 + ReLU


def decoder_block_pallas(x, w1f, b1f, w2f, b2f):
    """x: (B, Cin, D, H, W) float32. Returns (B, Cout, D, H, W)."""
    B, Cin, D, H, W = x.shape
    Cout = w2f.shape[0]
    Dp, Hp, Wp = D + 2, H + 2, W + 2
    Sp = Dp * Hp * Wp                      # flattened padded volume
    M = Hp * Wp + Wp + 1                   # max |flat shift| of any 3x3x3 tap
    Sp_pad = _round_up(Sp, 128)            # lane-dense output width
    Sp_ext = _round_up(Sp_pad + 2 * M, 128)

    # Host-side layout plumbing: spatial zero pad, flatten DHW onto the lane axis,
    # and add a flat margin of M zeros on each side so every conv tap is a
    # contiguous *static* lane slice inside the kernel.
    xp = jnp.pad(x.astype(jnp.float32), ((0, 0), (0, 0), (1, 1), (1, 1), (1, 1)))
    xf = xp.reshape(B, Cin, Sp)
    x_ext = jnp.zeros((B, Cin, Sp_ext), jnp.float32).at[:, :, M:M + Sp].set(xf)

    # Static slice starts for the 27 taps, ordered (kd, kh, kw) to match w1f columns.
    starts = tuple(M + (kd - 1) * Hp * Wp + (kh - 1) * Wp + (kw - 1)
                   for kd in range(3) for kh in range(3) for kw in range(3))

    kernel = functools.partial(_decoder_block_kernel, starts=starts, sp_pad=Sp_pad)
    out_flat = pl.pallas_call(
        kernel,
        out_shape=jax.ShapeDtypeStruct((B, Cout, Sp_pad), jnp.float32),
        grid_spec=pltpu.PrefetchScalarGridSpec(
            num_scalar_prefetch=0,
            grid=(B,),
            in_specs=[
                pl.BlockSpec((1, Cin, Sp_ext), lambda b: (b, 0, 0)),
                pl.BlockSpec((Cin, 27 * Cin), lambda b: (0, 0)),
                pl.BlockSpec((Cin, 1), lambda b: (0, 0)),
                pl.BlockSpec((Cout, Cin), lambda b: (0, 0)),
                pl.BlockSpec((Cout, 1), lambda b: (0, 0)),
            ],
            out_specs=pl.BlockSpec((1, Cout, Sp_pad), lambda b: (b, 0, 0)),
        ),
        compiler_params=pltpu.CompilerParams(dimension_semantics=("parallel",)),
    )(x_ext, w1f, b1f, w2f, b2f)

    # Slice the interior of the padded output grid back to (B, Cout, D, H, W).
    out = out_flat[:, :, :Sp].reshape(B, Cout, Dp, Hp, Wp)[:, :, 1:1 + D, 1:1 + H, 1:1 + W]
    return out


def fold_params(w1, b1, g1, be1, m1, v1, w2, b2, g2, be2, m2, v2, eps=1e-5):
    """Fold eval-mode BatchNorm3d into the conv weights/biases (exact affine math).

    Returns (w1f, b1f, w2f, b2f) in the layouts the kernel expects.
    """
    f32 = lambda a: np.asarray(a, np.float32)
    w1, b1, g1, be1, m1, v1 = map(f32, (w1, b1, g1, be1, m1, v1))
    w2, b2, g2, be2, m2, v2 = map(f32, (w2, b2, g2, be2, m2, v2))
    Cin = w1.shape[0]

    a1 = g1 / np.sqrt(v1 + eps)                                  # (Cin,)
    w1s = w1 * a1[:, None, None, None, None]                     # (Cin, Cin, 3, 3, 3)
    b1f = a1 * (b1 - m1) + be1                                   # (Cin,)
    # Column layout: index = ((kd*3+kh)*3+kw)*Cin + ci  (matches kernel's concat order).
    w1f = np.transpose(w1s, (0, 2, 3, 4, 1)).reshape(Cin, 27 * Cin)

    a2 = g2 / np.sqrt(v2 + eps)                                  # (Cout,)
    w2f = w2[:, :, 0, 0, 0] * a2[:, None]                        # (Cout, Cin)
    b2f = a2 * (b2 - m2) + be2                                   # (Cout,)

    return (jnp.asarray(w1f), jnp.asarray(b1f.reshape(-1, 1)),
            jnp.asarray(w2f), jnp.asarray(b2f.reshape(-1, 1)))


def ref_forward_np(x, w1, b1, g1, be1, m1, v1, w2, b2, g2, be2, m2, v2, eps=1e-5):
    """Pure numpy float64 reference matching the PyTorch forward (eval-mode BN)."""
    f64 = lambda a: np.asarray(a, np.float64)
    x, w1, b1, g1, be1, m1, v1 = map(f64, (x, w1, b1, g1, be1, m1, v1))
    w2, b2, g2, be2, m2, v2 = map(f64, (w2, b2, g2, be2, m2, v2))
    B, C, D, H, W = x.shape
    Cin = w1.shape[0]

    xp = np.zeros((B, C, D + 2, H + 2, W + 2))
    xp[:, :, 1:1 + D, 1:1 + H, 1:1 + W] = x
    y1 = np.zeros((B, Cin, D, H, W))
    for kd in range(3):
        for kh in range(3):
            for kw in range(3):
                y1 += np.einsum("oc,bcdhw->bodhw", w1[:, :, kd, kh, kw],
                                xp[:, :, kd:kd + D, kh:kh + H, kw:kw + W])
    y1 += b1.reshape(1, -1, 1, 1, 1)
    z1 = (g1.reshape(1, -1, 1, 1, 1) * (y1 - m1.reshape(1, -1, 1, 1, 1))
          / np.sqrt(v1.reshape(1, -1, 1, 1, 1) + eps) + be1.reshape(1, -1, 1, 1, 1))
    r1 = np.maximum(z1, 0.0)

    y2 = np.einsum("oc,bcdhw->bodhw", w2[:, :, 0, 0, 0], r1) + b2.reshape(1, -1, 1, 1, 1)
    z2 = (g2.reshape(1, -1, 1, 1, 1) * (y2 - m2.reshape(1, -1, 1, 1, 1))
          / np.sqrt(v2.reshape(1, -1, 1, 1, 1) + eps) + be2.reshape(1, -1, 1, 1, 1))
    return np.maximum(z2, 0.0)


if __name__ == "__main__":
    B, Cin, Cout, D, H, W = 2, 16, 32, 8, 8, 8

    key = jax.random.PRNGKey(0)
    ks = jax.random.split(key, 14)
    x = jax.random.normal(ks[0], (B, Cin, D, H, W), jnp.float32)

    # Conv3d(Cin, Cin, 3, 1, 1) + BatchNorm3d(Cin)
    w1 = jax.random.normal(ks[1], (Cin, Cin, 3, 3, 3), jnp.float32) * 0.1
    b1 = jax.random.normal(ks[2], (Cin,), jnp.float32) * 0.1
    g1 = 1.0 + 0.1 * jax.random.normal(ks[3], (Cin,), jnp.float32)
    be1 = 0.1 * jax.random.normal(ks[4], (Cin,), jnp.float32)
    m1 = 0.1 * jax.random.normal(ks[5], (Cin,), jnp.float32)
    v1 = jax.random.uniform(ks[6], (Cin,), jnp.float32, minval=0.5, maxval=1.5)

    # Conv3d(Cin, Cout, 1, 1, 0) + BatchNorm3d(Cout)
    w2 = jax.random.normal(ks[7], (Cout, Cin, 1, 1, 1), jnp.float32) * 0.1
    b2 = jax.random.normal(ks[8], (Cout,), jnp.float32) * 0.1
    g2 = 1.0 + 0.1 * jax.random.normal(ks[9], (Cout,), jnp.float32)
    be2 = 0.1 * jax.random.normal(ks[10], (Cout,), jnp.float32)
    m2 = 0.1 * jax.random.normal(ks[11], (Cout,), jnp.float32)
    v2 = jax.random.uniform(ks[12], (Cout,), jnp.float32, minval=0.5, maxval=1.5)

    w1f, b1f, w2f, b2f = fold_params(w1, b1, g1, be1, m1, v1, w2, b2, g2, be2, m2, v2)

    out = decoder_block_pallas(x, w1f, b1f, w2f, b2f)
    out = jax.block_until_ready(out)

    ref = ref_forward_np(x, w1, b1, g1, be1, m1, v1, w2, b2, g2, be2, m2, v2)
    np.testing.assert_allclose(np.asarray(out), ref, rtol=2e-3, atol=2e-3)
    print("KERNEL_OK")
</pallas_src>

<mosaic_0001>
module attributes {stable_mosaic.version = 11 : i64} {
  func.func @_decoder_block_kernel(%arg0: i32, %arg1: memref<1x16x1280xf32, #tpu.memory_space<vmem>>, %arg2: memref<16x432xf32, #tpu.memory_space<vmem>>, %arg3: memref<16x1xf32, #tpu.memory_space<vmem>>, %arg4: memref<32x16xf32, #tpu.memory_space<vmem>>, %arg5: memref<32x1xf32, #tpu.memory_space<vmem>>, %arg6: memref<1x32x1024xf32, #tpu.memory_space<vmem>>) attributes {dimension_semantics = [#tpu.dimension_semantics<parallel>], iteration_bounds = array<i64: 2>, scalar_prefetch = 0 : i64, scratch_operands = 0 : i64, tpu.core_type = #tpu.core_type<tc>, window_params = [{transform_indices = @transform_0, window_bounds = array<i64: 1, 16, 1280>}, {pipeline_mode = #tpu.pipeline_mode<synchronous>, transform_indices = @transform_1, window_bounds = array<i64: 16, 432>}, {pipeline_mode = #tpu.pipeline_mode<synchronous>, transform_indices = @transform_2, window_bounds = array<i64: 16, 1>}, {pipeline_mode = #tpu.pipeline_mode<synchronous>, transform_indices = @transform_3, window_bounds = array<i64: 32, 16>}, {pipeline_mode = #tpu.pipeline_mode<synchronous>, transform_indices = @transform_4, window_bounds = array<i64: 32, 1>}, {transform_indices = @transform_5, window_bounds = array<i64: 1, 32, 1024>}]} {
    %c0 = arith.constant 0 : index
    %c0_0 = arith.constant 0 : index
    %c0_1 = arith.constant 0 : index
    %0 = vector.load %arg1[%c0, %c0_0, %c0_1] : memref<1x16x1280xf32, #tpu.memory_space<vmem>>, vector<1x16x1280xf32>
    %1 = vector.shape_cast %0 : vector<1x16x1280xf32> to vector<16x1280xf32>
    %2 = vector.extract_strided_slice %1 {offsets = [0, 0], sizes = [16, 1024], strides = [1, 1]} : vector<16x1280xf32> to vector<16x1024xf32>
    %3 = vector.extract_strided_slice %1 {offsets = [0, 1], sizes = [16, 1024], strides = [1, 1]} : vector<16x1280xf32> to vector<16x1024xf32>
    %4 = vector.extract_strided_slice %1 {offsets = [0, 2], sizes = [16, 1024], strides = [1, 1]} : vector<16x1280xf32> to vector<16x1024xf32>
    %5 = vector.extract_strided_slice %1 {offsets = [0, 10], sizes = [16, 1024], strides = [1, 1]} : vector<16x1280xf32> to vector<16x1024xf32>
    %6 = vector.extract_strided_slice %1 {offsets = [0, 11], sizes = [16, 1024], strides = [1, 1]} : vector<16x1280xf32> to vector<16x1024xf32>
    %7 = vector.extract_strided_slice %1 {offsets = [0, 12], sizes = [16, 1024], strides = [1, 1]} : vector<16x1280xf32> to vector<16x1024xf32>
    %8 = vector.extract_strided_slice %1 {offsets = [0, 20], sizes = [16, 1024], strides = [1, 1]} : vector<16x1280xf32> to vector<16x1024xf32>
    %9 = vector.extract_strided_slice %1 {offsets = [0, 21], sizes = [16, 1024], strides = [1, 1]} : vector<16x1280xf32> to vector<16x1024xf32>
    %10 = vector.extract_strided_slice %1 {offsets = [0, 22], sizes = [16, 1024], strides = [1, 1]} : vector<16x1280xf32> to vector<16x1024xf32>
    %11 = vector.extract_strided_slice %1 {offsets = [0, 100], sizes = [16, 1024], strides = [1, 1]} : vector<16x1280xf32> to vector<16x1024xf32>
    %12 = vector.extract_strided_slice %1 {offsets = [0, 101], sizes = [16, 1024], strides = [1, 1]} : vector<16x1280xf32> to vector<16x1024xf32>
    %13 = vector.extract_strided_slice %1 {offsets = [0, 102], sizes = [16, 1024], strides = [1, 1]} : vector<16x1280xf32> to vector<16x1024xf32>
    %14 = vector.extract_strided_slice %1 {offsets = [0, 110], sizes = [16, 1024], strides = [1, 1]} : vector<16x1280xf32> to vector<16x1024xf32>
    %15 = vector.extract_strided_slice %1 {offsets = [0, 111], sizes = [16, 1024], strides = [1, 1]} : vector<16x1280xf32> to vector<16x1024xf32>
    %16 = vector.extract_strided_slice %1 {offsets = [0, 112], sizes = [16, 1024], strides = [1, 1]} : vector<16x1280xf32> to vector<16x1024xf32>
    %17 = vector.extract_strided_slice %1 {offsets = [0, 120], sizes = [16, 1024], strides = [1, 1]} : vector<16x1280xf32> to vector<16x1024xf32>
    %18 = vector.extract_strided_slice %1 {offsets = [0, 121], sizes = [16, 1024], strides = [1, 1]} : vector<16x1280xf32> to vector<16x1024xf32>
    %19 = vector.extract_strided_slice %1 {offsets = [0, 122], sizes = [16, 1024], strides = [1, 1]} : vector<16x1280xf32> to vector<16x1024xf32>
    %20 = vector.extract_strided_slice %1 {offsets = [0, 200], sizes = [16, 1024], strides = [1, 1]} : vector<16x1280xf32> to vector<16x1024xf32>
    %21 = vector.extract_strided_slice %1 {offsets = [0, 201], sizes = [16, 1024], strides = [1, 1]} : vector<16x1280xf32> to vector<16x1024xf32>
    %22 = vector.extract_strided_slice %1 {offsets = [0, 202], sizes = [16, 1024], strides = [1, 1]} : vector<16x1280xf32> to vector<16x1024xf32>
    %23 = vector.extract_strided_slice %1 {offsets = [0, 210], sizes = [16, 1024], strides = [1, 1]} : vector<16x1280xf32> to vector<16x1024xf32>
    %24 = vector.extract_strided_slice %1 {offsets = [0, 211], sizes = [16, 1024], strides = [1, 1]} : vector<16x1280xf32> to vector<16x1024xf32>
    %25 = vector.extract_strided_slice %1 {offsets = [0, 212], sizes = [16, 1024], strides = [1, 1]} : vector<16x1280xf32> to vector<16x1024xf32>
    %26 = vector.extract_strided_slice %1 {offsets = [0, 220], sizes = [16, 1024], strides = [1, 1]} : vector<16x1280xf32> to vector<16x1024xf32>
    %27 = vector.extract_strided_slice %1 {offsets = [0, 221], sizes = [16, 1024], strides = [1, 1]} : vector<16x1280xf32> to vector<16x1024xf32>
    %28 = vector.extract_strided_slice %1 {offsets = [0, 222], sizes = [16, 1024], strides = [1, 1]} : vector<16x1280xf32> to vector<16x1024xf32>
    %29 = tpu.concatenate %2, %3, %4, %5, %6, %7, %8, %9, %10, %11, %12, %13, %14, %15, %16, %17 in 0 : vector<16x1024xf32>, vector<16x1024xf32>, vector<16x1024xf32>, vector<16x1024xf32>, vector<16x1024xf32>, vector<16x1024xf32>, vector<16x1024xf32>, vector<16x1024xf32>, vector<16x1024xf32>, vector<16x1024xf32>, vector<16x1024xf32>, vector<16x1024xf32>, vector<16x1024xf32>, vector<16x1024xf32>, vector<16x1024xf32>, vector<16x1024xf32> -> vector<256x1024xf32>
    %30 = tpu.concatenate %18, %19, %20, %21, %22, %23, %24, %25, %26, %27, %28 in 0 : vector<16x1024xf32>, vector<16x1024xf32>, vector<16x1024xf32>, vector<16x1024xf32>, vector<16x1024xf32>, vector<16x1024xf32>, vector<16x1024xf32>, vector<16x1024xf32>, vector<16x1024xf32>, vector<16x1024xf32>, vector<16x1024xf32> -> vector<176x1024xf32>
    %31 = tpu.concatenate %29, %30 in 0 : vector<256x1024xf32>, vector<176x1024xf32> -> vector<432x1024xf32>
    %c0_2 = arith.constant 0 : index
    %c0_3 = arith.constant 0 : index
    %32 = vector.load %arg2[%c0_2, %c0_3] : memref<16x432xf32, #tpu.memory_space<vmem>>, vector<16x432xf32>
    %cst = arith.constant dense<0.000000e+00> : vector<16x1024xf32>
    %33 = tpu.matmul %32, %31, %cst {dimension_numbers = #tpu.dot_dimension_numbers<[1], [0], [0], [1], [0, 0, 1, 1], [], []>} : vector<16x432xf32>, vector<432x1024xf32>, vector<16x1024xf32> -> vector<16x1024xf32>
    %c0_4 = arith.constant 0 : index
    %c0_5 = arith.constant 0 : index
    %34 = vector.load %arg3[%c0_4, %c0_5] : memref<16x1xf32, #tpu.memory_space<vmem>>, vector<16x1xf32>
    %35 = vector.broadcast %34 : vector<16x1xf32> to vector<16x1024xf32>
    %36 = arith.addf %33, %35 : vector<16x1024xf32>
    %cst_6 = arith.constant 0.000000e+00 : f32
    %37 = vector.broadcast %cst_6 : f32 to vector<16x1024xf32>
    %38 = arith.maximumf %36, %37 : vector<16x1024xf32>
    %c0_7 = arith.constant 0 : index
    %c0_8 = arith.constant 0 : index
    %39 = vector.load %arg4[%c0_7, %c0_8] : memref<32x16xf32, #tpu.memory_space<vmem>>, vector<32x16xf32>
    %cst_9 = arith.constant dense<0.000000e+00> : vector<32x1024xf32>
    %40 = tpu.matmul %39, %38, %cst_9 {dimension_numbers = #tpu.dot_dimension_numbers<[1], [0], [0], [1], [0, 0, 1, 1], [], []>} : vector<32x16xf32>, vector<16x1024xf32>, vector<32x1024xf32> -> vector<32x1024xf32>
    %c0_10 = arith.constant 0 : index
    %c0_11 = arith.constant 0 : index
    %41 = vector.load %arg5[%c0_10, %c0_11] : memref<32x1xf32, #tpu.memory_space<vmem>>, vector<32x1xf32>
    %42 = vector.broadcast %41 : vector<32x1xf32> to vector<32x1024xf32>
    %43 = arith.addf %40, %42 : vector<32x1024xf32>
    %cst_12 = arith.constant 0.000000e+00 : f32
    %44 = vector.broadcast %cst_12 : f32 to vector<32x1024xf32>
    %45 = arith.maximumf %43, %44 : vector<32x1024xf32>
    %c0_13 = arith.constant 0 : index
    %c0_14 = arith.constant 0 : index
    %c0_15 = arith.constant 0 : index
    %46 = vector.load %arg6[%c0_13, %c0_14, %c0_15] : memref<1x32x1024xf32, #tpu.memory_space<vmem>>, vector<1x32x1024xf32>
    %47 = vector.shape_cast %46 : vector<1x32x1024xf32> to vector<32x1024xf32>
    %48 = vector.shape_cast %45 : vector<32x1024xf32> to vector<1x32x1024xf32>
    tpu.vector_store %arg6[%c0_13, %c0_14, %c0_15], %48 {strides = array<i32>} : memref<1x32x1024xf32, #tpu.memory_space<vmem>>, vector<1x32x1024xf32>,
    return
  }
  func.func @transform_0(%arg0: i32) -> (i32, i32, i32) {
    %c0_i32 = arith.constant 0 : i32
    %c0_i32_0 = arith.constant 0 : i32
    %c0_i32_1 = arith.constant 0 : i32
    return %arg0, %c0_i32, %c0_i32_0 : i32, i32, i32
  }
  func.func @transform_1(%arg0: i32) -> (i32, i32) {
    %c0_i32 = arith.constant 0 : i32
    %c0_i32_0 = arith.constant 0 : i32
    %c0_i32_1 = arith.constant 0 : i32
    return %c0_i32, %c0_i32_0 : i32, i32
  }
  func.func @transform_2(%arg0: i32) -> (i32, i32) {
    %c0_i32 = arith.constant 0 : i32
    %c0_i32_0 = arith.constant 0 : i32
    %c0_i32_1 = arith.constant 0 : i32
    return %c0_i32, %c0_i32_0 : i32, i32
  }
  func.func @transform_3(%arg0: i32) -> (i32, i32) {
    %c0_i32 = arith.constant 0 : i32
    %c0_i32_0 = arith.constant 0 : i32
    %c0_i32_1 = arith.constant 0 : i32
    return %c0_i32, %c0_i32_0 : i32, i32
  }
  func.func @transform_4(%arg0: i32) -> (i32, i32) {
    %c0_i32 = arith.constant 0 : i32
    %c0_i32_0 = arith.constant 0 : i32
    %c0_i32_1 = arith.constant 0 : i32
    return %c0_i32, %c0_i32_0 : i32, i32
  }
  func.func @transform_5(%arg0: i32) -> (i32, i32, i32) {
    %c0_i32 = arith.constant 0 : i32
    %c0_i32_0 = arith.constant 0 : i32
    %c0_i32_1 = arith.constant 0 : i32
    return %arg0, %c0_i32, %c0_i32_0 : i32, i32, i32
  }
}

</mosaic_0001>

<llo_original>
// kernel: tpu_custom_call.1
$region0: #{tpu_custom_call.1}
  #allocation0 [shape = 'u32[]', space=smem, size = 0x4, offset = 0x4, fixed_abs, tag = 'smem constant byte address 0x4 - core index']
  #allocation1 [shape = 'u32[144,128]{1,0:T(1,128)}', space=vmem, size = 0x12000, scoped, tag = 'internal scratch']
  %s0 = inlined_call_operand.hbm [shape: f32[2,16,1280], index: 0, kind: input, shape index: {}]
  %s1 = inlined_call_operand.vmem [shape: f32[16,432], index: 1, kind: input, shape index: {}]
  %s2 = inlined_call_operand.vmem [shape: f32[16,1], index: 2, kind: input, shape index: {}]
  %s3 = inlined_call_operand.vmem [shape: f32[32,16], index: 3, kind: input, shape index: {}]
  %s4 = inlined_call_operand.vmem [shape: f32[32,1], index: 4, kind: input, shape index: {}]
  %s5 = inlined_call_operand.hbm [shape: f32[2,32,1024], index: 5, kind: output, shape index: {}]
  %s6 = sld [smem:[#allocation0]]
  $region57: #{tpu_custom_call.1} parent=0
    _
  %s8 = ssub.s32 1, %s6
  %s9 = scalar_select 0, %s8, %s6
  $region1: #{tpu_custom_call.1} parent=0
    #allocation2 [shape = 'u8[163840]{0}', space=vmem, size = 0x28000, scoped, tag = 'input window, operand 0']
    #allocation3 [shape = 's32[2]{0}', space=sflag, size = 0x8, scoped, tag = 'scoped memory for tpu_custom_call.1']
    #allocation4 [shape = 's32[2]{0}', space=sflag, size = 0x8, scoped, tag = 'scoped memory for tpu_custom_call.1']
    #allocation5 [shape = 'u8[262144]{0}', space=vmem, size = 0x40000, scoped, tag = 'output window, operand 0']
    %10 = vsyncpa [#allocation3], 0
    %s11 = scalar_lea.sflag [#allocation3], 1
    %12 = vsyncpa %s11, 0
    %13 = vsyncpa [#allocation4], 0
    %s14 = scalar_lea.sflag [#allocation4], 1
    %15 = vsyncpa %s14, 0
    loop: start=0, step=1, limit=4
    $region2: #{tpu_custom_call.1} parent=1 // loop_pre_header
      _
    $region3: #{tpu_custom_call.1} parent=1 // loop_header
      %s17 = sphi 0, %s21
      %p18 = scmp.ge.s32.totalorder %s17, 4
      %s27 = sphi 0, %s29
      %s30 = sphi 0, %s27
      %s31 = sphi 0, %s30
      %s47 = sphi 0, %s31
      %s51 = sphi 0, %s51
      %s53 = sphi 0, %s51
      %s54 = sphi 0, %s53
      %s68 = sphi 0, %s54
      %s72 = sphi 0, %s72
      %s74 = sphi 0, %s72
      %s75 = sphi 0, %s74
      %s89 = sphi 0, %s75
      %s93 = sphi 0, %s93
      %s95 = sphi 0, %s93
      %s96 = sphi 0, %s95
      %s110 = sphi 0, %s96
      %s114 = sphi 0, %s114
      %s116 = sphi 0, %s114
      %s117 = sphi 0, %s116
      %s131 = sphi 0, %s117
      %s137 = sphi 0, %s139
      %s140 = sphi 0, %s137
      %s141 = sphi 0, %s140
      %s157 = sphi 0, %s141
    $region4: #{tpu_custom_call.1} parent=1 // loop_header_branch
      %20 = sbr.rel (%p18) target = $region8
    $region5: #{tpu_custom_call.1} parent=1 // loop_body
      %s22 = ssub.s32 %s17, 1
      %s23 = ssub.s32 %s17, 2
      %s24 = sadd.s32 %s17, 1
      %s25 = ssub.s32 %s17, %s24
      %p26 = scmp.eq.s32.totalorder %s25, 0
      %s28 = sadd.s32 %s27, 1
      %s29 = scalar_select %p26, %s27, %s28
      %p32 = pneg %p26
      %p33 = scmp.eq.s32.totalorder %s17, 1
      %p34 = por %p32, %p33
      %p35 = scmp.ne.s32.totalorder %s27, %s30
      %p36 = scmp.eq.s32.totalorder %s17, 0
      %p37 = por %p35, %p36
      %p38 = scmp.ne.s32.totalorder %s27, %s30
      %p39 = scmp.eq.s32.totalorder %s22, 1
      %p40 = por %p38, %p39
      %p41 = scmp.ne.s32.totalorder %s30, %s31
      %p42 = scmp.eq.s32.totalorder %s22, 0
      %p43 = por %p41, %p42
      %p44 = scmp.ne.s32.totalorder %s30, %s31
      %p45 = scmp.eq.s32.totalorder %s23, 1
      %p46 = por %p44, %p45
      %p48 = scmp.ne.s32.totalorder %s31, %s47
      %p49 = scmp.eq.s32.totalorder %s23, 0
      %p50 = por %p48, %p49
      %s52 = sadd.s32 %s51, 1
      %p55 = scmp.eq.s32.totalorder %s17, 1
      %p56 = scmp.ne.s32.totalorder %s51, %s53
      %p57 = scmp.eq.s32.totalorder %s17, 0
      %p58 = por %p56, %p57
      %p59 = scmp.ne.s32.totalorder %s51, %s53
      %p60 = scmp.eq.s32.totalorder %s22, 1
      %p61 = por %p59, %p60
      %p62 = scmp.ne.s32.totalorder %s53, %s54
      %p63 = scmp.eq.s32.totalorder %s22, 0
      %p64 = por %p62, %p63
      %p65 = scmp.ne.s32.totalorder %s53, %s54
      %p66 = scmp.eq.s32.totalorder %s23, 1
      %p67 = por %p65, %p66
      %p69 = scmp.ne.s32.totalorder %s54, %s68
      %p70 = scmp.eq.s32.totalorder %s23, 0
      %p71 = por %p69, %p70
      %s73 = sadd.s32 %s72, 1
      %p76 = scmp.eq.s32.totalorder %s17, 1
      %p77 = scmp.ne.s32.totalorder %s72, %s74
      %p78 = scmp.eq.s32.totalorder %s17, 0
      %p79 = por %p77, %p78
      %p80 = scmp.ne.s32.totalorder %s72, %s74
      %p81 = scmp.eq.s32.totalorder %s22, 1
      %p82 = por %p80, %p81
      %p83 = scmp.ne.s32.totalorder %s74, %s75
      %p84 = scmp.eq.s32.totalorder %s22, 0
      %p85 = por %p83, %p84
      %p86 = scmp.ne.s32.totalorder %s74, %s75
      %p87 = scmp.eq.s32.totalorder %s23, 1
      %p88 = por %p86, %p87
      %p90 = scmp.ne.s32.totalorder %s75, %s89
      %p91 = scmp.eq.s32.totalorder %s23, 0
      %p92 = por %p90, %p91
      %s94 = sadd.s32 %s93, 1
      %p97 = scmp.eq.s32.totalorder %s17, 1
      %p98 = scmp.ne.s32.totalorder %s93, %s95
      %p99 = scmp.eq.s32.totalorder %s17, 0
      %p100 = por %p98, %p99
      %p101 = scmp.ne.s32.totalorder %s93, %s95
      %p102 = scmp.eq.s32.totalorder %s22, 1
      %p103 = por %p101, %p102
      %p104 = scmp.ne.s32.totalorder %s95, %s96
      %p105 = scmp.eq.s32.totalorder %s22, 0
      %p106 = por %p104, %p105
      %p107 = scmp.ne.s32.totalorder %s95, %s96
      %p108 = scmp.eq.s32.totalorder %s23, 1
      %p109 = por %p107, %p108
      %p111 = scmp.ne.s32.totalorder %s96, %s110
      %p112 = scmp.eq.s32.totalorder %s23, 0
      %p113 = por %p111, %p112
      %s115 = sadd.s32 %s114, 1
      %p118 = scmp.eq.s32.totalorder %s17, 1
      %p119 = scmp.ne.s32.totalorder %s114, %s116
      %p120 = scmp.eq.s32.totalorder %s17, 0
      %p121 = por %p119, %p120
      %p122 = scmp.ne.s32.totalorder %s114, %s116
      %p123 = scmp.eq.s32.totalorder %s22, 1
      %p124 = por %p122, %p123
      %p125 = scmp.ne.s32.totalorder %s116, %s117
      %p126 = scmp.eq.s32.totalorder %s22, 0
      %p127 = por %p125, %p126
      %p128 = scmp.ne.s32.totalorder %s116, %s117
      %p129 = scmp.eq.s32.totalorder %s23, 1
      %p130 = por %p128, %p129
      %p132 = scmp.ne.s32.totalorder %s117, %s131
      %p133 = scmp.eq.s32.totalorder %s23, 0
      %p134 = por %p132, %p133
      %s135 = ssub.s32 %s17, %s24
      %p136 = scmp.eq.s32.totalorder %s135, 0
      %s138 = sadd.s32 %s137, 1
      %s139 = scalar_select %p136, %s137, %s138
      %p142 = pneg %p136
      %p143 = scmp.eq.s32.totalorder %s17, 1
      %p144 = por %p142, %p143
      %p145 = scmp.ne.s32.totalorder %s137, %s140
      %p146 = scmp.eq.s32.totalorder %s17, 0
      %p147 = por %p145, %p146
      %p148 = scmp.ne.s32.totalorder %s137, %s140
      %p149 = scmp.eq.s32.totalorder %s22, 1
      %p150 = por %p148, %p149
      %p151 = scmp.ne.s32.totalorder %s140, %s141
      %p152 = scmp.eq.s32.totalorder %s22, 0
      %p153 = por %p151, %p152
      %p154 = scmp.ne.s32.totalorder %s140, %s141
      %p155 = scmp.eq.s32.totalorder %s23, 1
      %p156 = por %p154, %p155
      %p158 = scmp.ne.s32.totalorder %s141, %s157
      %p159 = scmp.eq.s32.totalorder %s23, 0
      %p160 = por %p158, %p159
      %p161 = scmp.le.s32.totalorder 1, %s17
      %p162 = scmp.lt.s32.totalorder %s17, 3
      %p163 = pnand %p161, %p162
      %p164 = pneg %p163
      // Predicated region
      $region9: #{tpu_custom_call.1} parent=5 // pred_check
        _
      $region10: #{tpu_custom_call.1} parent=5 // pred_check_branch
        %166 = sbr.rel (%p163) target = $region12
      $region11: #{tpu_custom_call.1} parent=5 // pred_region
        %s167 = ssub.s32 %s17, 1
        // Predicated region
        $region13: #{tpu_custom_call.1} parent=11 // pred_check
          %p168 = pneg %p64
        $region14: #{tpu_custom_call.1} parent=11 // pred_check_branch
          %170 = sbr.rel (%p168) target = $region16
        $region15: #{tpu_custom_call.1} parent=11 // pred_region
          _
        $region16: #{tpu_custom_call.1} parent=11 // pred_fallthru
          _
        // Predicated region
        $region17: #{tpu_custom_call.1} parent=11 // pred_check
          %p171 = pneg %p85
        $region18: #{tpu_custom_call.1} parent=11 // pred_check_branch
          %173 = sbr.rel (%p171) target = $region20
        $region19: #{tpu_custom_call.1} parent=11 // pred_region
          _
        $region20: #{tpu_custom_call.1} parent=11 // pred_fallthru
          _
        // Predicated region
        $region21: #{tpu_custom_call.1} parent=11 // pred_check
          %p174 = pneg %p106
        $region22: #{tpu_custom_call.1} parent=11 // pred_check_branch
          %176 = sbr.rel (%p174) target = $region24
        $region23: #{tpu_custom_call.1} parent=11 // pred_region
          _
        $region24: #{tpu_custom_call.1} parent=11 // pred_fallthru
          _
        // Predicated region
        $region25: #{tpu_custom_call.1} parent=11 // pred_check
          %p177 = pneg %p127
        $region26: #{tpu_custom_call.1} parent=11 // pred_check_branch
          %179 = sbr.rel (%p177) target = $region28
        $region27: #{tpu_custom_call.1} parent=11 // pred_region
          _
        $region28: #{tpu_custom_call.1} parent=11 // pred_fallthru
          _
      $region12: #{tpu_custom_call.1} parent=5 // pred_fallthru
        _
      %p180 = scmp.lt.s32.totalorder %s17, 2
      // Predicated region
      $region29: #{tpu_custom_call.1} parent=5 // pred_check
        %p181 = pneg %p180
      $region30: #{tpu_custom_call.1} parent=5 // pred_check_branch
        %183 = sbr.rel (%p181) target = $region32
      $region31: #{tpu_custom_call.1} parent=5 // pred_region
        // Predicated region
        $region33: #{tpu_custom_call.1} parent=31 // pred_check
          %p184 = pneg %p37
        $region34: #{tpu_custom_call.1} parent=31 // pred_check_branch
          %186 = sbr.rel (%p184) target = $region36
        $region35: #{tpu_custom_call.1} parent=31 // pred_region
          %s187 = sand.u32 %s27, 1
          %s188 = scalar_lea.sflag [#allocation3], %s187
          %s189 = sand.u32 %s27, 1
          %s190 = smul.addr %s189, 160
          %s191 = scalar_lea.vmem [#allocation2], %s190
          %s193 = ssub.s32 2560, 2560
          %194 = vsyncadd %s188, %s193
          %s195 = smul.addr %s17, 20
          %s196 = smul.addr %s195, 128
          %s197 = scalar_lea.hbm %s0, %s196
          %s198 = sshll.u32 %s191, 4
          %s199 = int_to_ptr.vmem [resolvable:$true] %s198
          %204 = dma.hbm_to_vmem [thread:$0]  %s197, 2560, %s199, %s188, 1280, 1280, 80
        $region36: #{tpu_custom_call.1} parent=31 // pred_fallthru
          _
      $region32: #{tpu_custom_call.1} parent=5 // pred_fallthru
        _
      %p205 = scmp.le.s32.totalorder 1, %s17
      %p206 = scmp.lt.s32.totalorder %s17, 3
      %p207 = pnand %p205, %p206
      %p208 = pneg %p207
      // Predicated region
      $region37: #{tpu_custom_call.1} parent=5 // pred_check
        _
      $region38: #{tpu_custom_call.1} parent=5 // pred_check_branch
        %210 = sbr.rel (%p207) target = $region40
      $region39: #{tpu_custom_call.1} parent=5 // pred_region
        %s211 = ssub.s32 %s17, 1
        %s212 = sand.u32 %s30, 1
        %s213 = scalar_lea.sflag [#allocation3], %s212
        %s214 = sand.u32 %s30, 1
        %s215 = smul.addr %s214, 160
        %s216 = scalar_lea.vmem [#allocation2], %s215
        // Predicated region
        $region41: #{tpu_custom_call.1} parent=39 // pred_check
          %p217 = pneg %p43
        $region42: #{tpu_custom_call.1} parent=39 // pred_check_branch
          %219 = sbr.rel (%p217) target = $region44
        $region43: #{tpu_custom_call.1} parent=39 // pred_region
          %220 = dma.done %s213, 2560
        $region44: #{tpu_custom_call.1} parent=39 // pred_fallthru
          _
        %s221 = sand.u32 %s30, 1
        %s222 = scalar_lea.sflag [#allocation3], %s221
        %s223 = sand.u32 %s30, 1
        %s224 = smul.addr %s223, 160
        %s225 = scalar_lea.vmem [#allocation2], %s224
        %p226 = pneg %p43
        %p227 = pneg %p40
        %p228 = pneg %p64
        %p229 = pneg %p61
        %p230 = pneg %p85
        %p231 = pneg %p82
        %p232 = pneg %p106
        %p233 = pneg %p103
        %p234 = pneg %p127
        %p235 = pneg %p124
        %p236 = pneg %p153
        %p237 = pneg %p150
        %s238 = sand.u32 %s140, 1
        %s239 = scalar_lea.sflag [#allocation4], %s238
        %s240 = sand.u32 %s140, 1
        %s241 = smul.addr %s240, 256
        %s242 = scalar_lea.vmem [#allocation5], %s241
        %v243 = vld [vmem:[%s216] sm:$0xff]
        %v244 = vld [vmem:[%s216 + $0x8] sm:$0xff]
        %v245 = vld [vmem:[%s216 + $0x10] sm:$0xff]
        %v246 = vld [vmem:[%s216 + $0x18] sm:$0xff]
        %v247 = vld [vmem:[%s216 + $0x20] sm:$0xff]
        %v248 = vld [vmem:[%s216 + $0x28] sm:$0xff]
        %v249 = vld [vmem:[%s216 + $0x30] sm:$0xff]
        %v250 = vld [vmem:[%s216 + $0x38] sm:$0xff]
        %v251 = vld [vmem:[%s216 + $0x40] sm:$0xff]
        %v252 = vld [vmem:[%s216 + $0x48] sm:$0xff]
        %v253 = vld [vmem:[%s216 + $0x50] sm:$0xff]
        %v254 = vld [vmem:[%s216 + $0x58] sm:$0xff]
        %v255 = vld [vmem:[%s216 + $0x60] sm:$0xff]
        %v256 = vld [vmem:[%s216 + $0x68] sm:$0xff]
        %v257 = vld [vmem:[%s216 + $0x70] sm:$0xff]
        %v258 = vld [vmem:[%s216 + $0x78] sm:$0xff]
        %v259 = vld [vmem:[%s216 + $0x80] sm:$0xff]
        %v260 = vld [vmem:[%s216 + $0x88] sm:$0xff]
        %v261 = vld [vmem:[%s216 + $0x90] sm:$0xff]
        %v262 = vld [vmem:[%s216 + $0x98] sm:$0xff]
        %281 = vrot.lane.b32.xlu0 %v243, 127
        %v282 = vpop.permute.xlu0 %281
        %283 = vrot.lane.b32.xlu0 %v244, 127
        %v284 = vpop.permute.xlu0 %283
        %285 = vrot.lane.b32.xlu0 %v245, 127
        %v286 = vpop.permute.xlu0 %285
        %287 = vrot.lane.b32.xlu0 %v246, 127
        %v288 = vpop.permute.xlu0 %287
        %289 = vrot.lane.b32.xlu0 %v247, 127
        %v290 = vpop.permute.xlu0 %289
        %291 = vrot.lane.b32.xlu0 %v248, 127
        %v292 = vpop.permute.xlu0 %291
        %293 = vrot.lane.b32.xlu0 %v249, 127
        %v294 = vpop.permute.xlu0 %293
        %295 = vrot.lane.b32.xlu0 %v250, 127
        %v296 = vpop.permute.xlu0 %295
        %297 = vrot.lane.b32.xlu0 %v251, 127
        %v298 = vpop.permute.xlu0 %297
        %299 = vrot.lane.b32.xlu0 %v253, 127
        %v300 = vpop.permute.xlu0 %299
        %301 = vrot.lane.b32.xlu0 %v254, 127
        %v302 = vpop.permute.xlu0 %301
        %303 = vrot.lane.b32.xlu0 %v255, 127
        %v304 = vpop.permute.xlu0 %303
        %305 = vrot.lane.b32.xlu0 %v256, 127
        %v306 = vpop.permute.xlu0 %305
        %307 = vrot.lane.b32.xlu0 %v257, 127
        %v308 = vpop.permute.xlu0 %307
        %309 = vrot.lane.b32.xlu0 %v258, 127
        %v310 = vpop.permute.xlu0 %309
        %311 = vrot.lane.b32.xlu0 %v259, 127
        %v312 = vpop.permute.xlu0 %311
        %313 = vrot.lane.b32.xlu0 %v260, 127
        %v314 = vpop.permute.xlu0 %313
        %315 = vrot.lane.b32.xlu0 %v261, 127
        %v316 = vpop.permute.xlu0 %315
        %vm317 = vcmask 1039360
        %v318 = vsel %vm317, %v282, %v284
        %v319 = vsel %vm317, %v284, %v286
        %v320 = vsel %vm317, %v286, %v288
        %v321 = vsel %vm317, %v288, %v290
        %v322 = vsel %vm317, %v290, %v292
        %v323 = vsel %vm317, %v292, %v294
        %v324 = vsel %vm317, %v294, %v296
        %v325 = vsel %vm317, %v296, %v298
        %v326 = vsel %vm317, %v300, %v302
        %v327 = vsel %vm317, %v302, %v304
        %v328 = vsel %vm317, %v304, %v306
        %v329 = vsel %vm317, %v306, %v308
        %v330 = vsel %vm317, %v308, %v310
        %v331 = vsel %vm317, %v310, %v312
        %v332 = vsel %vm317, %v312, %v314
        %v333 = vsel %vm317, %v314, %v316
        %350 = vrot.lane.b32.xlu0 %v243, 126
        %v351 = vpop.permute.xlu0 %350
        %352 = vrot.lane.b32.xlu0 %v244, 126
        %v353 = vpop.permute.xlu0 %352
        %354 = vrot.lane.b32.xlu0 %v245, 126
        %v355 = vpop.permute.xlu0 %354
        %356 = vrot.lane.b32.xlu0 %v246, 126
        %v357 = vpop.permute.xlu0 %356
        %358 = vrot.lane.b32.xlu0 %v247, 126
        %v359 = vpop.permute.xlu0 %358
        %360 = vrot.lane.b32.xlu0 %v248, 126
        %v361 = vpop.permute.xlu0 %360
        %362 = vrot.lane.b32.xlu0 %v249, 126
        %v363 = vpop.permute.xlu0 %362
        %364 = vrot.lane.b32.xlu0 %v250, 126
        %v365 = vpop.permute.xlu0 %364
        %366 = vrot.lane.b32.xlu0 %v251, 126
        %v367 = vpop.permute.xlu0 %366
        %368 = vrot.lane.b32.xlu0 %v253, 126
        %v369 = vpop.permute.xlu0 %368
        %370 = vrot.lane.b32.xlu0 %v254, 126
        %v371 = vpop.permute.xlu0 %370
        %372 = vrot.lane.b32.xlu0 %v255, 126
        %v373 = vpop.permute.xlu0 %372
        %374 = vrot.lane.b32.xlu0 %v256, 126
        %v375 = vpop.permute.xlu0 %374
        %376 = vrot.lane.b32.xlu0 %v257, 126
        %v377 = vpop.permute.xlu0 %376
        %378 = vrot.lane.b32.xlu0 %v258, 126
        %v379 = vpop.permute.xlu0 %378
        %380 = vrot.lane.b32.xlu0 %v259, 126
        %v381 = vpop.permute.xlu0 %380
        %382 = vrot.lane.b32.xlu0 %v260, 126
        %v383 = vpop.permute.xlu0 %382
        %384 = vrot.lane.b32.xlu0 %v261, 126
        %v385 = vpop.permute.xlu0 %384
        %vm386 = vcmask 1031168
        %v387 = vsel %vm386, %v351, %v353
        %v388 = vsel %vm386, %v353, %v355
        %v389 = vsel %vm386, %v355, %v357
        %v390 = vsel %vm386, %v357, %v359
        %v391 = vsel %vm386, %v359, %v361
        %v392 = vsel %vm386, %v361, %v363
        %v393 = vsel %vm386, %v363, %v365
        %v394 = vsel %vm386, %v365, %v367
        %v395 = vsel %vm386, %v369, %v371
        %v396 = vsel %vm386, %v371, %v373
        %v397 = vsel %vm386, %v373, %v375
        %v398 = vsel %vm386, %v375, %v377
        %v399 = vsel %vm386, %v377, %v379
        %v400 = vsel %vm386, %v379, %v381
        %v401 = vsel %vm386, %v381, %v383
        %v402 = vsel %vm386, %v383, %v385
        %419 = vrot.lane.b32.xlu0 %v243, 118
        %v420 = vpop.permute.xlu0 %419
        %421 = vrot.lane.b32.xlu0 %v244, 118
        %v422 = vpop.permute.xlu0 %421
        %423 = vrot.lane.b32.xlu0 %v245, 118
        %v424 = vpop.permute.xlu0 %423
        %425 = vrot.lane.b32.xlu0 %v246, 118
        %v426 = vpop.permute.xlu0 %425
        %427 = vrot.lane.b32.xlu0 %v247, 118
        %v428 = vpop.permute.xlu0 %427
        %429 = vrot.lane.b32.xlu0 %v248, 118
        %v430 = vpop.permute.xlu0 %429
        %431 = vrot.lane.b32.xlu0 %v249, 118
        %v432 = vpop.permute.xlu0 %431
        %433 = vrot.lane.b32.xlu0 %v250, 118
        %v434 = vpop.permute.xlu0 %433
        %435 = vrot.lane.b32.xlu0 %v251, 118
        %v436 = vpop.permute.xlu0 %435
        %437 = vrot.lane.b32.xlu0 %v253, 118
        %v438 = vpop.permute.xlu0 %437
        %439 = vrot.lane.b32.xlu0 %v254, 118
        %v440 = vpop.permute.xlu0 %439
        %441 = vrot.lane.b32.xlu0 %v255, 118
        %v442 = vpop.permute.xlu0 %441
        %443 = vrot.lane.b32.xlu0 %v256, 118
        %v444 = vpop.permute.xlu0 %443
        %445 = vrot.lane.b32.xlu0 %v257, 118
        %v446 = vpop.permute.xlu0 %445
        %447 = vrot.lane.b32.xlu0 %v258, 118
        %v448 = vpop.permute.xlu0 %447
        %449 = vrot.lane.b32.xlu0 %v259, 118
        %v450 = vpop.permute.xlu0 %449
        %451 = vrot.lane.b32.xlu0 %v260, 118
        %v452 = vpop.permute.xlu0 %451
        %453 = vrot.lane.b32.xlu0 %v261, 118
        %v454 = vpop.permute.xlu0 %453
        %vm455 = vcmask 965632
        %v456 = vsel %vm455, %v420, %v422
        %v457 = vsel %vm455, %v422, %v424
        %v458 = vsel %vm455, %v424, %v426
        %v459 = vsel %vm455, %v426, %v428
        %v460 = vsel %vm455, %v428, %v430
        %v461 = vsel %vm455, %v430, %v432
        %v462 = vsel %vm455, %v432, %v434
        %v463 = vsel %vm455, %v434, %v436
        %v464 = vsel %vm455, %v438, %v440
        %v465 = vsel %vm455, %v440, %v442
        %v466 = vsel %vm455, %v442, %v444
        %v467 = vsel %vm455, %v444, %v446
        %v468 = vsel %vm455, %v446, %v448
        %v469 = vsel %vm455, %v448, %v450
        %v470 = vsel %vm455, %v450, %v452
        %v471 = vsel %vm455, %v452, %v454
        %488 = vrot.lane.b32.xlu0 %v243, 117
        %v489 = vpop.permute.xlu0 %488
        %490 = vrot.lane.b32.xlu0 %v244, 117
        %v491 = vpop.permute.xlu0 %490
        %492 = vrot.lane.b32.xlu0 %v245, 117
        %v493 = vpop.permute.xlu0 %492
        %494 = vrot.lane.b32.xlu0 %v246, 117
        %v495 = vpop.permute.xlu0 %494
        %496 = vrot.lane.b32.xlu0 %v247, 117
        %v497 = vpop.permute.xlu0 %496
        %498 = vrot.lane.b32.xlu0 %v248, 117
        %v499 = vpop.permute.xlu0 %498
        %500 = vrot.lane.b32.xlu0 %v249, 117
        %v501 = vpop.permute.xlu0 %500
        %502 = vrot.lane.b32.xlu0 %v250, 117
        %v503 = vpop.permute.xlu0 %502
        %504 = vrot.lane.b32.xlu0 %v251, 117
        %v505 = vpop.permute.xlu0 %504
        %506 = vrot.lane.b32.xlu0 %v253, 117
        %v507 = vpop.permute.xlu0 %506
        %508 = vrot.lane.b32.xlu0 %v254, 117
        %v509 = vpop.permute.xlu0 %508
        %510 = vrot.lane.b32.xlu0 %v255, 117
        %v511 = vpop.permute.xlu0 %510
        %512 = vrot.lane.b32.xlu0 %v256, 117
        %v513 = vpop.permute.xlu0 %512
        %514 = vrot.lane.b32.xlu0 %v257, 117
        %v515 = vpop.permute.xlu0 %514
        %516 = vrot.lane.b32.xlu0 %v258, 117
        %v517 = vpop.permute.xlu0 %516
        %518 = vrot.lane.b32.xlu0 %v259, 117
        %v519 = vpop.permute.xlu0 %518
        %520 = vrot.lane.b32.xlu0 %v260, 117
        %v521 = vpop.permute.xlu0 %520
        %522 = vrot.lane.b32.xlu0 %v261, 117
        %v523 = vpop.permute.xlu0 %522
        %vm524 = vcmask 957440
        %v525 = vsel %vm524, %v489, %v491
        %v526 = vsel %vm524, %v491, %v493
        %v527 = vsel %vm524, %v493, %v495
        %v528 = vsel %vm524, %v495, %v497
        %v529 = vsel %vm524, %v497, %v499
        %v530 = vsel %vm524, %v499, %v501
        %v531 = vsel %vm524, %v501, %v503
        %v532 = vsel %vm524, %v503, %v505
        %v533 = vsel %vm524, %v507, %v509
        %v534 = vsel %vm524, %v509, %v511
        %v535 = vsel %vm524, %v511, %v513
        %v536 = vsel %vm524, %v513, %v515
        %v537 = vsel %vm524, %v515, %v517
        %v538 = vsel %vm524, %v517, %v519
        %v539 = vsel %vm524, %v519, %v521
        %v540 = vsel %vm524, %v521, %v523
        %557 = vrot.lane.b32.xlu0 %v243, 116
        %v558 = vpop.permute.xlu0 %557
        %559 = vrot.lane.b32.xlu0 %v244, 116
        %v560 = vpop.permute.xlu0 %559
        %561 = vrot.lane.b32.xlu0 %v245, 116
        %v562 = vpop.permute.xlu0 %561
        %563 = vrot.lane.b32.xlu0 %v246, 116
        %v564 = vpop.permute.xlu0 %563
        %565 = vrot.lane.b32.xlu0 %v247, 116
        %v566 = vpop.permute.xlu0 %565
        %567 = vrot.lane.b32.xlu0 %v248, 116
        %v568 = vpop.permute.xlu0 %567
        %569 = vrot.lane.b32.xlu0 %v249, 116
        %v570 = vpop.permute.xlu0 %569
        %571 = vrot.lane.b32.xlu0 %v250, 116
        %v572 = vpop.permute.xlu0 %571
        %573 = vrot.lane.b32.xlu0 %v251, 116
        %v574 = vpop.permute.xlu0 %573
        %575 = vrot.lane.b32.xlu0 %v253, 116
        %v576 = vpop.permute.xlu0 %575
        %577 = vrot.lane.b32.xlu0 %v254, 116
        %v578 = vpop.permute.xlu0 %577
        %579 = vrot.lane.b32.xlu0 %v255, 116
        %v580 = vpop.permute.xlu0 %579
        %581 = vrot.lane.b32.xlu0 %v256, 116
        %v582 = vpop.permute.xlu0 %581
        %583 = vrot.lane.b32.xlu0 %v257, 116
        %v584 = vpop.permute.xlu0 %583
        %585 = vrot.lane.b32.xlu0 %v258, 116
        %v586 = vpop.permute.xlu0 %585
        %587 = vrot.lane.b32.xlu0 %v259, 116
        %v588 = vpop.permute.xlu0 %587
        %589 = vrot.lane.b32.xlu0 %v260, 116
        %v590 = vpop.permute.xlu0 %589
        %591 = vrot.lane.b32.xlu0 %v261, 116
        %v592 = vpop.permute.xlu0 %591
        %vm593 = vcmask 949248
        %v594 = vsel %vm593, %v558, %v560
        %v595 = vsel %vm593, %v560, %v562
        %v596 = vsel %vm593, %v562, %v564
        %v597 = vsel %vm593, %v564, %v566
        %v598 = vsel %vm593, %v566, %v568
        %v599 = vsel %vm593, %v568, %v570
        %v600 = vsel %vm593, %v570, %v572
        %v601 = vsel %vm593, %v572, %v574
        %v602 = vsel %vm593, %v576, %v578
        %v603 = vsel %vm593, %v578, %v580
        %v604 = vsel %vm593, %v580, %v582
        %v605 = vsel %vm593, %v582, %v584
        %v606 = vsel %vm593, %v584, %v586
        %v607 = vsel %vm593, %v586, %v588
        %v608 = vsel %vm593, %v588, %v590
        %v609 = vsel %vm593, %v590, %v592
        %626 = vrot.lane.b32.xlu0 %v243, 108
        %v627 = vpop.permute.xlu0 %626
        %628 = vrot.lane.b32.xlu0 %v244, 108
        %v629 = vpop.permute.xlu0 %628
        %630 = vrot.lane.b32.xlu0 %v245, 108
        %v631 = vpop.permute.xlu0 %630
        %632 = vrot.lane.b32.xlu0 %v246, 108
        %v633 = vpop.permute.xlu0 %632
        %634 = vrot.lane.b32.xlu0 %v247, 108
        %v635 = vpop.permute.xlu0 %634
        %636 = vrot.lane.b32.xlu0 %v248, 108
        %v637 = vpop.permute.xlu0 %636
        %638 = vrot.lane.b32.xlu0 %v249, 108
        %v639 = vpop.permute.xlu0 %638
        %640 = vrot.lane.b32.xlu0 %v250, 108
        %v641 = vpop.permute.xlu0 %640
        %642 = vrot.lane.b32.xlu0 %v251, 108
        %v643 = vpop.permute.xlu0 %642
        %644 = vrot.lane.b32.xlu0 %v253, 108
        %v645 = vpop.permute.xlu0 %644
        %646 = vrot.lane.b32.xlu0 %v254, 108
        %v647 = vpop.permute.xlu0 %646
        %648 = vrot.lane.b32.xlu0 %v255, 108
        %v649 = vpop.permute.xlu0 %648
        %650 = vrot.lane.b32.xlu0 %v256, 108
        %v651 = vpop.permute.xlu0 %650
        %652 = vrot.lane.b32.xlu0 %v257, 108
        %v653 = vpop.permute.xlu0 %652
        %654 = vrot.lane.b32.xlu0 %v258, 108
        %v655 = vpop.permute.xlu0 %654
        %656 = vrot.lane.b32.xlu0 %v259, 108
        %v657 = vpop.permute.xlu0 %656
        %658 = vrot.lane.b32.xlu0 %v260, 108
        %v659 = vpop.permute.xlu0 %658
        %660 = vrot.lane.b32.xlu0 %v261, 108
        %v661 = vpop.permute.xlu0 %660
        %vm662 = vcmask 883712
        %v663 = vsel %vm662, %v627, %v629
        %v664 = vsel %vm662, %v629, %v631
        %v665 = vsel %vm662, %v631, %v633
        %v666 = vsel %vm662, %v633, %v635
        %v667 = vsel %vm662, %v635, %v637
        %v668 = vsel %vm662, %v637, %v639
        %v669 = vsel %vm662, %v639, %v641
        %v670 = vsel %vm662, %v641, %v643
        %v671 = vsel %vm662, %v645, %v647
        %v672 = vsel %vm662, %v647, %v649
        %v673 = vsel %vm662, %v649, %v651
        %v674 = vsel %vm662, %v651, %v653
        %v675 = vsel %vm662, %v653, %v655
        %v676 = vsel %vm662, %v655, %v657
        %v677 = vsel %vm662, %v657, %v659
        %v678 = vsel %vm662, %v659, %v661
        %695 = vrot.lane.b32.xlu0 %v243, 107
        %v696 = vpop.permute.xlu0 %695
        %697 = vrot.lane.b32.xlu0 %v244, 107
        %v698 = vpop.permute.xlu0 %697
        %699 = vrot.lane.b32.xlu0 %v245, 107
        %v700 = vpop.permute.xlu0 %699
        %701 = vrot.lane.b32.xlu0 %v246, 107
        %v702 = vpop.permute.xlu0 %701
        %703 = vrot.lane.b32.xlu0 %v247, 107
        %v704 = vpop.permute.xlu0 %703
        %705 = vrot.lane.b32.xlu0 %v248, 107
        %v706 = vpop.permute.xlu0 %705
        %707 = vrot.lane.b32.xlu0 %v249, 107
        %v708 = vpop.permute.xlu0 %707
        %709 = vrot.lane.b32.xlu0 %v250, 107
        %v710 = vpop.permute.xlu0 %709
        %711 = vrot.lane.b32.xlu0 %v251, 107
        %v712 = vpop.permute.xlu0 %711
        %713 = vrot.lane.b32.xlu0 %v253, 107
        %v714 = vpop.permute.xlu0 %713
        %715 = vrot.lane.b32.xlu0 %v254, 107
        %v716 = vpop.permute.xlu0 %715
        %717 = vrot.lane.b32.xlu0 %v255, 107
        %v718 = vpop.permute.xlu0 %717
        %719 = vrot.lane.b32.xlu0 %v256, 107
        %v720 = vpop.permute.xlu0 %719
        %721 = vrot.lane.b32.xlu0 %v257, 107
        %v722 = vpop.permute.xlu0 %721
        %723 = vrot.lane.b32.xlu0 %v258, 107
        %v724 = vpop.permute.xlu0 %723
        %725 = vrot.lane.b32.xlu0 %v259, 107
        %v726 = vpop.permute.xlu0 %725
        %727 = vrot.lane.b32.xlu0 %v260, 107
        %v728 = vpop.permute.xlu0 %727
        %729 = vrot.lane.b32.xlu0 %v261, 107
        %v730 = vpop.permute.xlu0 %729
        %vm731 = vcmask 875520
        %v732 = vsel %vm731, %v696, %v698
        %v733 = vsel %vm731, %v698, %v700
        %v734 = vsel %vm731, %v700, %v702
        %v735 = vsel %vm731, %v702, %v704
        %v736 = vsel %vm731, %v704, %v706
        %v737 = vsel %vm731, %v706, %v708
        %v738 = vsel %vm731, %v708, %v710
        %v739 = vsel %vm731, %v710, %v712
        %v740 = vsel %vm731, %v714, %v716
        %v741 = vsel %vm731, %v716, %v718
        %v742 = vsel %vm731, %v718, %v720
        %v743 = vsel %vm731, %v720, %v722
        %v744 = vsel %vm731, %v722, %v724
        %v745 = vsel %vm731, %v724, %v726
        %v746 = vsel %vm731, %v726, %v728
        %v747 = vsel %vm731, %v728, %v730
        %764 = vrot.lane.b32.xlu0 %v243, 106
        %v765 = vpop.permute.xlu0 %764
        %766 = vrot.lane.b32.xlu0 %v244, 106
        %v767 = vpop.permute.xlu0 %766
        %768 = vrot.lane.b32.xlu0 %v245, 106
        %v769 = vpop.permute.xlu0 %768
        %770 = vrot.lane.b32.xlu0 %v246, 106
        %v771 = vpop.permute.xlu0 %770
        %772 = vrot.lane.b32.xlu0 %v247, 106
        %v773 = vpop.permute.xlu0 %772
        %774 = vrot.lane.b32.xlu0 %v248, 106
        %v775 = vpop.permute.xlu0 %774
        %776 = vrot.lane.b32.xlu0 %v249, 106
        %v777 = vpop.permute.xlu0 %776
        %778 = vrot.lane.b32.xlu0 %v250, 106
        %v779 = vpop.permute.xlu0 %778
        %780 = vrot.lane.b32.xlu0 %v251, 106
        %v781 = vpop.permute.xlu0 %780
        %782 = vrot.lane.b32.xlu0 %v253, 106
        %v783 = vpop.permute.xlu0 %782
        %784 = vrot.lane.b32.xlu0 %v254, 106
        %v785 = vpop.permute.xlu0 %784
        %786 = vrot.lane.b32.xlu0 %v255, 106
        %v787 = vpop.permute.xlu0 %786
        %788 = vrot.lane.b32.xlu0 %v256, 106
        %v789 = vpop.permute.xlu0 %788
        %790 = vrot.lane.b32.xlu0 %v257, 106
        %v791 = vpop.permute.xlu0 %790
        %792 = vrot.lane.b32.xlu0 %v258, 106
        %v793 = vpop.permute.xlu0 %792
        %794 = vrot.lane.b32.xlu0 %v259, 106
        %v795 = vpop.permute.xlu0 %794
        %796 = vrot.lane.b32.xlu0 %v260, 106
        %v797 = vpop.permute.xlu0 %796
        %798 = vrot.lane.b32.xlu0 %v261, 106
        %v799 = vpop.permute.xlu0 %798
        %vm800 = vcmask 867328
        %v801 = vsel %vm800, %v765, %v767
        %v802 = vsel %vm800, %v767, %v769
        %v803 = vsel %vm800, %v769, %v771
        %v804 = vsel %vm800, %v771, %v773
        %v805 = vsel %vm800, %v773, %v775
        %v806 = vsel %vm800, %v775, %v777
        %v807 = vsel %vm800, %v777, %v779
        %v808 = vsel %vm800, %v779, %v781
        %v809 = vsel %vm800, %v783, %v785
        %v810 = vsel %vm800, %v785, %v787
        %v811 = vsel %vm800, %v787, %v789
        %v812 = vsel %vm800, %v789, %v791
        %v813 = vsel %vm800, %v791, %v793
        %v814 = vsel %vm800, %v793, %v795
        %v815 = vsel %vm800, %v795, %v797
        %v816 = vsel %vm800, %v797, %v799
        %833 = vrot.lane.b32.xlu0 %v243, 28
        %v834 = vpop.permute.xlu0 %833
        %835 = vrot.lane.b32.xlu0 %v244, 28
        %v836 = vpop.permute.xlu0 %835
        %837 = vrot.lane.b32.xlu0 %v245, 28
        %v838 = vpop.permute.xlu0 %837
        %839 = vrot.lane.b32.xlu0 %v246, 28
        %v840 = vpop.permute.xlu0 %839
        %841 = vrot.lane.b32.xlu0 %v247, 28
        %v842 = vpop.permute.xlu0 %841
        %843 = vrot.lane.b32.xlu0 %v248, 28
        %v844 = vpop.permute.xlu0 %843
        %845 = vrot.lane.b32.xlu0 %v249, 28
        %v846 = vpop.permute.xlu0 %845
        %847 = vrot.lane.b32.xlu0 %v250, 28
        %v848 = vpop.permute.xlu0 %847
        %849 = vrot.lane.b32.xlu0 %v251, 28
        %v850 = vpop.permute.xlu0 %849
        %851 = vrot.lane.b32.xlu0 %v253, 28
        %v852 = vpop.permute.xlu0 %851
        %853 = vrot.lane.b32.xlu0 %v254, 28
        %v854 = vpop.permute.xlu0 %853
        %855 = vrot.lane.b32.xlu0 %v255, 28
        %v856 = vpop.permute.xlu0 %855
        %857 = vrot.lane.b32.xlu0 %v256, 28
        %v858 = vpop.permute.xlu0 %857
        %859 = vrot.lane.b32.xlu0 %v257, 28
        %v860 = vpop.permute.xlu0 %859
        %861 = vrot.lane.b32.xlu0 %v258, 28
        %v862 = vpop.permute.xlu0 %861
        %863 = vrot.lane.b32.xlu0 %v259, 28
        %v864 = vpop.permute.xlu0 %863
        %865 = vrot.lane.b32.xlu0 %v260, 28
        %v866 = vpop.permute.xlu0 %865
        %867 = vrot.lane.b32.xlu0 %v261, 28
        %v868 = vpop.permute.xlu0 %867
        %vm869 = vcmask 228352
        %v870 = vsel %vm869, %v834, %v836
        %v871 = vsel %vm869, %v836, %v838
        %v872 = vsel %vm869, %v838, %v840
        %v873 = vsel %vm869, %v840, %v842
        %v874 = vsel %vm869, %v842, %v844
        %v875 = vsel %vm869, %v844, %v846
        %v876 = vsel %vm869, %v846, %v848
        %v877 = vsel %vm869, %v848, %v850
        %v878 = vsel %vm869, %v852, %v854
        %v879 = vsel %vm869, %v854, %v856
        %v880 = vsel %vm869, %v856, %v858
        %v881 = vsel %vm869, %v858, %v860
        %v882 = vsel %vm869, %v860, %v862
        %v883 = vsel %vm869, %v862, %v864
        %v884 = vsel %vm869, %v864, %v866
        %v885 = vsel %vm869, %v866, %v868
        %902 = vrot.lane.b32.xlu0 %v243, 27
        %v903 = vpop.permute.xlu0 %902
        %904 = vrot.lane.b32.xlu0 %v244, 27
        %v905 = vpop.permute.xlu0 %904
        %906 = vrot.lane.b32.xlu0 %v245, 27
        %v907 = vpop.permute.xlu0 %906
        %908 = vrot.lane.b32.xlu0 %v246, 27
        %v909 = vpop.permute.xlu0 %908
        %910 = vrot.lane.b32.xlu0 %v247, 27
        %v911 = vpop.permute.xlu0 %910
        %912 = vrot.lane.b32.xlu0 %v248, 27
        %v913 = vpop.permute.xlu0 %912
        %914 = vrot.lane.b32.xlu0 %v249, 27
        %v915 = vpop.permute.xlu0 %914
        %916 = vrot.lane.b32.xlu0 %v250, 27
        %v917 = vpop.permute.xlu0 %916
        %918 = vrot.lane.b32.xlu0 %v251, 27
        %v919 = vpop.permute.xlu0 %918
        %920 = vrot.lane.b32.xlu0 %v253, 27
        %v921 = vpop.permute.xlu0 %920
        %922 = vrot.lane.b32.xlu0 %v254, 27
        %v923 = vpop.permute.xlu0 %922
        %924 = vrot.lane.b32.xlu0 %v255, 27
        %v925 = vpop.permute.xlu0 %924
        %926 = vrot.lane.b32.xlu0 %v256, 27
        %v927 = vpop.permute.xlu0 %926
        %928 = vrot.lane.b32.xlu0 %v257, 27
        %v929 = vpop.permute.xlu0 %928
        %930 = vrot.lane.b32.xlu0 %v258, 27
        %v931 = vpop.permute.xlu0 %930
        %932 = vrot.lane.b32.xlu0 %v259, 27
        %v933 = vpop.permute.xlu0 %932
        %934 = vrot.lane.b32.xlu0 %v260, 27
        %v935 = vpop.permute.xlu0 %934
        %936 = vrot.lane.b32.xlu0 %v261, 27
        %v937 = vpop.permute.xlu0 %936
        %vm938 = vcmask 220160
        %v939 = vsel %vm938, %v903, %v905
        %v940 = vsel %vm938, %v905, %v907
        %v941 = vsel %vm938, %v907, %v909
        %v942 = vsel %vm938, %v909, %v911
        %v943 = vsel %vm938, %v911, %v913
        %v944 = vsel %vm938, %v913, %v915
        %v945 = vsel %vm938, %v915, %v917
        %v946 = vsel %vm938, %v917, %v919
        %v947 = vsel %vm938, %v921, %v923
        %v948 = vsel %vm938, %v923, %v925
        %v949 = vsel %vm938, %v925, %v927
        %v950 = vsel %vm938, %v927, %v929
        %v951 = vsel %vm938, %v929, %v931
        %v952 = vsel %vm938, %v931, %v933
        %v953 = vsel %vm938, %v933, %v935
        %v954 = vsel %vm938, %v935, %v937
        %971 = vrot.lane.b32.xlu0 %v243, 26
        %v972 = vpop.permute.xlu0 %971
        %973 = vrot.lane.b32.xlu0 %v244, 26
        %v974 = vpop.permute.xlu0 %973
        %975 = vrot.lane.b32.xlu0 %v245, 26
        %v976 = vpop.permute.xlu0 %975
        %977 = vrot.lane.b32.xlu0 %v246, 26
        %v978 = vpop.permute.xlu0 %977
        %979 = vrot.lane.b32.xlu0 %v247, 26
        %v980 = vpop.permute.xlu0 %979
        %981 = vrot.lane.b32.xlu0 %v248, 26
        %v982 = vpop.permute.xlu0 %981
        %983 = vrot.lane.b32.xlu0 %v249, 26
        %v984 = vpop.permute.xlu0 %983
        %985 = vrot.lane.b32.xlu0 %v250, 26
        %v986 = vpop.permute.xlu0 %985
        %987 = vrot.lane.b32.xlu0 %v251, 26
        %v988 = vpop.permute.xlu0 %987
        %989 = vrot.lane.b32.xlu0 %v253, 26
        %v990 = vpop.permute.xlu0 %989
        %991 = vrot.lane.b32.xlu0 %v254, 26
        %v992 = vpop.permute.xlu0 %991
        %993 = vrot.lane.b32.xlu0 %v255, 26
        %v994 = vpop.permute.xlu0 %993
        %995 = vrot.lane.b32.xlu0 %v256, 26
        %v996 = vpop.permute.xlu0 %995
        %997 = vrot.lane.b32.xlu0 %v257, 26
        %v998 = vpop.permute.xlu0 %997
        %999 = vrot.lane.b32.xlu0 %v258, 26
        %v1000 = vpop.permute.xlu0 %999
        %1001 = vrot.lane.b32.xlu0 %v259, 26
        %v1002 = vpop.permute.xlu0 %1001
        %1003 = vrot.lane.b32.xlu0 %v260, 26
        %v1004 = vpop.permute.xlu0 %1003
        %1005 = vrot.lane.b32.xlu0 %v261, 26
        %v1006 = vpop.permute.xlu0 %1005
        %vm1007 = vcmask 211968
        %v1008 = vsel %vm1007, %v972, %v974
        %v1009 = vsel %vm1007, %v974, %v976
        %v1010 = vsel %vm1007, %v976, %v978
        %v1011 = vsel %vm1007, %v978, %v980
        %v1012 = vsel %vm1007, %v980, %v982
        %v1013 = vsel %vm1007, %v982, %v984
        %v1014 = vsel %vm1007, %v984, %v986
        %v1015 = vsel %vm1007, %v986, %v988
        %v1016 = vsel %vm1007, %v990, %v992
        %v1017 = vsel %vm1007, %v992, %v994
        %v1018 = vsel %vm1007, %v994, %v996
        %v1019 = vsel %vm1007, %v996, %v998
        %v1020 = vsel %vm1007, %v998, %v1000
        %v1021 = vsel %vm1007, %v1000, %v1002
        %v1022 = vsel %vm1007, %v1002, %v1004
        %v1023 = vsel %vm1007, %v1004, %v1006
        %1040 = vrot.lane.b32.xlu0 %v243, 18
        %v1041 = vpop.permute.xlu0 %1040
        %1042 = vrot.lane.b32.xlu0 %v244, 18
        %v1043 = vpop.permute.xlu0 %1042
        %1044 = vrot.lane.b32.xlu0 %v245, 18
        %v1045 = vpop.permute.xlu0 %1044
        %1046 = vrot.lane.b32.xlu0 %v246, 18
        %v1047 = vpop.permute.xlu0 %1046
        %1048 = vrot.lane.b32.xlu0 %v247, 18
        %v1049 = vpop.permute.xlu0 %1048
        %1050 = vrot.lane.b32.xlu0 %v248, 18
        %v1051 = vpop.permute.xlu0 %1050
        %1052 = vrot.lane.b32.xlu0 %v249, 18
        %v1053 = vpop.permute.xlu0 %1052
        %1054 = vrot.lane.b32.xlu0 %v250, 18
        %v1055 = vpop.permute.xlu0 %1054
        %1056 = vrot.lane.b32.xlu0 %v251, 18
        %v1057 = vpop.permute.xlu0 %1056
        %1058 = vrot.lane.b32.xlu0 %v253, 18
        %v1059 = vpop.permute.xlu0 %1058
        %1060 = vrot.lane.b32.xlu0 %v254, 18
        %v1061 = vpop.permute.xlu0 %1060
        %1062 = vrot.lane.b32.xlu0 %v255, 18
        %v1063 = vpop.permute.xlu0 %1062
        %1064 = vrot.lane.b32.xlu0 %v256, 18
        %v1065 = vpop.permute.xlu0 %1064
        %1066 = vrot.lane.b32.xlu0 %v257, 18
        %v1067 = vpop.permute.xlu0 %1066
        %1068 = vrot.lane.b32.xlu0 %v258, 18
        %v1069 = vpop.permute.xlu0 %1068
        %1070 = vrot.lane.b32.xlu0 %v259, 18
        %v1071 = vpop.permute.xlu0 %1070
        %1072 = vrot.lane.b32.xlu0 %v260, 18
        %v1073 = vpop.permute.xlu0 %1072
        %1074 = vrot.lane.b32.xlu0 %v261, 18
        %v1075 = vpop.permute.xlu0 %1074
        %vm1076 = vcmask 146432
        %v1077 = vsel %vm1076, %v1041, %v1043
        %v1078 = vsel %vm1076, %v1043, %v1045
        %v1079 = vsel %vm1076, %v1045, %v1047
        %v1080 = vsel %vm1076, %v1047, %v1049
        %v1081 = vsel %vm1076, %v1049, %v1051
        %v1082 = vsel %vm1076, %v1051, %v1053
        %v1083 = vsel %vm1076, %v1053, %v1055
        %v1084 = vsel %vm1076, %v1055, %v1057
        %v1085 = vsel %vm1076, %v1059, %v1061
        %v1086 = vsel %vm1076, %v1061, %v1063
        %v1087 = vsel %vm1076, %v1063, %v1065
        %v1088 = vsel %vm1076, %v1065, %v1067
        %v1089 = vsel %vm1076, %v1067, %v1069
        %v1090 = vsel %vm1076, %v1069, %v1071
        %v1091 = vsel %vm1076, %v1071, %v1073
        %v1092 = vsel %vm1076, %v1073, %v1075
        %1109 = vrot.lane.b32.xlu0 %v243, 17
        %v1110 = vpop.permute.xlu0 %1109
        %1111 = vrot.lane.b32.xlu0 %v244, 17
        %v1112 = vpop.permute.xlu0 %1111
        %1113 = vrot.lane.b32.xlu0 %v245, 17
        %v1114 = vpop.permute.xlu0 %1113
        %1115 = vrot.lane.b32.xlu0 %v246, 17
        %v1116 = vpop.permute.xlu0 %1115
        %1117 = vrot.lane.b32.xlu0 %v247, 17
        %v1118 = vpop.permute.xlu0 %1117
        %1119 = vrot.lane.b32.xlu0 %v248, 17
        %v1120 = vpop.permute.xlu0 %1119
        %1121 = vrot.lane.b32.xlu0 %v249, 17
        %v1122 = vpop.permute.xlu0 %1121
        %1123 = vrot.lane.b32.xlu0 %v250, 17
        %v1124 = vpop.permute.xlu0 %1123
        %1125 = vrot.lane.b32.xlu0 %v251, 17
        %v1126 = vpop.permute.xlu0 %1125
        %1127 = vrot.lane.b32.xlu0 %v253, 17
        %v1128 = vpop.permute.xlu0 %1127
        %1129 = vrot.lane.b32.xlu0 %v254, 17
        %v1130 = vpop.permute.xlu0 %1129
        %1131 = vrot.lane.b32.xlu0 %v255, 17
        %v1132 = vpop.permute.xlu0 %1131
        %1133 = vrot.lane.b32.xlu0 %v256, 17
        %v1134 = vpop.permute.xlu0 %1133
        %1135 = vrot.lane.b32.xlu0 %v257, 17
        %v1136 = vpop.permute.xlu0 %1135
        %1137 = vrot.lane.b32.xlu0 %v258, 17
        %v1138 = vpop.permute.xlu0 %1137
        %1139 = vrot.lane.b32.xlu0 %v259, 17
        %v1140 = vpop.permute.xlu0 %1139
        %1141 = vrot.lane.b32.xlu0 %v260, 17
        %v1142 = vpop.permute.xlu0 %1141
        %1143 = vrot.lane.b32.xlu0 %v261, 17
        %v1144 = vpop.permute.xlu0 %1143
        %vm1145 = vcmask 138240
        %v1146 = vsel %vm1145, %v1110, %v1112
        %v1147 = vsel %vm1145, %v1112, %v1114
        %v1148 = vsel %vm1145, %v1114, %v1116
        %v1149 = vsel %vm1145, %v1116, %v1118
        %v1150 = vsel %vm1145, %v1118, %v1120
        %v1151 = vsel %vm1145, %v1120, %v1122
        %v1152 = vsel %vm1145, %v1122, %v1124
        %v1153 = vsel %vm1145, %v1124, %v1126
        %v1154 = vsel %vm1145, %v1128, %v1130
        %v1155 = vsel %vm1145, %v1130, %v1132
        %v1156 = vsel %vm1145, %v1132, %v1134
        %v1157 = vsel %vm1145, %v1134, %v1136
        %v1158 = vsel %vm1145, %v1136, %v1138
        %v1159 = vsel %vm1145, %v1138, %v1140
        %v1160 = vsel %vm1145, %v1140, %v1142
        %v1161 = vsel %vm1145, %v1142, %v1144
        %1178 = vrot.lane.b32.xlu0 %v243, 16
        %v1179 = vpop.permute.xlu0 %1178
        %1180 = vrot.lane.b32.xlu0 %v244, 16
        %v1181 = vpop.permute.xlu0 %1180
        %1182 = vrot.lane.b32.xlu0 %v245, 16
        %v1183 = vpop.permute.xlu0 %1182
        %1184 = vrot.lane.b32.xlu0 %v246, 16
        %v1185 = vpop.permute.xlu0 %1184
        %1186 = vrot.lane.b32.xlu0 %v247, 16
        %v1187 = vpop.permute.xlu0 %1186
        %1188 = vrot.lane.b32.xlu0 %v248, 16
        %v1189 = vpop.permute.xlu0 %1188
        %1190 = vrot.lane.b32.xlu0 %v249, 16
        %v1191 = vpop.permute.xlu0 %1190
        %1192 = vrot.lane.b32.xlu0 %v250, 16
        %v1193 = vpop.permute.xlu0 %1192
        %1194 = vrot.lane.b32.xlu0 %v251, 16
        %v1195 = vpop.permute.xlu0 %1194
        %1196 = vrot.lane.b32.xlu0 %v253, 16
        %v1197 = vpop.permute.xlu0 %1196
        %1198 = vrot.lane.b32.xlu0 %v254, 16
        %v1199 = vpop.permute.xlu0 %1198
        %1200 = vrot.lane.b32.xlu0 %v255, 16
        %v1201 = vpop.permute.xlu0 %1200
        %1202 = vrot.lane.b32.xlu0 %v256, 16
        %v1203 = vpop.permute.xlu0 %1202
        %1204 = vrot.lane.b32.xlu0 %v257, 16
        %v1205 = vpop.permute.xlu0 %1204
        %1206 = vrot.lane.b32.xlu0 %v258, 16
        %v1207 = vpop.permute.xlu0 %1206
        %1208 = vrot.lane.b32.xlu0 %v259, 16
        %v1209 = vpop.permute.xlu0 %1208
        %1210 = vrot.lane.b32.xlu0 %v260, 16
        %v1211 = vpop.permute.xlu0 %1210
        %1212 = vrot.lane.b32.xlu0 %v261, 16
        %v1213 = vpop.permute.xlu0 %1212
        %vm1214 = vcmask 130048
        %v1215 = vsel %vm1214, %v1179, %v1181
        %v1216 = vsel %vm1214, %v1181, %v1183
        %v1217 = vsel %vm1214, %v1183, %v1185
        %v1218 = vsel %vm1214, %v1185, %v1187
        %v1219 = vsel %vm1214, %v1187, %v1189
        %v1220 = vsel %vm1214, %v1189, %v1191
        %v1221 = vsel %vm1214, %v1191, %v1193
        %v1222 = vsel %vm1214, %v1193, %v1195
        %v1223 = vsel %vm1214, %v1197, %v1199
        %v1224 = vsel %vm1214, %v1199, %v1201
        %v1225 = vsel %vm1214, %v1201, %v1203
        %v1226 = vsel %vm1214, %v1203, %v1205
        %v1227 = vsel %vm1214, %v1205, %v1207
        %v1228 = vsel %vm1214, %v1207, %v1209
        %v1229 = vsel %vm1214, %v1209, %v1211
        %v1230 = vsel %vm1214, %v1211, %v1213
        %1247 = vrot.lane.b32.xlu0 %v243, 8
        %v1248 = vpop.permute.xlu0 %1247
        %1249 = vrot.lane.b32.xlu0 %v244, 8
        %v1250 = vpop.permute.xlu0 %1249
        %1251 = vrot.lane.b32.xlu0 %v245, 8
        %v1252 = vpop.permute.xlu0 %1251
        %1253 = vrot.lane.b32.xlu0 %v246, 8
        %v1254 = vpop.permute.xlu0 %1253
        %1255 = vrot.lane.b32.xlu0 %v247, 8
        %v1256 = vpop.permute.xlu0 %1255
        %1257 = vrot.lane.b32.xlu0 %v248, 8
        %v1258 = vpop.permute.xlu0 %1257
        %1259 = vrot.lane.b32.xlu0 %v249, 8
        %v1260 = vpop.permute.xlu0 %1259
        %1261 = vrot.lane.b32.xlu0 %v250, 8
        %v1262 = vpop.permute.xlu0 %1261
        %1263 = vrot.lane.b32.xlu0 %v251, 8
        %v1264 = vpop.permute.xlu0 %1263
        %1265 = vrot.lane.b32.xlu0 %v253, 8
        %v1266 = vpop.permute.xlu0 %1265
        %1267 = vrot.lane.b32.xlu0 %v254, 8
        %v1268 = vpop.permute.xlu0 %1267
        %1269 = vrot.lane.b32.xlu0 %v255, 8
        %v1270 = vpop.permute.xlu0 %1269
        %1271 = vrot.lane.b32.xlu0 %v256, 8
        %v1272 = vpop.permute.xlu0 %1271
        %1273 = vrot.lane.b32.xlu0 %v257, 8
        %v1274 = vpop.permute.xlu0 %1273
        %1275 = vrot.lane.b32.xlu0 %v258, 8
        %v1276 = vpop.permute.xlu0 %1275
        %1277 = vrot.lane.b32.xlu0 %v259, 8
        %v1278 = vpop.permute.xlu0 %1277
        %1279 = vrot.lane.b32.xlu0 %v260, 8
        %v1280 = vpop.permute.xlu0 %1279
        %1281 = vrot.lane.b32.xlu0 %v261, 8
        %v1282 = vpop.permute.xlu0 %1281
        %vm1283 = vcmask 64512
        %v1284 = vsel %vm1283, %v1248, %v1250
        %v1285 = vsel %vm1283, %v1250, %v1252
        %v1286 = vsel %vm1283, %v1252, %v1254
        %v1287 = vsel %vm1283, %v1254, %v1256
        %v1288 = vsel %vm1283, %v1256, %v1258
        %v1289 = vsel %vm1283, %v1258, %v1260
        %v1290 = vsel %vm1283, %v1260, %v1262
        %v1291 = vsel %vm1283, %v1262, %v1264
        %v1292 = vsel %vm1283, %v1266, %v1268
        %v1293 = vsel %vm1283, %v1268, %v1270
        %v1294 = vsel %vm1283, %v1270, %v1272
        %v1295 = vsel %vm1283, %v1272, %v1274
        %v1296 = vsel %vm1283, %v1274, %v1276
        %v1297 = vsel %vm1283, %v1276, %v1278
        %v1298 = vsel %vm1283, %v1278, %v1280
        %v1299 = vsel %vm1283, %v1280, %v1282
        %1318 = vrot.lane.b32.xlu0 %v244, 49
        %v1319 = vpop.permute.xlu0 %1318
        %1320 = vrot.lane.b32.xlu0 %v245, 49
        %v1321 = vpop.permute.xlu0 %1320
        %1322 = vrot.lane.b32.xlu0 %v246, 49
        %v1323 = vpop.permute.xlu0 %1322
        %1324 = vrot.lane.b32.xlu0 %v247, 49
        %v1325 = vpop.permute.xlu0 %1324
        %1326 = vrot.lane.b32.xlu0 %v248, 49
        %v1327 = vpop.permute.xlu0 %1326
        %1328 = vrot.lane.b32.xlu0 %v249, 49
        %v1329 = vpop.permute.xlu0 %1328
        %1330 = vrot.lane.b32.xlu0 %v250, 49
        %v1331 = vpop.permute.xlu0 %1330
        %1332 = vrot.lane.b32.xlu0 %v251, 49
        %v1333 = vpop.permute.xlu0 %1332
        %1334 = vrot.lane.b32.xlu0 %v252, 49
        %v1335 = vpop.permute.xlu0 %1334
        %1336 = vrot.lane.b32.xlu0 %v254, 49
        %v1337 = vpop.permute.xlu0 %1336
        %1338 = vrot.lane.b32.xlu0 %v255, 49
        %v1339 = vpop.permute.xlu0 %1338
        %1340 = vrot.lane.b32.xlu0 %v256, 49
        %v1341 = vpop.permute.xlu0 %1340
        %1342 = vrot.lane.b32.xlu0 %v257, 49
        %v1343 = vpop.permute.xlu0 %1342
        %1344 = vrot.lane.b32.xlu0 %v258, 49
        %v1345 = vpop.permute.xlu0 %1344
        %1346 = vrot.lane.b32.xlu0 %v259, 49
        %v1347 = vpop.permute.xlu0 %1346
        %1348 = vrot.lane.b32.xlu0 %v260, 49
        %v1349 = vpop.permute.xlu0 %1348
        %1350 = vrot.lane.b32.xlu0 %v261, 49
        %v1351 = vpop.permute.xlu0 %1350
        %1352 = vrot.lane.b32.xlu0 %v262, 49
        %v1353 = vpop.permute.xlu0 %1352
        %vm1354 = vcmask 400384
        %v1355 = vsel %vm1354, %v1319, %v1321
        %v1356 = vsel %vm1354, %v1321, %v1323
        %v1357 = vsel %vm1354, %v1323, %v1325
        %v1358 = vsel %vm1354, %v1325, %v1327
        %v1359 = vsel %vm1354, %v1327, %v1329
        %v1360 = vsel %vm1354, %v1329, %v1331
        %v1361 = vsel %vm1354, %v1331, %v1333
        %v1362 = vsel %vm1354, %v1333, %v1335
        %v1363 = vsel %vm1354, %v1337, %v1339
        %v1364 = vsel %vm1354, %v1339, %v1341
        %v1365 = vsel %vm1354, %v1341, %v1343
        %v1366 = vsel %vm1354, %v1343, %v1345
        %v1367 = vsel %vm1354, %v1345, %v1347
        %v1368 = vsel %vm1354, %v1347, %v1349
        %v1369 = vsel %vm1354, %v1349, %v1351
        %v1370 = vsel %vm1354, %v1351, %v1353
        %1371 = vrot.lane.b32.xlu0 %v244, 48
        %v1372 = vpop.permute.xlu0 %1371
        %1373 = vrot.lane.b32.xlu0 %v245, 48
        %v1374 = vpop.permute.xlu0 %1373
        %1375 = vrot.lane.b32.xlu0 %v246, 48
        %v1376 = vpop.permute.xlu0 %1375
        %1377 = vrot.lane.b32.xlu0 %v247, 48
        %v1378 = vpop.permute.xlu0 %1377
        %1379 = vrot.lane.b32.xlu0 %v248, 48
        %v1380 = vpop.permute.xlu0 %1379
        %1381 = vrot.lane.b32.xlu0 %v249, 48
        %v1382 = vpop.permute.xlu0 %1381
        %1383 = vrot.lane.b32.xlu0 %v250, 48
        %v1384 = vpop.permute.xlu0 %1383
        %1385 = vrot.lane.b32.xlu0 %v251, 48
        %v1386 = vpop.permute.xlu0 %1385
        %1387 = vrot.lane.b32.xlu0 %v252, 48
        %v1388 = vpop.permute.xlu0 %1387
        %1389 = vrot.lane.b32.xlu0 %v254, 48
        %v1390 = vpop.permute.xlu0 %1389
        %1391 = vrot.lane.b32.xlu0 %v255, 48
        %v1392 = vpop.permute.xlu0 %1391
        %1393 = vrot.lane.b32.xlu0 %v256, 48
        %v1394 = vpop.permute.xlu0 %1393
        %1395 = vrot.lane.b32.xlu0 %v257, 48
        %v1396 = vpop.permute.xlu0 %1395
        %1397 = vrot.lane.b32.xlu0 %v258, 48
        %v1398 = vpop.permute.xlu0 %1397
        %1399 = vrot.lane.b32.xlu0 %v259, 48
        %v1400 = vpop.permute.xlu0 %1399
        %1401 = vrot.lane.b32.xlu0 %v260, 48
        %v1402 = vpop.permute.xlu0 %1401
        %1403 = vrot.lane.b32.xlu0 %v261, 48
        %v1404 = vpop.permute.xlu0 %1403
        %1405 = vrot.lane.b32.xlu0 %v262, 48
        %v1406 = vpop.permute.xlu0 %1405
        %vm1407 = vcmask 392192
        %v1408 = vsel %vm1407, %v1372, %v1374
        %v1409 = vsel %vm1407, %v1374, %v1376
        %v1410 = vsel %vm1407, %v1376, %v1378
        %v1411 = vsel %vm1407, %v1378, %v1380
        %v1412 = vsel %vm1407, %v1380, %v1382
        %v1413 = vsel %vm1407, %v1382, %v1384
        %v1414 = vsel %vm1407, %v1384, %v1386
        %v1415 = vsel %vm1407, %v1386, %v1388
        %v1416 = vsel %vm1407, %v1390, %v1392
        %v1417 = vsel %vm1407, %v1392, %v1394
        %v1418 = vsel %vm1407, %v1394, %v1396
        %v1419 = vsel %vm1407, %v1396, %v1398
        %v1420 = vsel %vm1407, %v1398, %v1400
        %v1421 = vsel %vm1407, %v1400, %v1402
        %v1422 = vsel %vm1407, %v1402, %v1404
        %v1423 = vsel %vm1407, %v1404, %v1406
        %1424 = vrot.lane.b32.xlu0 %v244, 47
        %v1425 = vpop.permute.xlu0 %1424
        %1426 = vrot.lane.b32.xlu0 %v245, 47
        %v1427 = vpop.permute.xlu0 %1426
        %1428 = vrot.lane.b32.xlu0 %v246, 47
        %v1429 = vpop.permute.xlu0 %1428
        %1430 = vrot.lane.b32.xlu0 %v247, 47
        %v1431 = vpop.permute.xlu0 %1430
        %1432 = vrot.lane.b32.xlu0 %v248, 47
        %v1433 = vpop.permute.xlu0 %1432
        %1434 = vrot.lane.b32.xlu0 %v249, 47
        %v1435 = vpop.permute.xlu0 %1434
        %1436 = vrot.lane.b32.xlu0 %v250, 47
        %v1437 = vpop.permute.xlu0 %1436
        %1438 = vrot.lane.b32.xlu0 %v251, 47
        %v1439 = vpop.permute.xlu0 %1438
        %1440 = vrot.lane.b32.xlu0 %v252, 47
        %v1441 = vpop.permute.xlu0 %1440
        %1442 = vrot.lane.b32.xlu0 %v254, 47
        %v1443 = vpop.permute.xlu0 %1442
        %1444 = vrot.lane.b32.xlu0 %v255, 47
        %v1445 = vpop.permute.xlu0 %1444
        %1446 = vrot.lane.b32.xlu0 %v256, 47
        %v1447 = vpop.permute.xlu0 %1446
        %1448 = vrot.lane.b32.xlu0 %v257, 47
        %v1449 = vpop.permute.xlu0 %1448
        %1450 = vrot.lane.b32.xlu0 %v258, 47
        %v1451 = vpop.permute.xlu0 %1450
        %1452 = vrot.lane.b32.xlu0 %v259, 47
        %v1453 = vpop.permute.xlu0 %1452
        %1454 = vrot.lane.b32.xlu0 %v260, 47
        %v1455 = vpop.permute.xlu0 %1454
        %1456 = vrot.lane.b32.xlu0 %v261, 47
        %v1457 = vpop.permute.xlu0 %1456
        %1458 = vrot.lane.b32.xlu0 %v262, 47
        %v1459 = vpop.permute.xlu0 %1458
        %vm1460 = vcmask 384000
        %v1461 = vsel %vm1460, %v1425, %v1427
        %v1462 = vsel %vm1460, %v1427, %v1429
        %v1463 = vsel %vm1460, %v1429, %v1431
        %v1464 = vsel %vm1460, %v1431, %v1433
        %v1465 = vsel %vm1460, %v1433, %v1435
        %v1466 = vsel %vm1460, %v1435, %v1437
        %v1467 = vsel %vm1460, %v1437, %v1439
        %v1468 = vsel %vm1460, %v1439, %v1441
        %v1469 = vsel %vm1460, %v1443, %v1445
        %v1470 = vsel %vm1460, %v1445, %v1447
        %v1471 = vsel %vm1460, %v1447, %v1449
        %v1472 = vsel %vm1460, %v1449, %v1451
        %v1473 = vsel %vm1460, %v1451, %v1453
        %v1474 = vsel %vm1460, %v1453, %v1455
        %v1475 = vsel %vm1460, %v1455, %v1457
        %v1476 = vsel %vm1460, %v1457, %v1459
        %1477 = vrot.lane.b32.xlu0 %v244, 39
        %v1478 = vpop.permute.xlu0 %1477
        %1479 = vrot.lane.b32.xlu0 %v245, 39
        %v1480 = vpop.permute.xlu0 %1479
        %1481 = vrot.lane.b32.xlu0 %v246, 39
        %v1482 = vpop.permute.xlu0 %1481
        %1483 = vrot.lane.b32.xlu0 %v247, 39
        %v1484 = vpop.permute.xlu0 %1483
        %1485 = vrot.lane.b32.xlu0 %v248, 39
        %v1486 = vpop.permute.xlu0 %1485
        %1487 = vrot.lane.b32.xlu0 %v249, 39
        %v1488 = vpop.permute.xlu0 %1487
        %1489 = vrot.lane.b32.xlu0 %v250, 39
        %v1490 = vpop.permute.xlu0 %1489
        %1491 = vrot.lane.b32.xlu0 %v251, 39
        %v1492 = vpop.permute.xlu0 %1491
        %1493 = vrot.lane.b32.xlu0 %v252, 39
        %v1494 = vpop.permute.xlu0 %1493
        %1495 = vrot.lane.b32.xlu0 %v254, 39
        %v1496 = vpop.permute.xlu0 %1495
        %1497 = vrot.lane.b32.xlu0 %v255, 39
        %v1498 = vpop.permute.xlu0 %1497
        %1499 = vrot.lane.b32.xlu0 %v256, 39
        %v1500 = vpop.permute.xlu0 %1499
        %1501 = vrot.lane.b32.xlu0 %v257, 39
        %v1502 = vpop.permute.xlu0 %1501
        %1503 = vrot.lane.b32.xlu0 %v258, 39
        %v1504 = vpop.permute.xlu0 %1503
        %1505 = vrot.lane.b32.xlu0 %v259, 39
        %v1506 = vpop.permute.xlu0 %1505
        %1507 = vrot.lane.b32.xlu0 %v260, 39
        %v1508 = vpop.permute.xlu0 %1507
        %1509 = vrot.lane.b32.xlu0 %v261, 39
        %v1510 = vpop.permute.xlu0 %1509
        %1511 = vrot.lane.b32.xlu0 %v262, 39
        %v1512 = vpop.permute.xlu0 %1511
        %vm1513 = vcmask 318464
        %v1514 = vsel %vm1513, %v1478, %v1480
        %v1515 = vsel %vm1513, %v1480, %v1482
        %v1516 = vsel %vm1513, %v1482, %v1484
        %v1517 = vsel %vm1513, %v1484, %v1486
        %v1518 = vsel %vm1513, %v1486, %v1488
        %v1519 = vsel %vm1513, %v1488, %v1490
        %v1520 = vsel %vm1513, %v1490, %v1492
        %v1521 = vsel %vm1513, %v1492, %v1494
        %v1522 = vsel %vm1513, %v1496, %v1498
        %v1523 = vsel %vm1513, %v1498, %v1500
        %v1524 = vsel %vm1513, %v1500, %v1502
        %v1525 = vsel %vm1513, %v1502, %v1504
        %v1526 = vsel %vm1513, %v1504, %v1506
        %v1527 = vsel %vm1513, %v1506, %v1508
        %v1528 = vsel %vm1513, %v1508, %v1510
        %v1529 = vsel %vm1513, %v1510, %v1512
        %1530 = vrot.lane.b32.xlu0 %v244, 38
        %v1531 = vpop.permute.xlu0 %1530
        %1532 = vrot.lane.b32.xlu0 %v245, 38
        %v1533 = vpop.permute.xlu0 %1532
        %1534 = vrot.lane.b32.xlu0 %v246, 38
        %v1535 = vpop.permute.xlu0 %1534
        %1536 = vrot.lane.b32.xlu0 %v247, 38
        %v1537 = vpop.permute.xlu0 %1536
        %1538 = vrot.lane.b32.xlu0 %v248, 38
        %v1539 = vpop.permute.xlu0 %1538
        %1540 = vrot.lane.b32.xlu0 %v249, 38
        %v1541 = vpop.permute.xlu0 %1540
        %1542 = vrot.lane.b32.xlu0 %v250, 38
        %v1543 = vpop.permute.xlu0 %1542
        %1544 = vrot.lane.b32.xlu0 %v251, 38
        %v1545 = vpop.permute.xlu0 %1544
        %1546 = vrot.lane.b32.xlu0 %v252, 38
        %v1547 = vpop.permute.xlu0 %1546
        %1548 = vrot.lane.b32.xlu0 %v254, 38
        %v1549 = vpop.permute.xlu0 %1548
        %1550 = vrot.lane.b32.xlu0 %v255, 38
        %v1551 = vpop.permute.xlu0 %1550
        %1552 = vrot.lane.b32.xlu0 %v256, 38
        %v1553 = vpop.permute.xlu0 %1552
        %1554 = vrot.lane.b32.xlu0 %v257, 38
        %v1555 = vpop.permute.xlu0 %1554
        %1556 = vrot.lane.b32.xlu0 %v258, 38
        %v1557 = vpop.permute.xlu0 %1556
        %1558 = vrot.lane.b32.xlu0 %v259, 38
        %v1559 = vpop.permute.xlu0 %1558
        %1560 = vrot.lane.b32.xlu0 %v260, 38
        %v1561 = vpop.permute.xlu0 %1560
        %1562 = vrot.lane.b32.xlu0 %v261, 38
        %v1563 = vpop.permute.xlu0 %1562
        %1564 = vrot.lane.b32.xlu0 %v262, 38
        %v1565 = vpop.permute.xlu0 %1564
        %vm1566 = vcmask 310272
        %v1567 = vsel %vm1566, %v1531, %v1533
        %v1568 = vsel %vm1566, %v1533, %v1535
        %v1569 = vsel %vm1566, %v1535, %v1537
        %v1570 = vsel %vm1566, %v1537, %v1539
        %v1571 = vsel %vm1566, %v1539, %v1541
        %v1572 = vsel %vm1566, %v1541, %v1543
        %v1573 = vsel %vm1566, %v1543, %v1545
        %v1574 = vsel %vm1566, %v1545, %v1547
        %v1575 = vsel %vm1566, %v1549, %v1551
        %v1576 = vsel %vm1566, %v1551, %v1553
        %v1577 = vsel %vm1566, %v1553, %v1555
        %v1578 = vsel %vm1566, %v1555, %v1557
        %v1579 = vsel %vm1566, %v1557, %v1559
        %v1580 = vsel %vm1566, %v1559, %v1561
        %v1581 = vsel %vm1566, %v1561, %v1563
        %v1582 = vsel %vm1566, %v1563, %v1565
        %1583 = vrot.lane.b32.xlu0 %v244, 37
        %v1584 = vpop.permute.xlu0 %1583
        %1585 = vrot.lane.b32.xlu0 %v245, 37
        %v1586 = vpop.permute.xlu0 %1585
        %1587 = vrot.lane.b32.xlu0 %v246, 37
        %v1588 = vpop.permute.xlu0 %1587
        %1589 = vrot.lane.b32.xlu0 %v247, 37
        %v1590 = vpop.permute.xlu0 %1589
        %1591 = vrot.lane.b32.xlu0 %v248, 37
        %v1592 = vpop.permute.xlu0 %1591
        %1593 = vrot.lane.b32.xlu0 %v249, 37
        %v1594 = vpop.permute.xlu0 %1593
        %1595 = vrot.lane.b32.xlu0 %v250, 37
        %v1596 = vpop.permute.xlu0 %1595
        %1597 = vrot.lane.b32.xlu0 %v251, 37
        %v1598 = vpop.permute.xlu0 %1597
        %1599 = vrot.lane.b32.xlu0 %v252, 37
        %v1600 = vpop.permute.xlu0 %1599
        %1601 = vrot.lane.b32.xlu0 %v254, 37
        %v1602 = vpop.permute.xlu0 %1601
        %1603 = vrot.lane.b32.xlu0 %v255, 37
        %v1604 = vpop.permute.xlu0 %1603
        %1605 = vrot.lane.b32.xlu0 %v256, 37
        %v1606 = vpop.permute.xlu0 %1605
        %1607 = vrot.lane.b32.xlu0 %v257, 37
        %v1608 = vpop.permute.xlu0 %1607
        %1609 = vrot.lane.b32.xlu0 %v258, 37
        %v1610 = vpop.permute.xlu0 %1609
        %1611 = vrot.lane.b32.xlu0 %v259, 37
        %v1612 = vpop.permute.xlu0 %1611
        %1613 = vrot.lane.b32.xlu0 %v260, 37
        %v1614 = vpop.permute.xlu0 %1613
        %1615 = vrot.lane.b32.xlu0 %v261, 37
        %v1616 = vpop.permute.xlu0 %1615
        %1617 = vrot.lane.b32.xlu0 %v262, 37
        %v1618 = vpop.permute.xlu0 %1617
        %vm1619 = vcmask 302080
        %v1620 = vsel %vm1619, %v1584, %v1586
        %v1621 = vsel %vm1619, %v1586, %v1588
        %v1622 = vsel %vm1619, %v1588, %v1590
        %v1623 = vsel %vm1619, %v1590, %v1592
        %v1624 = vsel %vm1619, %v1592, %v1594
        %v1625 = vsel %vm1619, %v1594, %v1596
        %v1626 = vsel %vm1619, %v1596, %v1598
        %v1627 = vsel %vm1619, %v1598, %v1600
        %v1628 = vsel %vm1619, %v1602, %v1604
        %v1629 = vsel %vm1619, %v1604, %v1606
        %v1630 = vsel %vm1619, %v1606, %v1608
        %v1631 = vsel %vm1619, %v1608, %v1610
        %v1632 = vsel %vm1619, %v1610, %v1612
        %v1633 = vsel %vm1619, %v1612, %v1614
        %v1634 = vsel %vm1619, %v1614, %v1616
        %v1635 = vsel %vm1619, %v1616, %v1618
        %1636 = vrot.lane.b32.xlu0 %v244, 29
        %v1637 = vpop.permute.xlu0 %1636
        %1638 = vrot.lane.b32.xlu0 %v245, 29
        %v1639 = vpop.permute.xlu0 %1638
        %1640 = vrot.lane.b32.xlu0 %v246, 29
        %v1641 = vpop.permute.xlu0 %1640
        %1642 = vrot.lane.b32.xlu0 %v247, 29
        %v1643 = vpop.permute.xlu0 %1642
        %1644 = vrot.lane.b32.xlu0 %v248, 29
        %v1645 = vpop.permute.xlu0 %1644
        %1646 = vrot.lane.b32.xlu0 %v249, 29
        %v1647 = vpop.permute.xlu0 %1646
        %1648 = vrot.lane.b32.xlu0 %v250, 29
        %v1649 = vpop.permute.xlu0 %1648
        %1650 = vrot.lane.b32.xlu0 %v251, 29
        %v1651 = vpop.permute.xlu0 %1650
        %1652 = vrot.lane.b32.xlu0 %v252, 29
        %v1653 = vpop.permute.xlu0 %1652
        %1654 = vrot.lane.b32.xlu0 %v254, 29
        %v1655 = vpop.permute.xlu0 %1654
        %1656 = vrot.lane.b32.xlu0 %v255, 29
        %v1657 = vpop.permute.xlu0 %1656
        %1658 = vrot.lane.b32.xlu0 %v256, 29
        %v1659 = vpop.permute.xlu0 %1658
        %1660 = vrot.lane.b32.xlu0 %v257, 29
        %v1661 = vpop.permute.xlu0 %1660
        %1662 = vrot.lane.b32.xlu0 %v258, 29
        %v1663 = vpop.permute.xlu0 %1662
        %1664 = vrot.lane.b32.xlu0 %v259, 29
        %v1665 = vpop.permute.xlu0 %1664
        %1666 = vrot.lane.b32.xlu0 %v260, 29
        %v1667 = vpop.permute.xlu0 %1666
        %1668 = vrot.lane.b32.xlu0 %v261, 29
        %v1669 = vpop.permute.xlu0 %1668
        %1670 = vrot.lane.b32.xlu0 %v262, 29
        %v1671 = vpop.permute.xlu0 %1670
        %vm1672 = vcmask 236544
        %v1673 = vsel %vm1672, %v1637, %v1639
        %v1674 = vsel %vm1672, %v1639, %v1641
        %v1675 = vsel %vm1672, %v1641, %v1643
        %v1676 = vsel %vm1672, %v1643, %v1645
        %v1677 = vsel %vm1672, %v1645, %v1647
        %v1678 = vsel %vm1672, %v1647, %v1649
        %v1679 = vsel %vm1672, %v1649, %v1651
        %v1680 = vsel %vm1672, %v1651, %v1653
        %v1681 = vsel %vm1672, %v1655, %v1657
        %v1682 = vsel %vm1672, %v1657, %v1659
        %v1683 = vsel %vm1672, %v1659, %v1661
        %v1684 = vsel %vm1672, %v1661, %v1663
        %v1685 = vsel %vm1672, %v1663, %v1665
        %v1686 = vsel %vm1672, %v1665, %v1667
        %v1687 = vsel %vm1672, %v1667, %v1669
        %v1688 = vsel %vm1672, %v1669, %v1671
        %1689 = vrot.lane.b32.xlu0 %v252, 28
        %v1690 = vpop.permute.xlu0 %1689
        %1691 = vrot.lane.b32.xlu0 %v262, 28
        %v1692 = vpop.permute.xlu0 %1691
        %v1693 = vsel %vm869, %v850, %v1690
        %v1694 = vsel %vm869, %v868, %v1692
        %1695 = vrot.lane.b32.xlu0 %v252, 27
        %v1696 = vpop.permute.xlu0 %1695
        %1697 = vrot.lane.b32.xlu0 %v262, 27
        %v1698 = vpop.permute.xlu0 %1697
        %v1699 = vsel %vm938, %v919, %v1696
        %v1700 = vsel %vm938, %v937, %v1698
        %1701 = vrot.lane.b32.xlu0 %v243, 7
        %v1702 = vpop.permute.xlu0 %1701
        %1703 = vrot.lane.b32.xlu0 %v244, 7
        %v1704 = vpop.permute.xlu0 %1703
        %1705 = vrot.lane.b32.xlu0 %v245, 7
        %v1706 = vpop.permute.xlu0 %1705
        %1707 = vrot.lane.b32.xlu0 %v246, 7
        %v1708 = vpop.permute.xlu0 %1707
        %1709 = vrot.lane.b32.xlu0 %v247, 7
        %v1710 = vpop.permute.xlu0 %1709
        %1711 = vrot.lane.b32.xlu0 %v248, 7
        %v1712 = vpop.permute.xlu0 %1711
        %1713 = vrot.lane.b32.xlu0 %v249, 7
        %v1714 = vpop.permute.xlu0 %1713
        %1715 = vrot.lane.b32.xlu0 %v250, 7
        %v1716 = vpop.permute.xlu0 %1715
        %1717 = vrot.lane.b32.xlu0 %v251, 7
        %v1718 = vpop.permute.xlu0 %1717
        %1719 = vrot.lane.b32.xlu0 %v253, 7
        %v1720 = vpop.permute.xlu0 %1719
        %1721 = vrot.lane.b32.xlu0 %v254, 7
        %v1722 = vpop.permute.xlu0 %1721
        %1723 = vrot.lane.b32.xlu0 %v255, 7
        %v1724 = vpop.permute.xlu0 %1723
        %1725 = vrot.lane.b32.xlu0 %v256, 7
        %v1726 = vpop.permute.xlu0 %1725
        %1727 = vrot.lane.b32.xlu0 %v257, 7
        %v1728 = vpop.permute.xlu0 %1727
        %1729 = vrot.lane.b32.xlu0 %v258, 7
        %v1730 = vpop.permute.xlu0 %1729
        %1731 = vrot.lane.b32.xlu0 %v259, 7
        %v1732 = vpop.permute.xlu0 %1731
        %1733 = vrot.lane.b32.xlu0 %v260, 7
        %v1734 = vpop.permute.xlu0 %1733
        %1735 = vrot.lane.b32.xlu0 %v261, 7
        %v1736 = vpop.permute.xlu0 %1735
        %1737 = vrot.lane.b32.xlu0 %v318, 7
        %v1738 = vpop.permute.xlu0 %1737
        %1739 = vrot.lane.b32.xlu0 %v319, 7
        %v1740 = vpop.permute.xlu0 %1739
        %1741 = vrot.lane.b32.xlu0 %v320, 7
        %v1742 = vpop.permute.xlu0 %1741
        %1743 = vrot.lane.b32.xlu0 %v321, 7
        %v1744 = vpop.permute.xlu0 %1743
        %1745 = vrot.lane.b32.xlu0 %v322, 7
        %v1746 = vpop.permute.xlu0 %1745
        %1747 = vrot.lane.b32.xlu0 %v323, 7
        %v1748 = vpop.permute.xlu0 %1747
        %1749 = vrot.lane.b32.xlu0 %v324, 7
        %v1750 = vpop.permute.xlu0 %1749
        %1751 = vrot.lane.b32.xlu0 %v325, 7
        %v1752 = vpop.permute.xlu0 %1751
        %1753 = vrot.lane.b32.xlu0 %v298, 7
        %v1754 = vpop.permute.xlu0 %1753
        %1755 = vrot.lane.b32.xlu0 %v326, 7
        %v1756 = vpop.permute.xlu0 %1755
        %1757 = vrot.lane.b32.xlu0 %v327, 7
        %v1758 = vpop.permute.xlu0 %1757
        %1759 = vrot.lane.b32.xlu0 %v328, 7
        %v1760 = vpop.permute.xlu0 %1759
        %1761 = vrot.lane.b32.xlu0 %v329, 7
        %v1762 = vpop.permute.xlu0 %1761
        %1763 = vrot.lane.b32.xlu0 %v330, 7
        %v1764 = vpop.permute.xlu0 %1763
        %1765 = vrot.lane.b32.xlu0 %v331, 7
        %v1766 = vpop.permute.xlu0 %1765
        %1767 = vrot.lane.b32.xlu0 %v332, 7
        %v1768 = vpop.permute.xlu0 %1767
        %1769 = vrot.lane.b32.xlu0 %v333, 7
        %v1770 = vpop.permute.xlu0 %1769
        %1771 = vrot.lane.b32.xlu0 %v316, 7
        %v1772 = vpop.permute.xlu0 %1771
        %1773 = vrot.lane.b32.xlu0 %v1319, 7
        %v1774 = vpop.permute.xlu0 %1773
        %1775 = vrot.lane.b32.xlu0 %v1355, 7
        %v1776 = vpop.permute.xlu0 %1775
        %1777 = vrot.lane.b32.xlu0 %v1356, 7
        %v1778 = vpop.permute.xlu0 %1777
        %1779 = vrot.lane.b32.xlu0 %v1357, 7
        %v1780 = vpop.permute.xlu0 %1779
        %1781 = vrot.lane.b32.xlu0 %v1358, 7
        %v1782 = vpop.permute.xlu0 %1781
        %1783 = vrot.lane.b32.xlu0 %v1359, 7
        %v1784 = vpop.permute.xlu0 %1783
        %1785 = vrot.lane.b32.xlu0 %v1360, 7
        %v1786 = vpop.permute.xlu0 %1785
        %1787 = vrot.lane.b32.xlu0 %v1361, 7
        %v1788 = vpop.permute.xlu0 %1787
        %1789 = vrot.lane.b32.xlu0 %v1362, 7
        %v1790 = vpop.permute.xlu0 %1789
        %1791 = vrot.lane.b32.xlu0 %v1337, 7
        %v1792 = vpop.permute.xlu0 %1791
        %1793 = vrot.lane.b32.xlu0 %v1363, 7
        %v1794 = vpop.permute.xlu0 %1793
        %1795 = vrot.lane.b32.xlu0 %v1364, 7
        %v1796 = vpop.permute.xlu0 %1795
        %1797 = vrot.lane.b32.xlu0 %v1365, 7
        %v1798 = vpop.permute.xlu0 %1797
        %1799 = vrot.lane.b32.xlu0 %v1366, 7
        %v1800 = vpop.permute.xlu0 %1799
        %1801 = vrot.lane.b32.xlu0 %v1367, 7
        %v1802 = vpop.permute.xlu0 %1801
        %1803 = vrot.lane.b32.xlu0 %v1368, 7
        %v1804 = vpop.permute.xlu0 %1803
        %1805 = vrot.lane.b32.xlu0 %v1369, 7
        %v1806 = vpop.permute.xlu0 %1805
        %1807 = vrot.lane.b32.xlu0 %v1370, 7
        %v1808 = vpop.permute.xlu0 %1807
        %1809 = vrot.lane.b32.xlu0 %v1372, 7
        %v1810 = vpop.permute.xlu0 %1809
        %1811 = vrot.lane.b32.xlu0 %v1408, 7
        %v1812 = vpop.permute.xlu0 %1811
        %1813 = vrot.lane.b32.xlu0 %v1409, 7
        %v1814 = vpop.permute.xlu0 %1813
        %1815 = vrot.lane.b32.xlu0 %v1410, 7
        %v1816 = vpop.permute.xlu0 %1815
        %1817 = vrot.lane.b32.xlu0 %v1411, 7
        %v1818 = vpop.permute.xlu0 %1817
        %1819 = vrot.lane.b32.xlu0 %v1412, 7
        %v1820 = vpop.permute.xlu0 %1819
        %1821 = vrot.lane.b32.xlu0 %v1413, 7
        %v1822 = vpop.permute.xlu0 %1821
        %1823 = vrot.lane.b32.xlu0 %v1414, 7
        %v1824 = vpop.permute.xlu0 %1823
        %1825 = vrot.lane.b32.xlu0 %v1415, 7
        %v1826 = vpop.permute.xlu0 %1825
        %1827 = vrot.lane.b32.xlu0 %v1390, 7
        %v1828 = vpop.permute.xlu0 %1827
        %1829 = vrot.lane.b32.xlu0 %v1416, 7
        %v1830 = vpop.permute.xlu0 %1829
        %1831 = vrot.lane.b32.xlu0 %v1417, 7
        %v1832 = vpop.permute.xlu0 %1831
        %1833 = vrot.lane.b32.xlu0 %v1418, 7
        %v1834 = vpop.permute.xlu0 %1833
        %1835 = vrot.lane.b32.xlu0 %v1419, 7
        %v1836 = vpop.permute.xlu0 %1835
        %1837 = vrot.lane.b32.xlu0 %v1420, 7
        %v1838 = vpop.permute.xlu0 %1837
        %1839 = vrot.lane.b32.xlu0 %v1421, 7
        %v1840 = vpop.permute.xlu0 %1839
        %1841 = vrot.lane.b32.xlu0 %v1422, 7
        %v1842 = vpop.permute.xlu0 %1841
        %1843 = vrot.lane.b32.xlu0 %v1423, 7
        %v1844 = vpop.permute.xlu0 %1843
        %1845 = vrot.lane.b32.xlu0 %v1425, 7
        %v1846 = vpop.permute.xlu0 %1845
        %1847 = vrot.lane.b32.xlu0 %v1461, 7
        %v1848 = vpop.permute.xlu0 %1847
        %1849 = vrot.lane.b32.xlu0 %v1462, 7
        %v1850 = vpop.permute.xlu0 %1849
        %1851 = vrot.lane.b32.xlu0 %v1463, 7
        %v1852 = vpop.permute.xlu0 %1851
        %1853 = vrot.lane.b32.xlu0 %v1464, 7
        %v1854 = vpop.permute.xlu0 %1853
        %1855 = vrot.lane.b32.xlu0 %v1465, 7
        %v1856 = vpop.permute.xlu0 %1855
        %1857 = vrot.lane.b32.xlu0 %v1466, 7
        %v1858 = vpop.permute.xlu0 %1857
        %1859 = vrot.lane.b32.xlu0 %v1467, 7
        %v1860 = vpop.permute.xlu0 %1859
        %1861 = vrot.lane.b32.xlu0 %v1468, 7
        %v1862 = vpop.permute.xlu0 %1861
        %1863 = vrot.lane.b32.xlu0 %v1443, 7
        %v1864 = vpop.permute.xlu0 %1863
        %1865 = vrot.lane.b32.xlu0 %v1469, 7
        %v1866 = vpop.permute.xlu0 %1865
        %1867 = vrot.lane.b32.xlu0 %v1470, 7
        %v1868 = vpop.permute.xlu0 %1867
        %1869 = vrot.lane.b32.xlu0 %v1471, 7
        %v1870 = vpop.permute.xlu0 %1869
        %1871 = vrot.lane.b32.xlu0 %v1472, 7
        %v1872 = vpop.permute.xlu0 %1871
        %1873 = vrot.lane.b32.xlu0 %v1473, 7
        %v1874 = vpop.permute.xlu0 %1873
        %1875 = vrot.lane.b32.xlu0 %v1474, 7
        %v1876 = vpop.permute.xlu0 %1875
        %1877 = vrot.lane.b32.xlu0 %v1475, 7
        %v1878 = vpop.permute.xlu0 %1877
        %1879 = vrot.lane.b32.xlu0 %v1476, 7
        %v1880 = vpop.permute.xlu0 %1879
        %1881 = vrot.lane.b32.xlu0 %v1478, 7
        %v1882 = vpop.permute.xlu0 %1881
        %1883 = vrot.lane.b32.xlu0 %v1514, 7
        %v1884 = vpop.permute.xlu0 %1883
        %1885 = vrot.lane.b32.xlu0 %v1515, 7
        %v1886 = vpop.permute.xlu0 %1885
        %1887 = vrot.lane.b32.xlu0 %v1516, 7
        %v1888 = vpop.permute.xlu0 %1887
        %1889 = vrot.lane.b32.xlu0 %v1517, 7
        %v1890 = vpop.permute.xlu0 %1889
        %1891 = vrot.lane.b32.xlu0 %v1518, 7
        %v1892 = vpop.permute.xlu0 %1891
        %1893 = vrot.lane.b32.xlu0 %v1519, 7
        %v1894 = vpop.permute.xlu0 %1893
        %1895 = vrot.lane.b32.xlu0 %v1520, 7
        %v1896 = vpop.permute.xlu0 %1895
        %1897 = vrot.lane.b32.xlu0 %v1521, 7
        %v1898 = vpop.permute.xlu0 %1897
        %1899 = vrot.lane.b32.xlu0 %v1496, 7
        %v1900 = vpop.permute.xlu0 %1899
        %1901 = vrot.lane.b32.xlu0 %v1522, 7
        %v1902 = vpop.permute.xlu0 %1901
        %1903 = vrot.lane.b32.xlu0 %v1523, 7
        %v1904 = vpop.permute.xlu0 %1903
        %1905 = vrot.lane.b32.xlu0 %v1524, 7
        %v1906 = vpop.permute.xlu0 %1905
        %1907 = vrot.lane.b32.xlu0 %v1525, 7
        %v1908 = vpop.permute.xlu0 %1907
        %1909 = vrot.lane.b32.xlu0 %v1526, 7
        %v1910 = vpop.permute.xlu0 %1909
        %1911 = vrot.lane.b32.xlu0 %v1527, 7
        %v1912 = vpop.permute.xlu0 %1911
        %1913 = vrot.lane.b32.xlu0 %v1528, 7
        %v1914 = vpop.permute.xlu0 %1913
        %1915 = vrot.lane.b32.xlu0 %v1529, 7
        %v1916 = vpop.permute.xlu0 %1915
        %1917 = vrot.lane.b32.xlu0 %v1531, 7
        %v1918 = vpop.permute.xlu0 %1917
        %1919 = vrot.lane.b32.xlu0 %v1567, 7
        %v1920 = vpop.permute.xlu0 %1919
        %1921 = vrot.lane.b32.xlu0 %v1568, 7
        %v1922 = vpop.permute.xlu0 %1921
        %1923 = vrot.lane.b32.xlu0 %v1569, 7
        %v1924 = vpop.permute.xlu0 %1923
        %1925 = vrot.lane.b32.xlu0 %v1570, 7
        %v1926 = vpop.permute.xlu0 %1925
        %1927 = vrot.lane.b32.xlu0 %v1571, 7
        %v1928 = vpop.permute.xlu0 %1927
        %1929 = vrot.lane.b32.xlu0 %v1572, 7
        %v1930 = vpop.permute.xlu0 %1929
        %1931 = vrot.lane.b32.xlu0 %v1573, 7
        %v1932 = vpop.permute.xlu0 %1931
        %1933 = vrot.lane.b32.xlu0 %v1574, 7
        %v1934 = vpop.permute.xlu0 %1933
        %1935 = vrot.lane.b32.xlu0 %v1549, 7
        %v1936 = vpop.permute.xlu0 %1935
        %1937 = vrot.lane.b32.xlu0 %v1575, 7
        %v1938 = vpop.permute.xlu0 %1937
        %1939 = vrot.lane.b32.xlu0 %v1576, 7
        %v1940 = vpop.permute.xlu0 %1939
        %1941 = vrot.lane.b32.xlu0 %v1577, 7
        %v1942 = vpop.permute.xlu0 %1941
        %1943 = vrot.lane.b32.xlu0 %v1578, 7
        %v1944 = vpop.permute.xlu0 %1943
        %1945 = vrot.lane.b32.xlu0 %v1579, 7
        %v1946 = vpop.permute.xlu0 %1945
        %1947 = vrot.lane.b32.xlu0 %v1580, 7
        %v1948 = vpop.permute.xlu0 %1947
        %1949 = vrot.lane.b32.xlu0 %v1581, 7
        %v1950 = vpop.permute.xlu0 %1949
        %1951 = vrot.lane.b32.xlu0 %v1582, 7
        %v1952 = vpop.permute.xlu0 %1951
        %1953 = vrot.lane.b32.xlu0 %v1584, 7
        %v1954 = vpop.permute.xlu0 %1953
        %1955 = vrot.lane.b32.xlu0 %v1620, 7
        %v1956 = vpop.permute.xlu0 %1955
        %1957 = vrot.lane.b32.xlu0 %v1621, 7
        %v1958 = vpop.permute.xlu0 %1957
        %1959 = vrot.lane.b32.xlu0 %v1622, 7
        %v1960 = vpop.permute.xlu0 %1959
        %1961 = vrot.lane.b32.xlu0 %v1623, 7
        %v1962 = vpop.permute.xlu0 %1961
        %1963 = vrot.lane.b32.xlu0 %v1624, 7
        %v1964 = vpop.permute.xlu0 %1963
        %1965 = vrot.lane.b32.xlu0 %v1625, 7
        %v1966 = vpop.permute.xlu0 %1965
        %1967 = vrot.lane.b32.xlu0 %v1626, 7
        %v1968 = vpop.permute.xlu0 %1967
        %1969 = vrot.lane.b32.xlu0 %v1627, 7
        %v1970 = vpop.permute.xlu0 %1969
        %1971 = vrot.lane.b32.xlu0 %v1602, 7
        %v1972 = vpop.permute.xlu0 %1971
        %1973 = vrot.lane.b32.xlu0 %v1628, 7
        %v1974 = vpop.permute.xlu0 %1973
        %1975 = vrot.lane.b32.xlu0 %v1629, 7
        %v1976 = vpop.permute.xlu0 %1975
        %1977 = vrot.lane.b32.xlu0 %v1630, 7
        %v1978 = vpop.permute.xlu0 %1977
        %1979 = vrot.lane.b32.xlu0 %v1631, 7
        %v1980 = vpop.permute.xlu0 %1979
        %1981 = vrot.lane.b32.xlu0 %v1632, 7
        %v1982 = vpop.permute.xlu0 %1981
        %1983 = vrot.lane.b32.xlu0 %v1633, 7
        %v1984 = vpop.permute.xlu0 %1983
        %1985 = vrot.lane.b32.xlu0 %v1634, 7
        %v1986 = vpop.permute.xlu0 %1985
        %1987 = vrot.lane.b32.xlu0 %v1635, 7
        %v1988 = vpop.permute.xlu0 %1987
        %1989 = vrot.lane.b32.xlu0 %v1637, 7
        %v1990 = vpop.permute.xlu0 %1989
        %1991 = vrot.lane.b32.xlu0 %v1673, 7
        %v1992 = vpop.permute.xlu0 %1991
        %1993 = vrot.lane.b32.xlu0 %v1674, 7
        %v1994 = vpop.permute.xlu0 %1993
        %1995 = vrot.lane.b32.xlu0 %v1675, 7
        %v1996 = vpop.permute.xlu0 %1995
        %1997 = vrot.lane.b32.xlu0 %v1676, 7
        %v1998 = vpop.permute.xlu0 %1997
        %1999 = vrot.lane.b32.xlu0 %v1677, 7
        %v2000 = vpop.permute.xlu0 %1999
        %2001 = vrot.lane.b32.xlu0 %v1678, 7
        %v2002 = vpop.permute.xlu0 %2001
        %2003 = vrot.lane.b32.xlu0 %v1679, 7
        %v2004 = vpop.permute.xlu0 %2003
        %2005 = vrot.lane.b32.xlu0 %v1680, 7
        %v2006 = vpop.permute.xlu0 %2005
        %2007 = vrot.lane.b32.xlu0 %v1655, 7
        %v2008 = vpop.permute.xlu0 %2007
        %2009 = vrot.lane.b32.xlu0 %v1681, 7
        %v2010 = vpop.permute.xlu0 %2009
        %2011 = vrot.lane.b32.xlu0 %v1682, 7
        %v2012 = vpop.permute.xlu0 %2011
        %2013 = vrot.lane.b32.xlu0 %v1683, 7
        %v2014 = vpop.permute.xlu0 %2013
        %2015 = vrot.lane.b32.xlu0 %v1684, 7
        %v2016 = vpop.permute.xlu0 %2015
        %2017 = vrot.lane.b32.xlu0 %v1685, 7
        %v2018 = vpop.permute.xlu0 %2017
        %2019 = vrot.lane.b32.xlu0 %v1686, 7
        %v2020 = vpop.permute.xlu0 %2019
        %2021 = vrot.lane.b32.xlu0 %v1687, 7
        %v2022 = vpop.permute.xlu0 %2021
        %2023 = vrot.lane.b32.xlu0 %v1688, 7
        %v2024 = vpop.permute.xlu0 %2023
        %2025 = vrot.lane.b32.xlu0 %v836, 7
        %v2026 = vpop.permute.xlu0 %2025
        %2027 = vrot.lane.b32.xlu0 %v871, 7
        %v2028 = vpop.permute.xlu0 %2027
        %2029 = vrot.lane.b32.xlu0 %v872, 7
        %v2030 = vpop.permute.xlu0 %2029
        %2031 = vrot.lane.b32.xlu0 %v873, 7
        %v2032 = vpop.permute.xlu0 %2031
        %2033 = vrot.lane.b32.xlu0 %v874, 7
        %v2034 = vpop.permute.xlu0 %2033
        %2035 = vrot.lane.b32.xlu0 %v875, 7
        %v2036 = vpop.permute.xlu0 %2035
        %2037 = vrot.lane.b32.xlu0 %v876, 7
        %v2038 = vpop.permute.xlu0 %2037
        %2039 = vrot.lane.b32.xlu0 %v877, 7
        %v2040 = vpop.permute.xlu0 %2039
        %2041 = vrot.lane.b32.xlu0 %v1693, 7
        %v2042 = vpop.permute.xlu0 %2041
        %2043 = vrot.lane.b32.xlu0 %v854, 7
        %v2044 = vpop.permute.xlu0 %2043
        %2045 = vrot.lane.b32.xlu0 %v879, 7
        %v2046 = vpop.permute.xlu0 %2045
        %2047 = vrot.lane.b32.xlu0 %v880, 7
        %v2048 = vpop.permute.xlu0 %2047
        %2049 = vrot.lane.b32.xlu0 %v881, 7
        %v2050 = vpop.permute.xlu0 %2049
        %2051 = vrot.lane.b32.xlu0 %v882, 7
        %v2052 = vpop.permute.xlu0 %2051
        %2053 = vrot.lane.b32.xlu0 %v883, 7
        %v2054 = vpop.permute.xlu0 %2053
        %2055 = vrot.lane.b32.xlu0 %v884, 7
        %v2056 = vpop.permute.xlu0 %2055
        %2057 = vrot.lane.b32.xlu0 %v885, 7
        %v2058 = vpop.permute.xlu0 %2057
        %2059 = vrot.lane.b32.xlu0 %v1694, 7
        %v2060 = vpop.permute.xlu0 %2059
        %2061 = vrot.lane.b32.xlu0 %v905, 7
        %v2062 = vpop.permute.xlu0 %2061
        %2063 = vrot.lane.b32.xlu0 %v940, 7
        %v2064 = vpop.permute.xlu0 %2063
        %2065 = vrot.lane.b32.xlu0 %v941, 7
        %v2066 = vpop.permute.xlu0 %2065
        %2067 = vrot.lane.b32.xlu0 %v942, 7
        %v2068 = vpop.permute.xlu0 %2067
        %2069 = vrot.lane.b32.xlu0 %v943, 7
        %v2070 = vpop.permute.xlu0 %2069
        %2071 = vrot.lane.b32.xlu0 %v944, 7
        %v2072 = vpop.permute.xlu0 %2071
        %2073 = vrot.lane.b32.xlu0 %v945, 7
        %v2074 = vpop.permute.xlu0 %2073
        %2075 = vrot.lane.b32.xlu0 %v946, 7
        %v2076 = vpop.permute.xlu0 %2075
        %2077 = vrot.lane.b32.xlu0 %v1699, 7
        %v2078 = vpop.permute.xlu0 %2077
        %2079 = vrot.lane.b32.xlu0 %v923, 7
        %v2080 = vpop.permute.xlu0 %2079
        %2081 = vrot.lane.b32.xlu0 %v948, 7
        %v2082 = vpop.permute.xlu0 %2081
        %2083 = vrot.lane.b32.xlu0 %v949, 7
        %v2084 = vpop.permute.xlu0 %2083
        %2085 = vrot.lane.b32.xlu0 %v950, 7
        %v2086 = vpop.permute.xlu0 %2085
        %2087 = vrot.lane.b32.xlu0 %v951, 7
        %v2088 = vpop.permute.xlu0 %2087
        %2089 = vrot.lane.b32.xlu0 %v952, 7
        %v2090 = vpop.permute.xlu0 %2089
        %2091 = vrot.lane.b32.xlu0 %v953, 7
        %v2092 = vpop.permute.xlu0 %2091
        %2093 = vrot.lane.b32.xlu0 %v954, 7
        %v2094 = vpop.permute.xlu0 %2093
        %2095 = vrot.lane.b32.xlu0 %v1700, 7
        %v2096 = vpop.permute.xlu0 %2095
        %vm2097 = vcmask 56320
        %v2098 = vsel %vm2097, %v1702, %v1704
        %v2099 = vsel %vm2097, %v1704, %v1706
        %v2100 = vsel %vm2097, %v1706, %v1708
        %v2101 = vsel %vm2097, %v1708, %v1710
        %v2102 = vsel %vm2097, %v1710, %v1712
        %v2103 = vsel %vm2097, %v1712, %v1714
        %v2104 = vsel %vm2097, %v1714, %v1716
        %v2105 = vsel %vm2097, %v1716, %v1718
        %v2106 = vsel %vm2097, %v1720, %v1722
        %v2107 = vsel %vm2097, %v1722, %v1724
        %v2108 = vsel %vm2097, %v1724, %v1726
        %v2109 = vsel %vm2097, %v1726, %v1728
        %v2110 = vsel %vm2097, %v1728, %v1730
        %v2111 = vsel %vm2097, %v1730, %v1732
        %v2112 = vsel %vm2097, %v1732, %v1734
        %v2113 = vsel %vm2097, %v1734, %v1736
        %v2114 = vsel %vm2097, %v1738, %v1740
        %v2115 = vsel %vm2097, %v1740, %v1742
        %v2116 = vsel %vm2097, %v1742, %v1744
        %v2117 = vsel %vm2097, %v1744, %v1746
        %v2118 = vsel %vm2097, %v1746, %v1748
        %v2119 = vsel %vm2097, %v1748, %v1750
        %v2120 = vsel %vm2097, %v1750, %v1752
        %v2121 = vsel %vm2097, %v1752, %v1754
        %v2122 = vsel %vm2097, %v1756, %v1758
        %v2123 = vsel %vm2097, %v1758, %v1760
        %v2124 = vsel %vm2097, %v1760, %v1762
        %v2125 = vsel %vm2097, %v1762, %v1764
        %v2126 = vsel %vm2097, %v1764, %v1766
        %v2127 = vsel %vm2097, %v1766, %v1768
        %v2128 = vsel %vm2097, %v1768, %v1770
        %v2129 = vsel %vm2097, %v1770, %v1772
        %v2130 = vsel %vm2097, %v1774, %v1776
        %v2131 = vsel %vm2097, %v1776, %v1778
        %v2132 = vsel %vm2097, %v1778, %v1780
        %v2133 = vsel %vm2097, %v1780, %v1782
        %v2134 = vsel %vm2097, %v1782, %v1784
        %v2135 = vsel %vm2097, %v1784, %v1786
        %v2136 = vsel %vm2097, %v1786, %v1788
        %v2137 = vsel %vm2097, %v1788, %v1790
        %v2138 = vsel %vm2097, %v1792, %v1794
        %v2139 = vsel %vm2097, %v1794, %v1796
        %v2140 = vsel %vm2097, %v1796, %v1798
        %v2141 = vsel %vm2097, %v1798, %v1800
        %v2142 = vsel %vm2097, %v1800, %v1802
        %v2143 = vsel %vm2097, %v1802, %v1804
        %v2144 = vsel %vm2097, %v1804, %v1806
        %v2145 = vsel %vm2097, %v1806, %v1808
        %v2146 = vsel %vm2097, %v1810, %v1812
        %v2147 = vsel %vm2097, %v1812, %v1814
        %v2148 = vsel %vm2097, %v1814, %v1816
        %v2149 = vsel %vm2097, %v1816, %v1818
        %v2150 = vsel %vm2097, %v1818, %v1820
        %v2151 = vsel %vm2097, %v1820, %v1822
        %v2152 = vsel %vm2097, %v1822, %v1824
        %v2153 = vsel %vm2097, %v1824, %v1826
        %v2154 = vsel %vm2097, %v1828, %v1830
        %v2155 = vsel %vm2097, %v1830, %v1832
        %v2156 = vsel %vm2097, %v1832, %v1834
        %v2157 = vsel %vm2097, %v1834, %v1836
        %v2158 = vsel %vm2097, %v1836, %v1838
        %v2159 = vsel %vm2097, %v1838, %v1840
        %v2160 = vsel %vm2097, %v1840, %v1842
        %v2161 = vsel %vm2097, %v1842, %v1844
        %v2162 = vsel %vm2097, %v1846, %v1848
        %v2163 = vsel %vm2097, %v1848, %v1850
        %v2164 = vsel %vm2097, %v1850, %v1852
        %v2165 = vsel %vm2097, %v1852, %v1854
        %v2166 = vsel %vm2097, %v1854, %v1856
        %v2167 = vsel %vm2097, %v1856, %v1858
        %v2168 = vsel %vm2097, %v1858, %v1860
        %v2169 = vsel %vm2097, %v1860, %v1862
        %v2170 = vsel %vm2097, %v1864, %v1866
        %v2171 = vsel %vm2097, %v1866, %v1868
        %v2172 = vsel %vm2097, %v1868, %v1870
        %v2173 = vsel %vm2097, %v1870, %v1872
        %v2174 = vsel %vm2097, %v1872, %v1874
        %v2175 = vsel %vm2097, %v1874, %v1876
        %v2176 = vsel %vm2097, %v1876, %v1878
        %v2177 = vsel %vm2097, %v1878, %v1880
        %v2178 = vsel %vm2097, %v1882, %v1884
        %v2179 = vsel %vm2097, %v1884, %v1886
        %v2180 = vsel %vm2097, %v1886, %v1888
        %v2181 = vsel %vm2097, %v1888, %v1890
        %v2182 = vsel %vm2097, %v1890, %v1892
        %v2183 = vsel %vm2097, %v1892, %v1894
        %v2184 = vsel %vm2097, %v1894, %v1896
        %v2185 = vsel %vm2097, %v1896, %v1898
        %v2186 = vsel %vm2097, %v1900, %v1902
        %v2187 = vsel %vm2097, %v1902, %v1904
        %v2188 = vsel %vm2097, %v1904, %v1906
        %v2189 = vsel %vm2097, %v1906, %v1908
        %v2190 = vsel %vm2097, %v1908, %v1910
        %v2191 = vsel %vm2097, %v1910, %v1912
        %v2192 = vsel %vm2097, %v1912, %v1914
        %v2193 = vsel %vm2097, %v1914, %v1916
        %v2194 = vsel %vm2097, %v1918, %v1920
        %v2195 = vsel %vm2097, %v1920, %v1922
        %v2196 = vsel %vm2097, %v1922, %v1924
        %v2197 = vsel %vm2097, %v1924, %v1926
        %v2198 = vsel %vm2097, %v1926, %v1928
        %v2199 = vsel %vm2097, %v1928, %v1930
        %v2200 = vsel %vm2097, %v1930, %v1932
        %v2201 = vsel %vm2097, %v1932, %v1934
        %v2202 = vsel %vm2097, %v1936, %v1938
        %v2203 = vsel %vm2097, %v1938, %v1940
        %v2204 = vsel %vm2097, %v1940, %v1942
        %v2205 = vsel %vm2097, %v1942, %v1944
        %v2206 = vsel %vm2097, %v1944, %v1946
        %v2207 = vsel %vm2097, %v1946, %v1948
        %v2208 = vsel %vm2097, %v1948, %v1950
        %v2209 = vsel %vm2097, %v1950, %v1952
        %v2210 = vsel %vm2097, %v1954, %v1956
        %v2211 = vsel %vm2097, %v1956, %v1958
        %v2212 = vsel %vm2097, %v1958, %v1960
        %v2213 = vsel %vm2097, %v1960, %v1962
        %v2214 = vsel %vm2097, %v1962, %v1964
        %v2215 = vsel %vm2097, %v1964, %v1966
        %v2216 = vsel %vm2097, %v1966, %v1968
        %v2217 = vsel %vm2097, %v1968, %v1970
        %v2218 = vsel %vm2097, %v1972, %v1974
        %v2219 = vsel %vm2097, %v1974, %v1976
        %v2220 = vsel %vm2097, %v1976, %v1978
        %v2221 = vsel %vm2097, %v1978, %v1980
        %v2222 = vsel %vm2097, %v1980, %v1982
        %v2223 = vsel %vm2097, %v1982, %v1984
        %v2224 = vsel %vm2097, %v1984, %v1986
        %v2225 = vsel %vm2097, %v1986, %v1988
        %v2226 = vsel %vm2097, %v1990, %v1992
        %v2227 = vsel %vm2097, %v1992, %v1994
        %v2228 = vsel %vm2097, %v1994, %v1996
        %v2229 = vsel %vm2097, %v1996, %v1998
        %v2230 = vsel %vm2097, %v1998, %v2000
        %v2231 = vsel %vm2097, %v2000, %v2002
        %v2232 = vsel %vm2097, %v2002, %v2004
        %v2233 = vsel %vm2097, %v2004, %v2006
        %v2234 = vsel %vm2097, %v2008, %v2010
        %v2235 = vsel %vm2097, %v2010, %v2012
        %v2236 = vsel %vm2097, %v2012, %v2014
        %v2237 = vsel %vm2097, %v2014, %v2016
        %v2238 = vsel %vm2097, %v2016, %v2018
        %v2239 = vsel %vm2097, %v2018, %v2020
        %v2240 = vsel %vm2097, %v2020, %v2022
        %v2241 = vsel %vm2097, %v2022, %v2024
        %v2242 = vsel %vm2097, %v2026, %v2028
        %v2243 = vsel %vm2097, %v2028, %v2030
        %v2244 = vsel %vm2097, %v2030, %v2032
        %v2245 = vsel %vm2097, %v2032, %v2034
        %v2246 = vsel %vm2097, %v2034, %v2036
        %v2247 = vsel %vm2097, %v2036, %v2038
        %v2248 = vsel %vm2097, %v2038, %v2040
        %v2249 = vsel %vm2097, %v2040, %v2042
        %v2250 = vsel %vm2097, %v2044, %v2046
        %v2251 = vsel %vm2097, %v2046, %v2048
        %v2252 = vsel %vm2097, %v2048, %v2050
        %v2253 = vsel %vm2097, %v2050, %v2052
        %v2254 = vsel %vm2097, %v2052, %v2054
        %v2255 = vsel %vm2097, %v2054, %v2056
        %v2256 = vsel %vm2097, %v2056, %v2058
        %v2257 = vsel %vm2097, %v2058, %v2060
        %v2258 = vsel %vm2097, %v2062, %v2064
        %v2259 = vsel %vm2097, %v2064, %v2066
        %v2260 = vsel %vm2097, %v2066, %v2068
        %v2261 = vsel %vm2097, %v2068, %v2070
        %v2262 = vsel %vm2097, %v2070, %v2072
        %v2263 = vsel %vm2097, %v2072, %v2074
        %v2264 = vsel %vm2097, %v2074, %v2076
        %v2265 = vsel %vm2097, %v2076, %v2078
        %v2266 = vsel %vm2097, %v2080, %v2082
        %v2267 = vsel %vm2097, %v2082, %v2084
        %v2268 = vsel %vm2097, %v2084, %v2086
        %v2269 = vsel %vm2097, %v2086, %v2088
        %v2270 = vsel %vm2097, %v2088, %v2090
        %v2271 = vsel %vm2097, %v2090, %v2092
        %v2272 = vsel %vm2097, %v2092, %v2094
        %v2273 = vsel %vm2097, %v2094, %v2096
        %v2450 = vld [vmem:[%s1] sm:$0xff]
        %v2451 = vld [vmem:[%s1 + $0x8] sm:$0xff]
        %v2452 = vld [vmem:[%s1 + $0x10] sm:$0xff]
        %v2453 = vld [vmem:[%s1 + $0x18] sm:$0xff]
        %v2454 = vld [vmem:[%s1 + $0x20] sm:$0xff]
        %v2455 = vld [vmem:[%s1 + $0x28] sm:$0xff]
        %v2456 = vld [vmem:[%s1 + $0x30] sm:$0xff]
        %v2457 = vld [vmem:[%s1 + $0x38] sm:$0xff]
        %v2458 = vld [vmem:[%s2] sm:$0xff]
        %v2459 = vld [vmem:[%s2 + $0x8] sm:$0xff]
        %2461 = vset.pattern.permute.xlu0 0
        %2462 = vperm.xlu0 %2461, %v2458
        %v2463 = vpop.permute.xlu0 %2462
        %2466 = vset.pattern.permute.xlu0 0
        %2467 = vperm.xlu0 %2466, %v2459
        %v2468 = vpop.permute.xlu0 %2467
        %v2471 = vsel %vm1407, %v2453, 0
        %v2474 = vsel %vm1407, %v2457, 0
        %2476 = vmatprep.subr.mxu0 %v244
        %2477 = vmatpush1.msra.mxu0 %v243
        %2478 = vmatprep.subr.mxu0 %v254
        %2479 = vmatpush1.msra.mxu0 %v253
        %2480 = vmatprep.subr.mxu0 %v319
        %2481 = vmatpush1.msra.mxu0 %v318
        %2482 = vmatprep.subr.mxu0 %v327
        %2483 = vmatpush1.msra.mxu0 %v326
        %2484 = vmatprep.subr.mxu0 %v388
        %2485 = vmatpush1.msra.mxu0 %v387
        %2486 = vmatprep.subr.mxu0 %v396
        %2487 = vmatpush1.msra.mxu0 %v395
        %2488 = vmatprep.subr.mxu0 %v457
        %2489 = vmatpush1.msra.mxu0 %v456
        %2490 = vmatprep.subr.mxu0 %v465
        %2491 = vmatpush1.msra.mxu0 %v464
        %2492 = vmatprep.subr.mxu0 %v526
        %2493 = vmatpush1.msra.mxu0 %v525
        %2494 = vmatprep.subr.mxu0 %v534
        %2495 = vmatpush1.msra.mxu0 %v533
        %2496 = vmatprep.subr.mxu0 %v595
        %2497 = vmatpush1.msra.mxu0 %v594
        %2498 = vmatprep.subr.mxu0 %v603
        %2499 = vmatpush1.msra.mxu0 %v602
        %2500 = vmatprep.subr.mxu0 %v664
        %2501 = vmatpush1.msra.mxu0 %v663
        %2502 = vmatprep.subr.mxu0 %v672
        %2503 = vmatpush1.msra.mxu0 %v671
        %2504 = vmatprep.subr.mxu0 %v733
        %2505 = vmatpush1.msra.mxu0 %v732
        %2506 = vmatprep.subr.mxu0 %v741
        %2507 = vmatpush1.msra.mxu0 %v740
        %2508 = vmatprep.subr.mxu0 %v802
        %2509 = vmatpush1.msra.mxu0 %v801
        %2510 = vmatprep.subr.mxu0 %v810
        %2511 = vmatpush1.msra.mxu0 %v809
        %2512 = vmatprep.subr.mxu0 %v871
        %2513 = vmatpush1.msra.mxu0 %v870
        %2514 = vmatprep.subr.mxu0 %v879
        %2515 = vmatpush1.msra.mxu0 %v878
        %2516 = vmatprep.subr.mxu0 %v940
        %2517 = vmatpush1.msra.mxu0 %v939
        %2518 = vmatprep.subr.mxu0 %v948
        %2519 = vmatpush1.msra.mxu0 %v947
        %2520 = vmatprep.subr.mxu0 %v1009
        %2521 = vmatpush1.msra.mxu0 %v1008
        %2522 = vmatprep.subr.mxu0 %v1017
        %2523 = vmatpush1.msra.mxu0 %v1016
        %2524 = vmatprep.subr.mxu0 %v1078
        %2525 = vmatpush1.msra.mxu0 %v1077
        %2526 = vmatprep.subr.mxu0 %v1086
        %2527 = vmatpush1.msra.mxu0 %v1085
        %2528 = vmatprep.subr.mxu0 %v1147
        %2529 = vmatpush1.msra.mxu0 %v1146
        %2530 = vmatprep.subr.mxu0 %v1155
        %2531 = vmatpush1.msra.mxu0 %v1154
        %2532 = vmatprep.subr.mxu0 %v1216
        %2533 = vmatpush1.msra.mxu0 %v1215
        %2534 = vmatprep.subr.mxu0 %v1224
        %2535 = vmatpush1.msra.mxu0 %v1223
        %2536 = vmatprep.subr.mxu0 %v1285
        %2537 = vmatpush1.msra.mxu0 %v1284
        %2538 = vmatprep.subr.mxu0 %v1293
        %2539 = vmatpush1.msra.mxu0 %v1292
        %2540 = vmatprep.mubr.f32.mxu0 %v2451
        %2541 = vmatmul.mubr.f32.gmra.mrb[0].mxu0 %v2450
        %v2542 = vpop.f32.mrb[0].mxu0
        %v2543 = vadd.f32 %v2463, %v2542
        %v2544 = vpop.f32.mrb[0].mxu0
        %v2545 = vadd.f32 %v2463, %v2544
        %2546 = vmatprep.mubr.f32.mxu0 %v2455
        %2547 = vmatmul.mubr.f32.gmra.mrb[0].mxu0 %v2454
        %v2548 = vpop.f32.mrb[0].mxu0
        %v2549 = vadd.f32 %v2468, %v2548
        %v2550 = vpop.f32.mrb[0].mxu0
        %v2551 = vadd.f32 %v2468, %v2550
        %2552 = vdwg.mxu0
        %2553 = vmatprep.subr.mxu0 %v2099
        %2554 = vmatpush1.msra.mxu0 %v2098
        %2555 = vmatprep.subr.mxu0 %v2107
        %2556 = vmatpush1.msra.mxu0 %v2106
        %2557 = vmatprep.subr.mxu0 %v2115
        %2558 = vmatpush1.msra.mxu0 %v2114
        %2559 = vmatprep.subr.mxu0 %v2123
        %2560 = vmatpush1.msra.mxu0 %v2122
        %2561 = vmatprep.subr.mxu0 %v2131
        %2562 = vmatpush1.msra.mxu0 %v2130
        %2563 = vmatprep.subr.mxu0 %v2139
        %2564 = vmatpush1.msra.mxu0 %v2138
        %2565 = vmatprep.subr.mxu0 %v2147
        %2566 = vmatpush1.msra.mxu0 %v2146
        %2567 = vmatprep.subr.mxu0 %v2155
        %2568 = vmatpush1.msra.mxu0 %v2154
        %2569 = vmatprep.subr.mxu0 %v2163
        %2570 = vmatpush1.msra.mxu0 %v2162
        %2571 = vmatprep.subr.mxu0 %v2171
        %2572 = vmatpush1.msra.mxu0 %v2170
        %2573 = vmatprep.subr.mxu0 %v2179
        %2574 = vmatpush1.msra.mxu0 %v2178
        %2575 = vmatprep.subr.mxu0 %v2187
        %2576 = vmatpush1.msra.mxu0 %v2186
        %2577 = vmatprep.subr.mxu0 %v2195
        %2578 = vmatpush1.msra.mxu0 %v2194
        %2579 = vmatprep.subr.mxu0 %v2203
        %2580 = vmatpush1.msra.mxu0 %v2202
        %2581 = vmatprep.subr.mxu0 %v2211
        %2582 = vmatpush1.msra.mxu0 %v2210
        %2583 = vmatprep.subr.mxu0 %v2219
        %2584 = vmatpush1.msra.mxu0 %v2218
        %2585 = vmatprep.subr.mxu0 %v2227
        %2586 = vmatpush1.msra.mxu0 %v2226
        %2587 = vmatprep.subr.mxu0 %v2235
        %2588 = vmatpush1.msra.mxu0 %v2234
        %2589 = vmatprep.subr.mxu0 %v2243
        %2590 = vmatpush1.msra.mxu0 %v2242
        %2591 = vmatprep.subr.mxu0 %v2251
        %2592 = vmatpush1.msra.mxu0 %v2250
        %2593 = vmatprep.subr.mxu0 %v2259
        %2594 = vmatpush1.msra.mxu0 %v2258
        %2595 = vmatprep.subr.mxu0 %v2267
        %2596 = vmatpush1.msra.mxu0 %v2266
        %2597 = vmatprep.subr.mxu0 0.0
        %2598 = vmatpush1.msra.mxu0 0.0
        %2599 = vmatprep.subr.mxu0 0.0
        %2600 = vmatpush1.msra.mxu0 0.0
        %2601 = vmatprep.subr.mxu0 0.0
        %2602 = vmatpush1.msra.mxu0 0.0
        %2603 = vmatprep.subr.mxu0 0.0
        %2604 = vmatpush1.msra.mxu0 0.0
        %2605 = vmatprep.subr.mxu0 0.0
        %2606 = vmatpush1.msra.mxu0 0.0
        %2607 = vmatprep.subr.mxu0 0.0
        %2608 = vmatpush1.msra.mxu0 0.0
        %2609 = vmatprep.subr.mxu0 0.0
        %2610 = vmatpush1.msra.mxu0 0.0
        %2611 = vmatprep.subr.mxu0 0.0
        %2612 = vmatpush1.msra.mxu0 0.0
        %2613 = vmatprep.subr.mxu0 0.0
        %2614 = vmatpush1.msra.mxu0 0.0
        %2615 = vmatprep.subr.mxu0 0.0
        %2616 = vmatpush1.msra.mxu0 0.0
        %2617 = vmatprep.mubr.f32.mxu0 %v2471
        %2618 = vmatmul.mubr.f32.gmra.mrb[0].mxu0 %v2452
        %v2619 = vpop.f32.mrb[0].mxu0
        %v2620 = vadd.f32 %v2543, %v2619
        %v2621 = vpop.f32.mrb[0].mxu0
        %v2622 = vadd.f32 %v2545, %v2621
        %2623 = vmatprep.mubr.f32.mxu0 %v2474
        %2624 = vmatmul.mubr.f32.gmra.mrb[0].mxu0 %v2456
        %v2625 = vpop.f32.mrb[0].mxu0
        %v2626 = vadd.f32 %v2549, %v2625
        %v2627 = vpop.f32.mrb[0].mxu0
        %v2628 = vadd.f32 %v2551, %v2627
        %2629 = vdwg.mxu0
        %2630 = vmatprep.subr.mxu0 %v246
        %2631 = vmatpush1.msra.mxu0 %v245
        %2632 = vmatprep.subr.mxu0 %v256
        %2633 = vmatpush1.msra.mxu0 %v255
        %2634 = vmatprep.subr.mxu0 %v321
        %2635 = vmatpush1.msra.mxu0 %v320
        %2636 = vmatprep.subr.mxu0 %v329
        %2637 = vmatpush1.msra.mxu0 %v328
        %2638 = vmatprep.subr.mxu0 %v390
        %2639 = vmatpush1.msra.mxu0 %v389
        %2640 = vmatprep.subr.mxu0 %v398
        %2641 = vmatpush1.msra.mxu0 %v397
        %2642 = vmatprep.subr.mxu0 %v459
        %2643 = vmatpush1.msra.mxu0 %v458
        %2644 = vmatprep.subr.mxu0 %v467
        %2645 = vmatpush1.msra.mxu0 %v466
        %2646 = vmatprep.subr.mxu0 %v528
        %2647 = vmatpush1.msra.mxu0 %v527
        %2648 = vmatprep.subr.mxu0 %v536
        %2649 = vmatpush1.msra.mxu0 %v535
        %2650 = vmatprep.subr.mxu0 %v597
        %2651 = vmatpush1.msra.mxu0 %v596
        %2652 = vmatprep.subr.mxu0 %v605
        %2653 = vmatpush1.msra.mxu0 %v604
        %2654 = vmatprep.subr.mxu0 %v666
        %2655 = vmatpush1.msra.mxu0 %v665
        %2656 = vmatprep.subr.mxu0 %v674
        %2657 = vmatpush1.msra.mxu0 %v673
        %2658 = vmatprep.subr.mxu0 %v735
        %2659 = vmatpush1.msra.mxu0 %v734
        %2660 = vmatprep.subr.mxu0 %v743
        %2661 = vmatpush1.msra.mxu0 %v742
        %2662 = vmatprep.subr.mxu0 %v804
        %2663 = vmatpush1.msra.mxu0 %v803
        %2664 = vmatprep.subr.mxu0 %v812
        %2665 = vmatpush1.msra.mxu0 %v811
        %2666 = vmatprep.subr.mxu0 %v873
        %2667 = vmatpush1.msra.mxu0 %v872
        %2668 = vmatprep.subr.mxu0 %v881
        %2669 = vmatpush1.msra.mxu0 %v880
        %2670 = vmatprep.subr.mxu0 %v942
        %2671 = vmatpush1.msra.mxu0 %v941
        %2672 = vmatprep.subr.mxu0 %v950
        %2673 = vmatpush1.msra.mxu0 %v949
        %2674 = vmatprep.subr.mxu0 %v1011
        %2675 = vmatpush1.msra.mxu0 %v1010
        %2676 = vmatprep.subr.mxu0 %v1019
        %2677 = vmatpush1.msra.mxu0 %v1018
        %2678 = vmatprep.subr.mxu0 %v1080
        %2679 = vmatpush1.msra.mxu0 %v1079
        %2680 = vmatprep.subr.mxu0 %v1088
        %2681 = vmatpush1.msra.mxu0 %v1087
        %2682 = vmatprep.subr.mxu0 %v1149
        %2683 = vmatpush1.msra.mxu0 %v1148
        %2684 = vmatprep.subr.mxu0 %v1157
        %2685 = vmatpush1.msra.mxu0 %v1156
        %2686 = vmatprep.subr.mxu0 %v1218
        %2687 = vmatpush1.msra.mxu0 %v1217
        %2688 = vmatprep.subr.mxu0 %v1226
        %2689 = vmatpush1.msra.mxu0 %v1225
        %2690 = vmatprep.subr.mxu0 %v1287
        %2691 = vmatpush1.msra.mxu0 %v1286
        %2692 = vmatprep.subr.mxu0 %v1295
        %2693 = vmatpush1.msra.mxu0 %v1294
        %2694 = vmatprep.mubr.f32.mxu0 %v2451
        %2695 = vmatmul.mubr.f32.gmra.mrb[0].mxu0 %v2450
        %v2696 = vpop.f32.mrb[0].mxu0
        %v2697 = vadd.f32 %v2463, %v2696
        %v2698 = vpop.f32.mrb[0].mxu0
        %v2699 = vadd.f32 %v2463, %v2698
        %2700 = vmatprep.mubr.f32.mxu0 %v2455
        %2701 = vmatmul.mubr.f32.gmra.mrb[0].mxu0 %v2454
        %v2702 = vpop.f32.mrb[0].mxu0
        %v2703 = vadd.f32 %v2468, %v2702
        %v2704 = vpop.f32.mrb[0].mxu0
        %v2705 = vadd.f32 %v2468, %v2704
        %2706 = vdwg.mxu0
        %2707 = vmatprep.subr.mxu0 %v2101
        %2708 = vmatpush1.msra.mxu0 %v2100
        %2709 = vmatprep.subr.mxu0 %v2109
        %2710 = vmatpush1.msra.mxu0 %v2108
        %2711 = vmatprep.subr.mxu0 %v2117
        %2712 = vmatpush1.msra.mxu0 %v2116
        %2713 = vmatprep.subr.mxu0 %v2125
        %2714 = vmatpush1.msra.mxu0 %v2124
        %2715 = vmatprep.subr.mxu0 %v2133
        %2716 = vmatpush1.msra.mxu0 %v2132
        %2717 = vmatprep.subr.mxu0 %v2141
        %2718 = vmatpush1.msra.mxu0 %v2140
        %2719 = vmatprep.subr.mxu0 %v2149
        %2720 = vmatpush1.msra.mxu0 %v2148
        %2721 = vmatprep.subr.mxu0 %v2157
        %2722 = vmatpush1.msra.mxu0 %v2156
        %2723 = vmatprep.subr.mxu0 %v2165
        %2724 = vmatpush1.msra.mxu0 %v2164
        %2725 = vmatprep.subr.mxu0 %v2173
        %2726 = vmatpush1.msra.mxu0 %v2172
        %2727 = vmatprep.subr.mxu0 %v2181
        %2728 = vmatpush1.msra.mxu0 %v2180
        %2729 = vmatprep.subr.mxu0 %v2189
        %2730 = vmatpush1.msra.mxu0 %v2188
        %2731 = vmatprep.subr.mxu0 %v2197
        %2732 = vmatpush1.msra.mxu0 %v2196
        %2733 = vmatprep.subr.mxu0 %v2205
        %2734 = vmatpush1.msra.mxu0 %v2204
        %2735 = vmatprep.subr.mxu0 %v2213
        %2736 = vmatpush1.msra.mxu0 %v2212
        %2737 = vmatprep.subr.mxu0 %v2221
        %2738 = vmatpush1.msra.mxu0 %v2220
        %2739 = vmatprep.subr.mxu0 %v2229
        %2740 = vmatpush1.msra.mxu0 %v2228
        %2741 = vmatprep.subr.mxu0 %v2237
        %2742 = vmatpush1.msra.mxu0 %v2236
        %2743 = vmatprep.subr.mxu0 %v2245
        %2744 = vmatpush1.msra.mxu0 %v2244
        %2745 = vmatprep.subr.mxu0 %v2253
        %2746 = vmatpush1.msra.mxu0 %v2252
        %2747 = vmatprep.subr.mxu0 %v2261
        %2748 = vmatpush1.msra.mxu0 %v2260
        %2749 = vmatprep.subr.mxu0 %v2269
        %2750 = vmatpush1.msra.mxu0 %v2268
        %2751 = vmatprep.subr.mxu0 0.0
        %2752 = vmatpush1.msra.mxu0 0.0
        %2753 = vmatprep.subr.mxu0 0.0
        %2754 = vmatpush1.msra.mxu0 0.0
        %2755 = vmatprep.subr.mxu0 0.0
        %2756 = vmatpush1.msra.mxu0 0.0
        %2757 = vmatprep.subr.mxu0 0.0
        %2758 = vmatpush1.msra.mxu0 0.0
        %2759 = vmatprep.subr.mxu0 0.0
        %2760 = vmatpush1.msra.mxu0 0.0
        %2761 = vmatprep.subr.mxu0 0.0
        %2762 = vmatpush1.msra.mxu0 0.0
        %2763 = vmatprep.subr.mxu0 0.0
        %2764 = vmatpush1.msra.mxu0 0.0
        %2765 = vmatprep.subr.mxu0 0.0
        %2766 = vmatpush1.msra.mxu0 0.0
        %2767 = vmatprep.subr.mxu0 0.0
        %2768 = vmatpush1.msra.mxu0 0.0
        %2769 = vmatprep.subr.mxu0 0.0
        %2770 = vmatpush1.msra.mxu0 0.0
        %2771 = vmatprep.mubr.f32.mxu0 %v2471
        %2772 = vmatmul.mubr.f32.gmra.mrb[0].mxu0 %v2452
        %v2773 = vpop.f32.mrb[0].mxu0
        %v2774 = vadd.f32 %v2697, %v2773
        %v2775 = vpop.f32.mrb[0].mxu0
        %v2776 = vadd.f32 %v2699, %v2775
        %2777 = vmatprep.mubr.f32.mxu0 %v2474
        %2778 = vmatmul.mubr.f32.gmra.mrb[0].mxu0 %v2456
        %v2779 = vpop.f32.mrb[0].mxu0
        %v2780 = vadd.f32 %v2703, %v2779
        %v2781 = vpop.f32.mrb[0].mxu0
        %v2782 = vadd.f32 %v2705, %v2781
        %2783 = vdwg.mxu0
        %2784 = vmatprep.subr.mxu0 %v248
        %2785 = vmatpush1.msra.mxu0 %v247
        %2786 = vmatprep.subr.mxu0 %v258
        %2787 = vmatpush1.msra.mxu0 %v257
        %2788 = vmatprep.subr.mxu0 %v323
        %2789 = vmatpush1.msra.mxu0 %v322
        %2790 = vmatprep.subr.mxu0 %v331
        %2791 = vmatpush1.msra.mxu0 %v330
        %2792 = vmatprep.subr.mxu0 %v392
        %2793 = vmatpush1.msra.mxu0 %v391
        %2794 = vmatprep.subr.mxu0 %v400
        %2795 = vmatpush1.msra.mxu0 %v399
        %2796 = vmatprep.subr.mxu0 %v461
        %2797 = vmatpush1.msra.mxu0 %v460
        %2798 = vmatprep.subr.mxu0 %v469
        %2799 = vmatpush1.msra.mxu0 %v468
        %2800 = vmatprep.subr.mxu0 %v530
        %2801 = vmatpush1.msra.mxu0 %v529
        %2802 = vmatprep.subr.mxu0 %v538
        %2803 = vmatpush1.msra.mxu0 %v537
        %2804 = vmatprep.subr.mxu0 %v599
        %2805 = vmatpush1.msra.mxu0 %v598
        %2806 = vmatprep.subr.mxu0 %v607
        %2807 = vmatpush1.msra.mxu0 %v606
        %2808 = vmatprep.subr.mxu0 %v668
        %2809 = vmatpush1.msra.mxu0 %v667
        %2810 = vmatprep.subr.mxu0 %v676
        %2811 = vmatpush1.msra.mxu0 %v675
        %2812 = vmatprep.subr.mxu0 %v737
        %2813 = vmatpush1.msra.mxu0 %v736
        %2814 = vmatprep.subr.mxu0 %v745
        %2815 = vmatpush1.msra.mxu0 %v744
        %2816 = vmatprep.subr.mxu0 %v806
        %2817 = vmatpush1.msra.mxu0 %v805
        %2818 = vmatprep.subr.mxu0 %v814
        %2819 = vmatpush1.msra.mxu0 %v813
        %2820 = vmatprep.subr.mxu0 %v875
        %2821 = vmatpush1.msra.mxu0 %v874
        %2822 = vmatprep.subr.mxu0 %v883
        %2823 = vmatpush1.msra.mxu0 %v882
        %2824 = vmatprep.subr.mxu0 %v944
        %2825 = vmatpush1.msra.mxu0 %v943
        %2826 = vmatprep.subr.mxu0 %v952
        %2827 = vmatpush1.msra.mxu0 %v951
        %2828 = vmatprep.subr.mxu0 %v1013
        %2829 = vmatpush1.msra.mxu0 %v1012
        %2830 = vmatprep.subr.mxu0 %v1021
        %2831 = vmatpush1.msra.mxu0 %v1020
        %2832 = vmatprep.subr.mxu0 %v1082
        %2833 = vmatpush1.msra.mxu0 %v1081
        %2834 = vmatprep.subr.mxu0 %v1090
        %2835 = vmatpush1.msra.mxu0 %v1089
        %2836 = vmatprep.subr.mxu0 %v1151
        %2837 = vmatpush1.msra.mxu0 %v1150
        %2838 = vmatprep.subr.mxu0 %v1159
        %2839 = vmatpush1.msra.mxu0 %v1158
        %2840 = vmatprep.subr.mxu0 %v1220
        %2841 = vmatpush1.msra.mxu0 %v1219
        %2842 = vmatprep.subr.mxu0 %v1228
        %2843 = vmatpush1.msra.mxu0 %v1227
        %2844 = vmatprep.subr.mxu0 %v1289
        %2845 = vmatpush1.msra.mxu0 %v1288
        %2846 = vmatprep.subr.mxu0 %v1297
        %2847 = vmatpush1.msra.mxu0 %v1296
        %2848 = vmatprep.mubr.f32.mxu0 %v2451
        %2849 = vmatmul.mubr.f32.gmra.mrb[0].mxu0 %v2450
        %v2850 = vpop.f32.mrb[0].mxu0
        %v2851 = vadd.f32 %v2463, %v2850
        %v2852 = vpop.f32.mrb[0].mxu0
        %v2853 = vadd.f32 %v2463, %v2852
        %2854 = vmatprep.mubr.f32.mxu0 %v2455
        %2855 = vmatmul.mubr.f32.gmra.mrb[0].mxu0 %v2454
        %v2856 = vpop.f32.mrb[0].mxu0
        %v2857 = vadd.f32 %v2468, %v2856
        %v2858 = vpop.f32.mrb[0].mxu0
        %v2859 = vadd.f32 %v2468, %v2858
        %2860 = vdwg.mxu0
        %2861 = vmatprep.subr.mxu0 %v2103
        %2862 = vmatpush1.msra.mxu0 %v2102
        %2863 = vmatprep.subr.mxu0 %v2111
        %2864 = vmatpush1.msra.mxu0 %v2110
        %2865 = vmatprep.subr.mxu0 %v2119
        %2866 = vmatpush1.msra.mxu0 %v2118
        %2867 = vmatprep.subr.mxu0 %v2127
        %2868 = vmatpush1.msra.mxu0 %v2126
        %2869 = vmatprep.subr.mxu0 %v2135
        %2870 = vmatpush1.msra.mxu0 %v2134
        %2871 = vmatprep.subr.mxu0 %v2143
        %2872 = vmatpush1.msra.mxu0 %v2142
        %2873 = vmatprep.subr.mxu0 %v2151
        %2874 = vmatpush1.msra.mxu0 %v2150
        %2875 = vmatprep.subr.mxu0 %v2159
        %2876 = vmatpush1.msra.mxu0 %v2158
        %2877 = vmatprep.subr.mxu0 %v2167
        %2878 = vmatpush1.msra.mxu0 %v2166
        %2879 = vmatprep.subr.mxu0 %v2175
        %2880 = vmatpush1.msra.mxu0 %v2174
        %2881 = vmatprep.subr.mxu0 %v2183
        %2882 = vmatpush1.msra.mxu0 %v2182
        %2883 = vmatprep.subr.mxu0 %v2191
        %2884 = vmatpush1.msra.mxu0 %v2190
        %2885 = vmatprep.subr.mxu0 %v2199
        %2886 = vmatpush1.msra.mxu0 %v2198
        %2887 = vmatprep.subr.mxu0 %v2207
        %2888 = vmatpush1.msra.mxu0 %v2206
        %2889 = vmatprep.subr.mxu0 %v2215
        %2890 = vmatpush1.msra.mxu0 %v2214
        %2891 = vmatprep.subr.mxu0 %v2223
        %2892 = vmatpush1.msra.mxu0 %v2222
        %2893 = vmatprep.subr.mxu0 %v2231
        %2894 = vmatpush1.msra.mxu0 %v2230
        %2895 = vmatprep.subr.mxu0 %v2239
        %2896 = vmatpush1.msra.mxu0 %v2238
        %2897 = vmatprep.subr.mxu0 %v2247
        %2898 = vmatpush1.msra.mxu0 %v2246
        %2899 = vmatprep.subr.mxu0 %v2255
        %2900 = vmatpush1.msra.mxu0 %v2254
        %2901 = vmatprep.subr.mxu0 %v2263
        %2902 = vmatpush1.msra.mxu0 %v2262
        %2903 = vmatprep.subr.mxu0 %v2271
        %2904 = vmatpush1.msra.mxu0 %v2270
        %2905 = vmatprep.subr.mxu0 0.0
        %2906 = vmatpush1.msra.mxu0 0.0
        %2907 = vmatprep.subr.mxu0 0.0
        %2908 = vmatpush1.msra.mxu0 0.0
        %2909 = vmatprep.subr.mxu0 0.0
        %2910 = vmatpush1.msra.mxu0 0.0
        %2911 = vmatprep.subr.mxu0 0.0
        %2912 = vmatpush1.msra.mxu0 0.0
        %2913 = vmatprep.subr.mxu0 0.0
        %2914 = vmatpush1.msra.mxu0 0.0
        %2915 = vmatprep.subr.mxu0 0.0
        %2916 = vmatpush1.msra.mxu0 0.0
        %2917 = vmatprep.subr.mxu0 0.0
        %2918 = vmatpush1.msra.mxu0 0.0
        %2919 = vmatprep.subr.mxu0 0.0
        %2920 = vmatpush1.msra.mxu0 0.0
        %2921 = vmatprep.subr.mxu0 0.0
        %2922 = vmatpush1.msra.mxu0 0.0
        %2923 = vmatprep.subr.mxu0 0.0
        %2924 = vmatpush1.msra.mxu0 0.0
        %2925 = vmatprep.mubr.f32.mxu0 %v2471
        %2926 = vmatmul.mubr.f32.gmra.mrb[0].mxu0 %v2452
        %v2927 = vpop.f32.mrb[0].mxu0
        %v2928 = vadd.f32 %v2851, %v2927
        %v2929 = vpop.f32.mrb[0].mxu0
        %v2930 = vadd.f32 %v2853, %v2929
        %2931 = vmatprep.mubr.f32.mxu0 %v2474
        %2932 = vmatmul.mubr.f32.gmra.mrb[0].mxu0 %v2456
        %v2933 = vpop.f32.mrb[0].mxu0
        %v2934 = vadd.f32 %v2857, %v2933
        %v2935 = vpop.f32.mrb[0].mxu0
        %v2936 = vadd.f32 %v2859, %v2935
        %2937 = vdwg.mxu0
        %2938 = vmatprep.subr.mxu0 %v250
        %2939 = vmatpush1.msra.mxu0 %v249
        %2940 = vmatprep.subr.mxu0 %v260
        %2941 = vmatpush1.msra.mxu0 %v259
        %2942 = vmatprep.subr.mxu0 %v325
        %2943 = vmatpush1.msra.mxu0 %v324
        %2944 = vmatprep.subr.mxu0 %v333
        %2945 = vmatpush1.msra.mxu0 %v332
        %2946 = vmatprep.subr.mxu0 %v394
        %2947 = vmatpush1.msra.mxu0 %v393
        %2948 = vmatprep.subr.mxu0 %v402
        %2949 = vmatpush1.msra.mxu0 %v401
        %2950 = vmatprep.subr.mxu0 %v463
        %2951 = vmatpush1.msra.mxu0 %v462
        %2952 = vmatprep.subr.mxu0 %v471
        %2953 = vmatpush1.msra.mxu0 %v470
        %2954 = vmatprep.subr.mxu0 %v532
        %2955 = vmatpush1.msra.mxu0 %v531
        %2956 = vmatprep.subr.mxu0 %v540
        %2957 = vmatpush1.msra.mxu0 %v539
        %2958 = vmatprep.subr.mxu0 %v601
        %2959 = vmatpush1.msra.mxu0 %v600
        %2960 = vmatprep.subr.mxu0 %v609
        %2961 = vmatpush1.msra.mxu0 %v608
        %2962 = vmatprep.subr.mxu0 %v670
        %2963 = vmatpush1.msra.mxu0 %v669
        %2964 = vmatprep.subr.mxu0 %v678
        %2965 = vmatpush1.msra.mxu0 %v677
        %2966 = vmatprep.subr.mxu0 %v739
        %2967 = vmatpush1.msra.mxu0 %v738
        %2968 = vmatprep.subr.mxu0 %v747
        %2969 = vmatpush1.msra.mxu0 %v746
        %2970 = vmatprep.subr.mxu0 %v808
        %2971 = vmatpush1.msra.mxu0 %v807
        %2972 = vmatprep.subr.mxu0 %v816
        %2973 = vmatpush1.msra.mxu0 %v815
        %2974 = vmatprep.subr.mxu0 %v877
        %2975 = vmatpush1.msra.mxu0 %v876
        %2976 = vmatprep.subr.mxu0 %v885
        %2977 = vmatpush1.msra.mxu0 %v884
        %2978 = vmatprep.subr.mxu0 %v946
        %2979 = vmatpush1.msra.mxu0 %v945
        %2980 = vmatprep.subr.mxu0 %v954
        %2981 = vmatpush1.msra.mxu0 %v953
        %2982 = vmatprep.subr.mxu0 %v1015
        %2983 = vmatpush1.msra.mxu0 %v1014
        %2984 = vmatprep.subr.mxu0 %v1023
        %2985 = vmatpush1.msra.mxu0 %v1022
        %2986 = vmatprep.subr.mxu0 %v1084
        %2987 = vmatpush1.msra.mxu0 %v1083
        %2988 = vmatprep.subr.mxu0 %v1092
        %2989 = vmatpush1.msra.mxu0 %v1091
        %2990 = vmatprep.subr.mxu0 %v1153
        %2991 = vmatpush1.msra.mxu0 %v1152
        %2992 = vmatprep.subr.mxu0 %v1161
        %2993 = vmatpush1.msra.mxu0 %v1160
        %2994 = vmatprep.subr.mxu0 %v1222
        %2995 = vmatpush1.msra.mxu0 %v1221
        %2996 = vmatprep.subr.mxu0 %v1230
        %2997 = vmatpush1.msra.mxu0 %v1229
        %2998 = vmatprep.subr.mxu0 %v1291
        %2999 = vmatpush1.msra.mxu0 %v1290
        %3000 = vmatprep.subr.mxu0 %v1299
        %3001 = vmatpush1.msra.mxu0 %v1298
        %3002 = vmatprep.mubr.f32.mxu0 %v2451
        %3003 = vmatmul.mubr.f32.gmra.mrb[0].mxu0 %v2450
        %v3004 = vpop.f32.mrb[0].mxu0
        %v3005 = vadd.f32 %v2463, %v3004
        %v3006 = vpop.f32.mrb[0].mxu0
        %v3007 = vadd.f32 %v2463, %v3006
        %3008 = vmatprep.mubr.f32.mxu0 %v2455
        %3009 = vmatmul.mubr.f32.gmra.mrb[0].mxu0 %v2454
        %v3010 = vpop.f32.mrb[0].mxu0
        %v3011 = vadd.f32 %v2468, %v3010
        %v3012 = vpop.f32.mrb[0].mxu0
        %v3013 = vadd.f32 %v2468, %v3012
        %3014 = vdwg.mxu0
        %3015 = vmatprep.subr.mxu0 %v2105
        %3016 = vmatpush1.msra.mxu0 %v2104
        %3017 = vmatprep.subr.mxu0 %v2113
        %3018 = vmatpush1.msra.mxu0 %v2112
        %3019 = vmatprep.subr.mxu0 %v2121
        %3020 = vmatpush1.msra.mxu0 %v2120
        %3021 = vmatprep.subr.mxu0 %v2129
        %3022 = vmatpush1.msra.mxu0 %v2128
        %3023 = vmatprep.subr.mxu0 %v2137
        %3024 = vmatpush1.msra.mxu0 %v2136
        %3025 = vmatprep.subr.mxu0 %v2145
        %3026 = vmatpush1.msra.mxu0 %v2144
        %3027 = vmatprep.subr.mxu0 %v2153
        %3028 = vmatpush1.msra.mxu0 %v2152
        %3029 = vmatprep.subr.mxu0 %v2161
        %3030 = vmatpush1.msra.mxu0 %v2160
        %3031 = vmatprep.subr.mxu0 %v2169
        %3032 = vmatpush1.msra.mxu0 %v2168
        %3033 = vmatprep.subr.mxu0 %v2177
        %3034 = vmatpush1.msra.mxu0 %v2176
        %3035 = vmatprep.subr.mxu0 %v2185
        %3036 = vmatpush1.msra.mxu0 %v2184
        %3037 = vmatprep.subr.mxu0 %v2193
        %3038 = vmatpush1.msra.mxu0 %v2192
        %3039 = vmatprep.subr.mxu0 %v2201
        %3040 = vmatpush1.msra.mxu0 %v2200
        %3041 = vmatprep.subr.mxu0 %v2209
        %3042 = vmatpush1.msra.mxu0 %v2208
        %3043 = vmatprep.subr.mxu0 %v2217
        %3044 = vmatpush1.msra.mxu0 %v2216
        %3045 = vmatprep.subr.mxu0 %v2225
        %3046 = vmatpush1.msra.mxu0 %v2224
        %3047 = vmatprep.subr.mxu0 %v2233
        %3048 = vmatpush1.msra.mxu0 %v2232
        %3049 = vmatprep.subr.mxu0 %v2241
        %3050 = vmatpush1.msra.mxu0 %v2240
        %3051 = vmatprep.subr.mxu0 %v2249
        %3052 = vmatpush1.msra.mxu0 %v2248
        %3053 = vmatprep.subr.mxu0 %v2257
        %3054 = vmatpush1.msra.mxu0 %v2256
        %3055 = vmatprep.subr.mxu0 %v2265
        %3056 = vmatpush1.msra.mxu0 %v2264
        %3057 = vmatprep.subr.mxu0 %v2273
        %3058 = vmatpush1.msra.mxu0 %v2272
        %3059 = vmatprep.subr.mxu0 0.0
        %3060 = vmatpush1.msra.mxu0 0.0
        %3061 = vmatprep.subr.mxu0 0.0
        %3062 = vmatpush1.msra.mxu0 0.0
        %3063 = vmatprep.subr.mxu0 0.0
        %3064 = vmatpush1.msra.mxu0 0.0
        %3065 = vmatprep.subr.mxu0 0.0
        %3066 = vmatpush1.msra.mxu0 0.0
        %3067 = vmatprep.subr.mxu0 0.0
        %3068 = vmatpush1.msra.mxu0 0.0
        %3069 = vmatprep.subr.mxu0 0.0
        %3070 = vmatpush1.msra.mxu0 0.0
        %3071 = vmatprep.subr.mxu0 0.0
        %3072 = vmatpush1.msra.mxu0 0.0
        %3073 = vmatprep.subr.mxu0 0.0
        %3074 = vmatpush1.msra.mxu0 0.0
        %3075 = vmatprep.subr.mxu0 0.0
        %3076 = vmatpush1.msra.mxu0 0.0
        %3077 = vmatprep.subr.mxu0 0.0
        %3078 = vmatpush1.msra.mxu0 0.0
        %3079 = vmatprep.mubr.f32.mxu0 %v2471
        %3080 = vmatmul.mubr.f32.gmra.mrb[0].mxu0 %v2452
        %v3081 = vpop.f32.mrb[0].mxu0
        %v3082 = vadd.f32 %v3005, %v3081
        %v3083 = vpop.f32.mrb[0].mxu0
        %v3084 = vadd.f32 %v3007, %v3083
        %3085 = vmatprep.mubr.f32.mxu0 %v2474
        %3086 = vmatmul.mubr.f32.gmra.mrb[0].mxu0 %v2456
        %v3087 = vpop.f32.mrb[0].mxu0
        %v3088 = vadd.f32 %v3011, %v3087
        %v3089 = vpop.f32.mrb[0].mxu0
        %v3090 = vadd.f32 %v3013, %v3089
        %3091 = vdwg.mxu0
        %v3092 = vmax.f32 %v2620, 0.0
        %v3093 = vmax.f32 %v2622, 0.0
        %v3094 = vmax.f32 %v2774, 0.0
        %v3095 = vmax.f32 %v2776, 0.0
        %v3096 = vmax.f32 %v2928, 0.0
        %v3097 = vmax.f32 %v2930, 0.0
        %v3098 = vmax.f32 %v3082, 0.0
        %v3099 = vmax.f32 %v3084, 0.0
        %v3100 = vmax.f32 %v2626, 0.0
        %v3101 = vmax.f32 %v2628, 0.0
        %v3102 = vmax.f32 %v2780, 0.0
        %v3103 = vmax.f32 %v2782, 0.0
        %v3104 = vmax.f32 %v2934, 0.0
        %v3105 = vmax.f32 %v2936, 0.0
        %v3106 = vmax.f32 %v3088, 0.0
        %v3107 = vmax.f32 %v3090, 0.0
        %v3108 = vld [vmem:[%s3] sm:$0xff]
        %v3109 = vld [vmem:[%s3 + $0x8] sm:$0xff]
        %v3110 = vld [vmem:[%s3 + $0x10] sm:$0xff]
        %v3111 = vld [vmem:[%s3 + $0x18] sm:$0xff]
        %v3112 = vld [vmem:[%s4] sm:$0xff]
        %v3113 = vld [vmem:[%s4 + $0x8] sm:$0xff]
        %v3114 = vld [vmem:[%s4 + $0x10] sm:$0xff]
        %v3115 = vld [vmem:[%s4 + $0x18] sm:$0xff]
        %3117 = vset.pattern.permute.xlu0 0
        %3118 = vperm.xlu0 %3117, %v3112
        %v3119 = vpop.permute.xlu0 %3118
        %3122 = vset.pattern.permute.xlu0 0
        %3123 = vperm.xlu0 %3122, %v3113
        %v3124 = vpop.permute.xlu0 %3123
        %3127 = vset.pattern.permute.xlu0 0
        %3128 = vperm.xlu0 %3127, %v3114
        %v3129 = vpop.permute.xlu0 %3128
        %3132 = vset.pattern.permute.xlu0 0
        %3133 = vperm.xlu0 %3132, %v3115
        %v3134 = vpop.permute.xlu0 %3133
        %v3137 = vsel %vm1214, %v3108, 0
        %v3140 = vsel %vm1214, %v3109, 0
        %v3143 = vsel %vm1214, %v3110, 0
        %v3146 = vsel %vm1214, %v3111, 0
        %3148 = vmatprep.subr.mxu0 %v3093
        %3149 = vmatpush1.msra.mxu0 %v3092
        %3150 = vmatprep.subr.mxu0 %v3101
        %3151 = vmatpush1.msra.mxu0 %v3100
        %3152 = vmatprep.subr.mxu0 0.0
        %3153 = vmatpush1.msra.mxu0 0.0
        %3154 = vmatprep.subr.mxu0 0.0
        %3155 = vmatpush1.msra.mxu0 0.0
        %3156 = vmatprep.subr.mxu0 0.0
        %3157 = vmatpush1.msra.mxu0 0.0
        %3158 = vmatprep.subr.mxu0 0.0
        %3159 = vmatpush1.msra.mxu0 0.0
        %3160 = vmatprep.subr.mxu0 0.0
        %3161 = vmatpush1.msra.mxu0 0.0
        %3162 = vmatprep.subr.mxu0 0.0
        %3163 = vmatpush1.msra.mxu0 0.0
        %3164 = vmatprep.subr.mxu0 0.0
        %3165 = vmatpush1.msra.mxu0 0.0
        %3166 = vmatprep.subr.mxu0 0.0
        %3167 = vmatpush1.msra.mxu0 0.0
        %3168 = vmatprep.subr.mxu0 0.0
        %3169 = vmatpush1.msra.mxu0 0.0
        %3170 = vmatprep.subr.mxu0 0.0
        %3171 = vmatpush1.msra.mxu0 0.0
        %3172 = vmatprep.subr.mxu0 0.0
        %3173 = vmatpush1.msra.mxu0 0.0
        %3174 = vmatprep.subr.mxu0 0.0
        %3175 = vmatpush1.msra.mxu0 0.0
        %3176 = vmatprep.subr.mxu0 0.0
        %3177 = vmatpush1.msra.mxu0 0.0
        %3178 = vmatprep.subr.mxu0 0.0
        %3179 = vmatpush1.msra.mxu0 0.0
        %3180 = vmatprep.subr.mxu0 0.0
        %3181 = vmatpush1.msra.mxu0 0.0
        %3182 = vmatprep.subr.mxu0 0.0
        %3183 = vmatpush1.msra.mxu0 0.0
        %3184 = vmatprep.subr.mxu0 0.0
        %3185 = vmatpush1.msra.mxu0 0.0
        %3186 = vmatprep.subr.mxu0 0.0
        %3187 = vmatpush1.msra.mxu0 0.0
        %3188 = vmatprep.subr.mxu0 0.0
        %3189 = vmatpush1.msra.mxu0 0.0
        %3190 = vmatprep.subr.mxu0 0.0
        %3191 = vmatpush1.msra.mxu0 0.0
        %3192 = vmatprep.subr.mxu0 0.0
        %3193 = vmatpush1.msra.mxu0 0.0
        %3194 = vmatprep.subr.mxu0 0.0
        %3195 = vmatpush1.msra.mxu0 0.0
        %3196 = vmatprep.subr.mxu0 0.0
        %3197 = vmatpush1.msra.mxu0 0.0
        %3198 = vmatprep.subr.mxu0 0.0
        %3199 = vmatpush1.msra.mxu0 0.0
        %3200 = vmatprep.subr.mxu0 0.0
        %3201 = vmatpush1.msra.mxu0 0.0
        %3202 = vmatprep.subr.mxu0 0.0
        %3203 = vmatpush1.msra.mxu0 0.0
        %3204 = vmatprep.subr.mxu0 0.0
        %3205 = vmatpush1.msra.mxu0 0.0
        %3206 = vmatprep.subr.mxu0 0.0
        %3207 = vmatpush1.msra.mxu0 0.0
        %3208 = vmatprep.subr.mxu0 0.0
        %3209 = vmatpush1.msra.mxu0 0.0
        %3210 = vmatprep.subr.mxu0 0.0
        %3211 = vmatpush1.msra.mxu0 0.0
        %3212 = vmatprep.mubr.f32.mxu0 0.0
        %3213 = vmatmul.mubr.f32.gmra.mrb[0].mxu0 %v3137
        %v3214 = vpop.f32.mrb[0].mxu0
        %v3215 = vadd.f32 %v3119, %v3214
        %v3216 = vpop.f32.mrb[0].mxu0
        %v3217 = vadd.f32 %v3119, %v3216
        %3218 = vmatprep.mubr.f32.mxu0 0.0
        %3219 = vmatmul.mubr.f32.gmra.mrb[0].mxu0 %v3140
        %v3220 = vpop.f32.mrb[0].mxu0
        %v3221 = vadd.f32 %v3124, %v3220
        %v3222 = vpop.f32.mrb[0].mxu0
        %v3223 = vadd.f32 %v3124, %v3222
        %3224 = vmatprep.mubr.f32.mxu0 0.0
        %3225 = vmatmul.mubr.f32.gmra.mrb[0].mxu0 %v3143
        %v3226 = vpop.f32.mrb[0].mxu0
        %v3227 = vadd.f32 %v3129, %v3226
        %v3228 = vpop.f32.mrb[0].mxu0
        %v3229 = vadd.f32 %v3129, %v3228
        %3230 = vmatprep.mubr.f32.mxu0 0.0
        %3231 = vmatmul.mubr.f32.gmra.mrb[0].mxu0 %v3146
        %v3232 = vpop.f32.mrb[0].mxu0
        %v3233 = vadd.f32 %v3134, %v3232
        %v3234 = vpop.f32.mrb[0].mxu0
        %v3235 = vadd.f32 %v3134, %v3234
        %3236 = vdwg.mxu0
        %3237 = vmatprep.subr.mxu0 %v3095
        %3238 = vmatpush1.msra.mxu0 %v3094
        %3239 = vmatprep.subr.mxu0 %v3103
        %3240 = vmatpush1.msra.mxu0 %v3102
        %3241 = vmatprep.subr.mxu0 0.0
        %3242 = vmatpush1.msra.mxu0 0.0
        %3243 = vmatprep.subr.mxu0 0.0
        %3244 = vmatpush1.msra.mxu0 0.0
        %3245 = vmatprep.subr.mxu0 0.0
        %3246 = vmatpush1.msra.mxu0 0.0
        %3247 = vmatprep.subr.mxu0 0.0
        %3248 = vmatpush1.msra.mxu0 0.0
        %3249 = vmatprep.subr.mxu0 0.0
        %3250 = vmatpush1.msra.mxu0 0.0
        %3251 = vmatprep.subr.mxu0 0.0
        %3252 = vmatpush1.msra.mxu0 0.0
        %3253 = vmatprep.subr.mxu0 0.0
        %3254 = vmatpush1.msra.mxu0 0.0
        %3255 = vmatprep.subr.mxu0 0.0
        %3256 = vmatpush1.msra.mxu0 0.0
        %3257 = vmatprep.subr.mxu0 0.0
        %3258 = vmatpush1.msra.mxu0 0.0
        %3259 = vmatprep.subr.mxu0 0.0
        %3260 = vmatpush1.msra.mxu0 0.0
        %3261 = vmatprep.subr.mxu0 0.0
        %3262 = vmatpush1.msra.mxu0 0.0
        %3263 = vmatprep.subr.mxu0 0.0
        %3264 = vmatpush1.msra.mxu0 0.0
        %3265 = vmatprep.subr.mxu0 0.0
        %3266 = vmatpush1.msra.mxu0 0.0
        %3267 = vmatprep.subr.mxu0 0.0
        %3268 = vmatpush1.msra.mxu0 0.0
        %3269 = vmatprep.subr.mxu0 0.0
        %3270 = vmatpush1.msra.mxu0 0.0
        %3271 = vmatprep.subr.mxu0 0.0
        %3272 = vmatpush1.msra.mxu0 0.0
        %3273 = vmatprep.subr.mxu0 0.0
        %3274 = vmatpush1.msra.mxu0 0.0
        %3275 = vmatprep.subr.mxu0 0.0
        %3276 = vmatpush1.msra.mxu0 0.0
        %3277 = vmatprep.subr.mxu0 0.0
        %3278 = vmatpush1.msra.mxu0 0.0
        %3279 = vmatprep.subr.mxu0 0.0
        %3280 = vmatpush1.msra.mxu0 0.0
        %3281 = vmatprep.subr.mxu0 0.0
        %3282 = vmatpush1.msra.mxu0 0.0
        %3283 = vmatprep.subr.mxu0 0.0
        %3284 = vmatpush1.msra.mxu0 0.0
        %3285 = vmatprep.subr.mxu0 0.0
        %3286 = vmatpush1.msra.mxu0 0.0
        %3287 = vmatprep.subr.mxu0 0.0
        %3288 = vmatpush1.msra.mxu0 0.0
        %3289 = vmatprep.subr.mxu0 0.0
        %3290 = vmatpush1.msra.mxu0 0.0
        %3291 = vmatprep.subr.mxu0 0.0
        %3292 = vmatpush1.msra.mxu0 0.0
        %3293 = vmatprep.subr.mxu0 0.0
        %3294 = vmatpush1.msra.mxu0 0.0
        %3295 = vmatprep.subr.mxu0 0.0
        %3296 = vmatpush1.msra.mxu0 0.0
        %3297 = vmatprep.subr.mxu0 0.0
        %3298 = vmatpush1.msra.mxu0 0.0
        %3299 = vmatprep.subr.mxu0 0.0
        %3300 = vmatpush1.msra.mxu0 0.0
        %3301 = vmatprep.mubr.f32.mxu0 0.0
        %3302 = vmatmul.mubr.f32.gmra.mrb[0].mxu0 %v3137
        %v3303 = vpop.f32.mrb[0].mxu0
        %v3304 = vadd.f32 %v3119, %v3303
        %v3305 = vpop.f32.mrb[0].mxu0
        %v3306 = vadd.f32 %v3119, %v3305
        %3307 = vmatprep.mubr.f32.mxu0 0.0
        %3308 = vmatmul.mubr.f32.gmra.mrb[0].mxu0 %v3140
        %v3309 = vpop.f32.mrb[0].mxu0
        %v3310 = vadd.f32 %v3124, %v3309
        %v3311 = vpop.f32.mrb[0].mxu0
        %v3312 = vadd.f32 %v3124, %v3311
        %3313 = vmatprep.mubr.f32.mxu0 0.0
        %3314 = vmatmul.mubr.f32.gmra.mrb[0].mxu0 %v3143
        %v3315 = vpop.f32.mrb[0].mxu0
        %v3316 = vadd.f32 %v3129, %v3315
        %v3317 = vpop.f32.mrb[0].mxu0
        %v3318 = vadd.f32 %v3129, %v3317
        %3319 = vmatprep.mubr.f32.mxu0 0.0
        %3320 = vmatmul.mubr.f32.gmra.mrb[0].mxu0 %v3146
        %v3321 = vpop.f32.mrb[0].mxu0
        %v3322 = vadd.f32 %v3134, %v3321
        %v3323 = vpop.f32.mrb[0].mxu0
        %v3324 = vadd.f32 %v3134, %v3323
        %3325 = vdwg.mxu0
        %3326 = vmatprep.subr.mxu0 %v3097
        %3327 = vmatpush1.msra.mxu0 %v3096
        %3328 = vmatprep.subr.mxu0 %v3105
        %3329 = vmatpush1.msra.mxu0 %v3104
        %3330 = vmatprep.subr.mxu0 0.0
        %3331 = vmatpush1.msra.mxu0 0.0
        %3332 = vmatprep.subr.mxu0 0.0
        %3333 = vmatpush1.msra.mxu0 0.0
        %3334 = vmatprep.subr.mxu0 0.0
        %3335 = vmatpush1.msra.mxu0 0.0
        %3336 = vmatprep.subr.mxu0 0.0
        %3337 = vmatpush1.msra.mxu0 0.0
        %3338 = vmatprep.subr.mxu0 0.0
        %3339 = vmatpush1.msra.mxu0 0.0
        %3340 = vmatprep.subr.mxu0 0.0
        %3341 = vmatpush1.msra.mxu0 0.0
        %3342 = vmatprep.subr.mxu0 0.0
        %3343 = vmatpush1.msra.mxu0 0.0
        %3344 = vmatprep.subr.mxu0 0.0
        %3345 = vmatpush1.msra.mxu0 0.0
        %3346 = vmatprep.subr.mxu0 0.0
        %3347 = vmatpush1.msra.mxu0 0.0
        %3348 = vmatprep.subr.mxu0 0.0
        %3349 = vmatpush1.msra.mxu0 0.0
        %3350 = vmatprep.subr.mxu0 0.0
        %3351 = vmatpush1.msra.mxu0 0.0
        %3352 = vmatprep.subr.mxu0 0.0
        %3353 = vmatpush1.msra.mxu0 0.0
        %3354 = vmatprep.subr.mxu0 0.0
        %3355 = vmatpush1.msra.mxu0 0.0
        %3356 = vmatprep.subr.mxu0 0.0
        %3357 = vmatpush1.msra.mxu0 0.0
        %3358 = vmatprep.subr.mxu0 0.0
        %3359 = vmatpush1.msra.mxu0 0.0
        %3360 = vmatprep.subr.mxu0 0.0
        %3361 = vmatpush1.msra.mxu0 0.0
        %3362 = vmatprep.subr.mxu0 0.0
        %3363 = vmatpush1.msra.mxu0 0.0
        %3364 = vmatprep.subr.mxu0 0.0
        %3365 = vmatpush1.msra.mxu0 0.0
        %3366 = vmatprep.subr.mxu0 0.0
        %3367 = vmatpush1.msra.mxu0 0.0
        %3368 = vmatprep.subr.mxu0 0.0
        %3369 = vmatpush1.msra.mxu0 0.0
        %3370 = vmatprep.subr.mxu0 0.0
        %3371 = vmatpush1.msra.mxu0 0.0
        %3372 = vmatprep.subr.mxu0 0.0
        %3373 = vmatpush1.msra.mxu0 0.0
        %3374 = vmatprep.subr.mxu0 0.0
        %3375 = vmatpush1.msra.mxu0 0.0
        %3376 = vmatprep.subr.mxu0 0.0
        %3377 = vmatpush1.msra.mxu0 0.0
        %3378 = vmatprep.subr.mxu0 0.0
        %3379 = vmatpush1.msra.mxu0 0.0
        %3380 = vmatprep.subr.mxu0 0.0
        %3381 = vmatpush1.msra.mxu0 0.0
        %3382 = vmatprep.subr.mxu0 0.0
        %3383 = vmatpush1.msra.mxu0 0.0
        %3384 = vmatprep.subr.mxu0 0.0
        %3385 = vmatpush1.msra.mxu0 0.0
        %3386 = vmatprep.subr.mxu0 0.0
        %3387 = vmatpush1.msra.mxu0 0.0
        %3388 = vmatprep.subr.mxu0 0.0
        %3389 = vmatpush1.msra.mxu0 0.0
        %3390 = vmatprep.mubr.f32.mxu0 0.0
        %3391 = vmatmul.mubr.f32.gmra.mrb[0].mxu0 %v3137
        %v3392 = vpop.f32.mrb[0].mxu0
        %v3393 = vadd.f32 %v3119, %v3392
        %v3394 = vpop.f32.mrb[0].mxu0
        %v3395 = vadd.f32 %v3119, %v3394
        %3396 = vmatprep.mubr.f32.mxu0 0.0
        %3397 = vmatmul.mubr.f32.gmra.mrb[0].mxu0 %v3140
        %v3398 = vpop.f32.mrb[0].mxu0
        %v3399 = vadd.f32 %v3124, %v3398
        %v3400 = vpop.f32.mrb[0].mxu0
        %v3401 = vadd.f32 %v3124, %v3400
        %3402 = vmatprep.mubr.f32.mxu0 0.0
        %3403 = vmatmul.mubr.f32.gmra.mrb[0].mxu0 %v3143
        %v3404 = vpop.f32.mrb[0].mxu0
        %v3405 = vadd.f32 %v3129, %v3404
        %v3406 = vpop.f32.mrb[0].mxu0
        %v3407 = vadd.f32 %v3129, %v3406
        %3408 = vmatprep.mubr.f32.mxu0 0.0
        %3409 = vmatmul.mubr.f32.gmra.mrb[0].mxu0 %v3146
        %v3410 = vpop.f32.mrb[0].mxu0
        %v3411 = vadd.f32 %v3134, %v3410
        %v3412 = vpop.f32.mrb[0].mxu0
        %v3413 = vadd.f32 %v3134, %v3412
        %3414 = vdwg.mxu0
        %3415 = vmatprep.subr.mxu0 %v3099
        %3416 = vmatpush1.msra.mxu0 %v3098
        %3417 = vmatprep.subr.mxu0 %v3107
        %3418 = vmatpush1.msra.mxu0 %v3106
        %3419 = vmatprep.subr.mxu0 0.0
        %3420 = vmatpush1.msra.mxu0 0.0
        %3421 = vmatprep.subr.mxu0 0.0
        %3422 = vmatpush1.msra.mxu0 0.0
        %3423 = vmatprep.subr.mxu0 0.0
        %3424 = vmatpush1.msra.mxu0 0.0
        %3425 = vmatprep.subr.mxu0 0.0
        %3426 = vmatpush1.msra.mxu0 0.0
        %3427 = vmatprep.subr.mxu0 0.0
        %3428 = vmatpush1.msra.mxu0 0.0
        %3429 = vmatprep.subr.mxu0 0.0
        %3430 = vmatpush1.msra.mxu0 0.0
        %3431 = vmatprep.subr.mxu0 0.0
        %3432 = vmatpush1.msra.mxu0 0.0
        %3433 = vmatprep.subr.mxu0 0.0
        %3434 = vmatpush1.msra.mxu0 0.0
        %3435 = vmatprep.subr.mxu0 0.0
        %3436 = vmatpush1.msra.mxu0 0.0
        %3437 = vmatprep.subr.mxu0 0.0
        %3438 = vmatpush1.msra.mxu0 0.0
        %3439 = vmatprep.subr.mxu0 0.0
        %3440 = vmatpush1.msra.mxu0 0.0
        %3441 = vmatprep.subr.mxu0 0.0
        %3442 = vmatpush1.msra.mxu0 0.0
        %3443 = vmatprep.subr.mxu0 0.0
        %3444 = vmatpush1.msra.mxu0 0.0
        %3445 = vmatprep.subr.mxu0 0.0
        %3446 = vmatpush1.msra.mxu0 0.0
        %3447 = vmatprep.subr.mxu0 0.0
        %3448 = vmatpush1.msra.mxu0 0.0
        %3449 = vmatprep.subr.mxu0 0.0
        %3450 = vmatpush1.msra.mxu0 0.0
        %3451 = vmatprep.subr.mxu0 0.0
        %3452 = vmatpush1.msra.mxu0 0.0
        %3453 = vmatprep.subr.mxu0 0.0
        %3454 = vmatpush1.msra.mxu0 0.0
        %3455 = vmatprep.subr.mxu0 0.0
        %3456 = vmatpush1.msra.mxu0 0.0
        %3457 = vmatprep.subr.mxu0 0.0
        %3458 = vmatpush1.msra.mxu0 0.0
        %3459 = vmatprep.subr.mxu0 0.0
        %3460 = vmatpush1.msra.mxu0 0.0
        %3461 = vmatprep.subr.mxu0 0.0
        %3462 = vmatpush1.msra.mxu0 0.0
        %3463 = vmatprep.subr.mxu0 0.0
        %3464 = vmatpush1.msra.mxu0 0.0
        %3465 = vmatprep.subr.mxu0 0.0
        %3466 = vmatpush1.msra.mxu0 0.0
        %3467 = vmatprep.subr.mxu0 0.0
        %3468 = vmatpush1.msra.mxu0 0.0
        %3469 = vmatprep.subr.mxu0 0.0
        %3470 = vmatpush1.msra.mxu0 0.0
        %3471 = vmatprep.subr.mxu0 0.0
        %3472 = vmatpush1.msra.mxu0 0.0
        %3473 = vmatprep.subr.mxu0 0.0
        %3474 = vmatpush1.msra.mxu0 0.0
        %3475 = vmatprep.subr.mxu0 0.0
        %3476 = vmatpush1.msra.mxu0 0.0
        %3477 = vmatprep.subr.mxu0 0.0
        %3478 = vmatpush1.msra.mxu0 0.0
        %3479 = vmatprep.mubr.f32.mxu0 0.0
        %3480 = vmatmul.mubr.f32.gmra.mrb[0].mxu0 %v3137
        %v3481 = vpop.f32.mrb[0].mxu0
        %v3482 = vadd.f32 %v3119, %v3481
        %v3483 = vpop.f32.mrb[0].mxu0
        %v3484 = vadd.f32 %v3119, %v3483
        %3485 = vmatprep.mubr.f32.mxu0 0.0
        %3486 = vmatmul.mubr.f32.gmra.mrb[0].mxu0 %v3140
        %v3487 = vpop.f32.mrb[0].mxu0
        %v3488 = vadd.f32 %v3124, %v3487
        %v3489 = vpop.f32.mrb[0].mxu0
        %v3490 = vadd.f32 %v3124, %v3489
        %3491 = vmatprep.mubr.f32.mxu0 0.0
        %3492 = vmatmul.mubr.f32.gmra.mrb[0].mxu0 %v3143
        %v3493 = vpop.f32.mrb[0].mxu0
        %v3494 = vadd.f32 %v3129, %v3493
        %v3495 = vpop.f32.mrb[0].mxu0
        %v3496 = vadd.f32 %v3129, %v3495
        %3497 = vmatprep.mubr.f32.mxu0 0.0
        %3498 = vmatmul.mubr.f32.gmra.mrb[0].mxu0 %v3146
        %v3499 = vpop.f32.mrb[0].mxu0
        %v3500 = vadd.f32 %v3134, %v3499
        %v3501 = vpop.f32.mrb[0].mxu0
        %v3502 = vadd.f32 %v3134, %v3501
        %3503 = vdwg.mxu0
        %v3504 = vmax.f32 %v3215, 0.0
        %v3505 = vmax.f32 %v3217, 0.0
        %v3506 = vmax.f32 %v3304, 0.0
        %v3507 = vmax.f32 %v3306, 0.0
        %v3508 = vmax.f32 %v3393, 0.0
        %v3509 = vmax.f32 %v3395, 0.0
        %v3510 = vmax.f32 %v3482, 0.0
        %v3511 = vmax.f32 %v3484, 0.0
        %v3512 = vmax.f32 %v3221, 0.0
        %v3513 = vmax.f32 %v3223, 0.0
        %v3514 = vmax.f32 %v3310, 0.0
        %v3515 = vmax.f32 %v3312, 0.0
        %v3516 = vmax.f32 %v3399, 0.0
        %v3517 = vmax.f32 %v3401, 0.0
        %v3518 = vmax.f32 %v3488, 0.0
        %v3519 = vmax.f32 %v3490, 0.0
        %v3520 = vmax.f32 %v3227, 0.0
        %v3521 = vmax.f32 %v3229, 0.0
        %v3522 = vmax.f32 %v3316, 0.0
        %v3523 = vmax.f32 %v3318, 0.0
        %v3524 = vmax.f32 %v3405, 0.0
        %v3525 = vmax.f32 %v3407, 0.0
        %v3526 = vmax.f32 %v3494, 0.0
        %v3527 = vmax.f32 %v3496, 0.0
        %v3528 = vmax.f32 %v3233, 0.0
        %v3529 = vmax.f32 %v3235, 0.0
        %v3530 = vmax.f32 %v3322, 0.0
        %v3531 = vmax.f32 %v3324, 0.0
        %v3532 = vmax.f32 %v3411, 0.0
        %v3533 = vmax.f32 %v3413, 0.0
        %v3534 = vmax.f32 %v3500, 0.0
        %v3535 = vmax.f32 %v3502, 0.0
        %3536 = vst [vmem:[%s242] sm:$0xff] %v3504
        %3537 = vst [vmem:[%s242 + $0x8] sm:$0xff] %v3505
        %3538 = vst [vmem:[%s242 + $0x10] sm:$0xff] %v3506
        %3539 = vst [vmem:[%s242 + $0x18] sm:$0xff] %v3507
        %3540 = vst [vmem:[%s242 + $0x20] sm:$0xff] %v3508
        %3541 = vst [vmem:[%s242 + $0x28] sm:$0xff] %v3509
        %3542 = vst [vmem:[%s242 + $0x30] sm:$0xff] %v3510
        %3543 = vst [vmem:[%s242 + $0x38] sm:$0xff] %v3511
        %3544 = vst [vmem:[%s242 + $0x40] sm:$0xff] %v3512
        %3545 = vst [vmem:[%s242 + $0x48] sm:$0xff] %v3513
        %3546 = vst [vmem:[%s242 + $0x50] sm:$0xff] %v3514
        %3547 = vst [vmem:[%s242 + $0x58] sm:$0xff] %v3515
        %3548 = vst [vmem:[%s242 + $0x60] sm:$0xff] %v3516
        %3549 = vst [vmem:[%s242 + $0x68] sm:$0xff] %v3517
        %3550 = vst [vmem:[%s242 + $0x70] sm:$0xff] %v3518
        %3551 = vst [vmem:[%s242 + $0x78] sm:$0xff] %v3519
        %3552 = vst [vmem:[%s242 + $0x80] sm:$0xff] %v3520
        %3553 = vst [vmem:[%s242 + $0x88] sm:$0xff] %v3521
        %3554 = vst [vmem:[%s242 + $0x90] sm:$0xff] %v3522
        %3555 = vst [vmem:[%s242 + $0x98] sm:$0xff] %v3523
        %3556 = vst [vmem:[%s242 + $0xa0] sm:$0xff] %v3524
        %3557 = vst [vmem:[%s242 + $0xa8] sm:$0xff] %v3525
        %3558 = vst [vmem:[%s242 + $0xb0] sm:$0xff] %v3526
        %3559 = vst [vmem:[%s242 + $0xb8] sm:$0xff] %v3527
        %3560 = vst [vmem:[%s242 + $0xc0] sm:$0xff] %v3528
        %3561 = vst [vmem:[%s242 + $0xc8] sm:$0xff] %v3529
        %3562 = vst [vmem:[%s242 + $0xd0] sm:$0xff] %v3530
        %3563 = vst [vmem:[%s242 + $0xd8] sm:$0xff] %v3531
        %3564 = vst [vmem:[%s242 + $0xe0] sm:$0xff] %v3532
        %3565 = vst [vmem:[%s242 + $0xe8] sm:$0xff] %v3533
        %3566 = vst [vmem:[%s242 + $0xf0] sm:$0xff] %v3534
        %3567 = vst [vmem:[%s242 + $0xf8] sm:$0xff] %v3535
        %s3568 = sand.u32 %s140, 1
        %s3569 = scalar_lea.sflag [#allocation4], %s3568
        %s3570 = sand.u32 %s140, 1
        %s3571 = smul.addr %s3570, 256
        %s3572 = scalar_lea.vmem [#allocation5], %s3571
        // Predicated region
        $region45: #{tpu_custom_call.1} parent=39 // pred_check
          %p3573 = pneg %p150
        $region46: #{tpu_custom_call.1} parent=39 // pred_check_branch
          %3575 = sbr.rel (%p3573) target = $region48
        $region47: #{tpu_custom_call.1} parent=39 // pred_region
          %s3577 = ssub.s32 4096, 4096
          %3578 = vsyncadd %s3569, %s3577
          %s3579 = smul.addr %s22, 32
          %s3580 = smul.addr %s3579, 128
          %s3581 = scalar_lea.hbm %s5, %s3580
          %s3582 = sshll.u32 %s3572, 4
          %s3583 = int_to_ptr.vmem [resolvable:$true] %s3582
          %3588 = dma.vmem_to_hbm [thread:$0]  %s3583, 4096, %s3581, %s3569, 1024, 1024, 64
        $region48: #{tpu_custom_call.1} parent=39 // pred_fallthru
          _
      $region40: #{tpu_custom_call.1} parent=5 // pred_fallthru
        _
      %p3589 = scmp.le.s32.totalorder 2, %s17
      // Predicated region
      $region49: #{tpu_custom_call.1} parent=5 // pred_check
        %p3590 = pneg %p3589
      $region50: #{tpu_custom_call.1} parent=5 // pred_check_branch
        %3592 = sbr.rel (%p3590) target = $region52
      $region51: #{tpu_custom_call.1} parent=5 // pred_region
        %s3593 = ssub.s32 %s17, 2
        // Predicated region
        $region53: #{tpu_custom_call.1} parent=51 // pred_check
          %p3594 = pneg %p156
        $region54: #{tpu_custom_call.1} parent=51 // pred_check_branch
          %3596 = sbr.rel (%p3594) target = $region56
        $region55: #{tpu_custom_call.1} parent=51 // pred_region
          %s3597 = sand.u32 %s141, 1
          %s3598 = scalar_lea.sflag [#allocation4], %s3597
          %s3599 = sand.u32 %s141, 1
          %s3600 = smul.addr %s3599, 256
          %s3601 = scalar_lea.vmem [#allocation5], %s3600
          %3602 = dma.done %s3598, 4096
        $region56: #{tpu_custom_call.1} parent=51 // pred_fallthru
          _
      $region52: #{tpu_custom_call.1} parent=5 // pred_fallthru
        _
    $region6: #{tpu_custom_call.1} parent=1 // loop_footer
      %s21 = sadd.s32 1, %s17
    $region7: #{tpu_custom_call.1} parent=1 // loop_footer_branch
      %16 = sbr.rel target = $region3
    $region8: #{tpu_custom_call.1} parent=1 // loop_exit
      _
    %3603 = vsyncpa [#allocation3], 1
    %s3604 = scalar_lea.sflag [#allocation3], 1
    %3605 = vsyncpa %s3604, 1
    %3606 = vsyncpa [#allocation4], 1
    %s3607 = scalar_lea.sflag [#allocation4], 1
    %3608 = vsyncpa %s3607, 1

</llo_original>
